<compile_context>
chip_gen: v7x
topology: tpu7x:2x2x1
jax: 0.10.0
libtpu: 0.0.40
codegen_flags: <defaults>
</compile_context>

<pallas_src>
import functools
import math

import jax
import jax.numpy as jnp
from jax import lax
from jax.experimental import pallas as pl
from jax.experimental.pallas import tpu as pltpu

_LANES = 128
_EPS = 1e-5
_GC_CAP = 8192                        # max lanes for the packed layout
_BLOCK_F32_BYTES = 4 * 1024 * 1024    # ~4 MiB f32 working set / block (85%+ of HBM roofline)
_MIN_BLOCK_F32_BYTES = 512 * 1024     # floor when splitting the grid for v7x's 2 TCs
_VMEM_TARGET = 44 * 1024 * 1024       # stay well under v7x's 64 MiB physical VMEM


def _round_up(a, b):
    return ((a + b - 1) // b) * b


# ------------------------------- kernels -----------------------------------


def _ln_rows_kernel(x_ref, w_ref, b_ref, o_ref, *, inv_n, eps):
    """C % 128 == 0: one logical row per kernel row, plain reduction stats."""
    x = x_ref[...].astype(jnp.float32)
    mu = jnp.sum(x, axis=-1, keepdims=True) * inv_n
    d = x - mu
    var = jnp.sum(d * d, axis=-1, keepdims=True) * inv_n
    o_ref[...] = (d * (lax.rsqrt(var + eps) * w_ref[...]) + b_ref[...]).astype(o_ref.dtype)


def _ln_rows_masked_kernel(x_ref, w_ref, b_ref, m_ref, o_ref, *, inv_n, eps):
    """Channel axis zero-padded to a multiple of 128; mask keeps pad lanes out of var."""
    x = x_ref[...].astype(jnp.float32)
    mu = jnp.sum(x, axis=-1, keepdims=True) * inv_n       # pad lanes are zero -> sum exact
    d = (x - mu) * m_ref[...]                             # zero pad lanes for the variance
    var = jnp.sum(d * d, axis=-1, keepdims=True) * inv_n
    o_ref[...] = (d * (lax.rsqrt(var + eps) * w_ref[...]) + b_ref[...]).astype(o_ref.dtype)


def _ln_grouped_kernel(x_ref, w_ref, b_ref, p_ref, q_ref, o_ref, *, eps):
    """g logical rows packed per lane-dense kernel row (GC = g*C).

    Per-group mean/var are computed with skinny indicator matmuls on the
    otherwise-idle MXU (no XLU lane relayouts); the heavy elementwise passes
    stay on the lane-dense (tr, GC) layout.
    """
    hi = lax.Precision.HIGHEST                            # keep f32 accuracy for the stats
    x = x_ref[...].astype(jnp.float32)                                     # (tr, g*C)
    p = p_ref[...]                                                         # (g*C, g): 1/C indicator
    q = q_ref[...]                                                         # (g, g*C): 1.0 indicator
    mu = jnp.dot(x, p, precision=hi, preferred_element_type=jnp.float32)   # (tr, g)
    d = x - jnp.dot(mu, q, precision=hi, preferred_element_type=jnp.float32)
    var = jnp.dot(d * d, p, precision=hi, preferred_element_type=jnp.float32)
    inv = lax.rsqrt(var + eps)                                             # (tr, g)
    scale = jnp.dot(inv, q, precision=hi, preferred_element_type=jnp.float32) * w_ref[...]
    o_ref[...] = (d * scale + b_ref[...]).astype(o_ref.dtype)


# ------------------------------- wrapper -----------------------------------


@jax.jit
def with_bias_layernorm(x, weight, bias):
    """LayerNorm over the last dim of x with learnable weight & bias (eps=1e-5)."""
    orig_shape = x.shape
    C = orig_shape[-1]
    rows = math.prod(orig_shape[:-1])
    itemsize = jnp.dtype(x.dtype).itemsize
    row_align = max(8, 32 // itemsize)            # sublane granularity for x.dtype

    # ---- choose a lane-dense layout: kernel last dim is a multiple of 128 ----
    if C % _LANES == 0:
        mode, g, Cp = "dense", 1, C
    else:
        g = _LANES // math.gcd(C, _LANES)
        if g * C <= _GC_CAP and rows >= g:
            mode, Cp = "pack", C                  # pack g rows per kernel row (no waste)
        else:
            mode, g, Cp = "chanpad", 1, _round_up(C, _LANES)   # zero-pad channel axis
    GC = g * Cp

    # ---- build the (packed_rows, GC) kernel view; common path is copy-free ----
    x2 = x.reshape(rows, C)
    row_pad = 0
    if mode == "pack":
        row_pad = (-rows) % g                     # <= g-1 rows; only on ragged row counts
        if row_pad:
            x2 = jnp.pad(x2, ((0, row_pad), (0, 0)))
        packed_rows = (rows + row_pad) // g
        xk = x2.reshape(packed_rows, GC)          # pure row-major reshape: no copy
    elif mode == "chanpad":
        packed_rows = rows
        xk = jnp.pad(x2, ((0, 0), (0, Cp - C)))
    else:
        packed_rows = rows
        xk = x2

    # ---- small f32 operands (weight / bias / indicators), built per call ----
    w_f = jnp.asarray(weight, jnp.float32).reshape(C)
    b_f = jnp.asarray(bias, jnp.float32).reshape(C)
    if mode == "chanpad":
        w_f = jnp.pad(w_f, (0, Cp - C))
        b_f = jnp.pad(b_f, (0, Cp - C))
    if g > 1:
        w_f = jnp.tile(w_f, g)
        b_f = jnp.tile(b_f, g)
    w_lane = w_f.reshape(1, GC)
    b_lane = b_f.reshape(1, GC)

    extra_inputs = []
    extra_specs = []
    const_elems = 2 * GC                          # w + b
    if mode == "pack":
        grp = jnp.arange(GC, dtype=jnp.int32) // C                       # lane -> group id
        P = (grp[:, None] == jnp.arange(g, dtype=jnp.int32)[None, :]).astype(jnp.float32) / C
        Q = (jnp.arange(g, dtype=jnp.int32)[:, None] == grp[None, :]).astype(jnp.float32)
        extra_inputs = [P, Q]
        extra_specs = [pl.BlockSpec((GC, g), lambda i: (0, 0)),
                       pl.BlockSpec((g, GC), lambda i: (0, 0))]
        const_elems += 2 * GC * g
        kernel = functools.partial(_ln_grouped_kernel, eps=_EPS)
    elif mode == "chanpad":
        mask = (jnp.arange(GC) < C).astype(jnp.float32).reshape(1, GC)
        extra_inputs = [mask]
        extra_specs = [pl.BlockSpec((1, GC), lambda i: (0, 0))]
        const_elems += GC
        kernel = functools.partial(_ln_rows_masked_kernel, inv_n=1.0 / C, eps=_EPS)
    else:
        kernel = functools.partial(_ln_rows_kernel, inv_n=1.0 / C, eps=_EPS)

    # ---- block-row selection: big streaming blocks, balanced ragged grid ----
    const_bytes = 2 * const_elems * 4             # double-buffered small operands
    per_row_bytes = GC * (4 * itemsize + 6 * 4)   # 2x in + 2x out bufs (x.dtype) + ~6 f32 temps
    tr = _BLOCK_F32_BYTES // (GC * 4)
    tr = min(tr, max(row_align, (_VMEM_TARGET - const_bytes) // per_row_bytes))
    tr = max(row_align, (tr // row_align) * row_align)
    tr_floor = max(row_align, ((_MIN_BLOCK_F32_BYTES // (GC * 4)) // row_align) * row_align)
    # v7x megacore: prefer >= 8 blocks (>= 4 per TensorCore) while blocks stay
    # above the floor; the extra grid steps are noise on single-TC v5e/v6e.
    tr_split = _round_up(pl.cdiv(packed_rows, 8), row_align)
    tr = min(tr, max(tr_floor, tr_split))
    tr = max(row_align, min(tr, _round_up(packed_rows, row_align)))
    n_blocks = pl.cdiv(packed_rows, tr)
    if n_blocks > 1 and n_blocks % 2 == 1:
        n_blocks += 1                             # even block count: balanced v7x TCs
    tr = max(row_align, _round_up(pl.cdiv(packed_rows, n_blocks), row_align))
    grid = (pl.cdiv(packed_rows, tr),)

    vmem_limit = int(min(48 * 1024 * 1024,
                         max(32 * 1024 * 1024,
                             tr * per_row_bytes + const_bytes + (4 << 20))))

    out = pl.pallas_call(
        kernel,
        out_shape=jax.ShapeDtypeStruct((packed_rows, GC), x.dtype),
        grid_spec=pltpu.PrefetchScalarGridSpec(
            num_scalar_prefetch=0,
            grid=grid,
            in_specs=[
                pl.BlockSpec((tr, GC), lambda i: (i, 0)),
                pl.BlockSpec((1, GC), lambda i: (0, 0)),
                pl.BlockSpec((1, GC), lambda i: (0, 0)),
            ] + extra_specs,
            out_specs=pl.BlockSpec((tr, GC), lambda i: (i, 0)),
        ),
        compiler_params=pltpu.CompilerParams(
            dimension_semantics=("parallel",),
            vmem_limit_bytes=vmem_limit,
        ),
    )(xk, w_lane, b_lane, *extra_inputs)

    if mode == "pack":
        out = out.reshape(packed_rows * g, C)
        if row_pad:
            out = out[:rows]
    elif mode == "chanpad":
        out = out[:, :C]
    return out.reshape(orig_shape)


# ------------------------------- reference ---------------------------------


def _reference(x, weight, bias):
    xf = x.astype(jnp.float32)
    mu = jnp.mean(xf, axis=-1, keepdims=True)
    var = jnp.mean((xf - mu) ** 2, axis=-1, keepdims=True)
    y = (xf - mu) / jnp.sqrt(var + _EPS) * weight.astype(jnp.float32) \
        + bias.astype(jnp.float32)
    return y.astype(x.dtype)


if __name__ == "__main__":
    key = jax.random.PRNGKey(0)
    k1, k2, k3, k4, k5 = jax.random.split(key, 5)

    # 1) Packed path (C=32 -> g=4, GC=128): batch=2, 16x16 spatial, channels-last.
    x1 = jax.random.normal(k1, (2, 16, 16, 32), dtype=jnp.float32)
    w1 = jnp.ones((32,), jnp.float32) + 0.01 * jnp.arange(32, dtype=jnp.float32)
    b1 = 0.001 * jnp.arange(32, dtype=jnp.float32)
    o1 = jax.block_until_ready(with_bias_layernorm(x1, w1, b1))
    assert o1.shape == x1.shape and o1.dtype == x1.dtype
    assert jnp.allclose(o1, _reference(x1, w1, b1), atol=1e-4, rtol=1e-4)

    # 2) Packed + ragged rows (Restormer-like C=48; 21 rows is not a multiple of g=8).
    x2 = jax.random.normal(k2, (3, 7, 48), dtype=jnp.float32)
    w2 = jnp.full((48,), 0.5, jnp.float32)
    b2 = jnp.full((48,), 0.25, jnp.float32)
    o2 = jax.block_until_ready(with_bias_layernorm(x2, w2, b2))
    assert jnp.allclose(o2, _reference(x2, w2, b2), atol=1e-4, rtol=1e-4)

    # 3) Lane-dense C (C % 128 == 0): plain reduction path.
    x3 = jax.random.normal(k3, (2, 8, 128), dtype=jnp.float32)
    w3 = 1.0 + 0.02 * jax.random.normal(k4, (128,), dtype=jnp.float32)
    b3 = 0.1 * jax.random.normal(k5, (128,), dtype=jnp.float32)
    o3 = jax.block_until_ready(with_bias_layernorm(x3, w3, b3))
    assert jnp.allclose(o3, _reference(x3, w3, b3), atol=1e-4, rtol=1e-4)

    # 4) Awkward C (130): channel-padded lane-dense path with masked variance.
    x4 = jax.random.normal(k1, (4, 6, 130), dtype=jnp.float32)
    w4 = jnp.ones((130,), jnp.float32) - 0.003 * jnp.arange(130, dtype=jnp.float32)
    b4 = jnp.full((130,), -0.05, jnp.float32)
    o4 = jax.block_until_ready(with_bias_layernorm(x4, w4, b4))
    assert jnp.allclose(o4, _reference(x4, w4, b4), atol=1e-4, rtol=1e-4)

    # 5) bf16 input on the packed path (C=64 -> g=2); stats stay in f32.
    x5 = jax.random.normal(k2, (2, 16, 16, 64), dtype=jnp.bfloat16)
    w5 = jnp.ones((64,), jnp.float32)
    b5 = jnp.zeros((64,), jnp.float32)
    o5 = jax.block_until_ready(with_bias_layernorm(x5, w5, b5))
    assert o5.dtype == jnp.bfloat16
    assert jnp.allclose(o5.astype(jnp.float32),
                        _reference(x5, w5, b5).astype(jnp.float32),
                        atol=2e-2, rtol=2e-2)

    print("KERNEL_OK")
</pallas_src>

<mosaic_0001>
module attributes {stable_mosaic.version = 11 : i64} {
  func.func @_ln_grouped_kernel(%arg0: i32, %arg1: memref<128x128xf32, #tpu.memory_space<vmem>>, %arg2: memref<1x128xf32, #tpu.memory_space<vmem>>, %arg3: memref<1x128xf32, #tpu.memory_space<vmem>>, %arg4: memref<128x4xf32, #tpu.memory_space<vmem>>, %arg5: memref<4x128xf32, #tpu.memory_space<vmem>>, %arg6: memref<128x128xf32, #tpu.memory_space<vmem>>) attributes {dimension_semantics = [#tpu.dimension_semantics<parallel>], iteration_bounds = array<i64: 1>, scalar_prefetch = 0 : i64, scratch_operands = 0 : i64, tpu.core_type = #tpu.core_type<tc>, window_params = [{transform_indices = @transform_0, window_bounds = array<i64: 128, 128>}, {pipeline_mode = #tpu.pipeline_mode<synchronous>, transform_indices = @transform_1, window_bounds = array<i64: 1, 128>}, {pipeline_mode = #tpu.pipeline_mode<synchronous>, transform_indices = @transform_2, window_bounds = array<i64: 1, 128>}, {pipeline_mode = #tpu.pipeline_mode<synchronous>, transform_indices = @transform_3, window_bounds = array<i64: 128, 4>}, {pipeline_mode = #tpu.pipeline_mode<synchronous>, transform_indices = @transform_4, window_bounds = array<i64: 4, 128>}, {transform_indices = @transform_5, window_bounds = array<i64: 128, 128>}]} {
    %c0 = arith.constant 0 : index
    %c0_0 = arith.constant 0 : index
    %0 = vector.load %arg1[%c0, %c0_0] : memref<128x128xf32, #tpu.memory_space<vmem>>, vector<128x128xf32>
    %c0_1 = arith.constant 0 : index
    %c0_2 = arith.constant 0 : index
    %1 = vector.load %arg4[%c0_1, %c0_2] : memref<128x4xf32, #tpu.memory_space<vmem>>, vector<128x4xf32>
    %c0_3 = arith.constant 0 : index
    %c0_4 = arith.constant 0 : index
    %2 = vector.load %arg5[%c0_3, %c0_4] : memref<4x128xf32, #tpu.memory_space<vmem>>, vector<4x128xf32>
    %cst = arith.constant dense<0.000000e+00> : vector<128x4xf32>
    %3 = tpu.matmul %0, %1, %cst {dimension_numbers = #tpu.dot_dimension_numbers<[1], [0], [0], [1], [0, 0, 1, 1], [], []>, precision = #tpu.contract_precision<fp32>} : vector<128x128xf32>, vector<128x4xf32>, vector<128x4xf32> -> vector<128x4xf32>
    %cst_5 = arith.constant dense<0.000000e+00> : vector<128x128xf32>
    %4 = tpu.matmul %3, %2, %cst_5 {dimension_numbers = #tpu.dot_dimension_numbers<[1], [0], [0], [1], [0, 0, 1, 1], [], []>, precision = #tpu.contract_precision<fp32>} : vector<128x4xf32>, vector<4x128xf32>, vector<128x128xf32> -> vector<128x128xf32>
    %5 = arith.subf %0, %4 : vector<128x128xf32>
    %6 = arith.mulf %5, %5 : vector<128x128xf32>
    %cst_6 = arith.constant dense<0.000000e+00> : vector<128x4xf32>
    %7 = tpu.matmul %6, %1, %cst_6 {dimension_numbers = #tpu.dot_dimension_numbers<[1], [0], [0], [1], [0, 0, 1, 1], [], []>, precision = #tpu.contract_precision<fp32>} : vector<128x128xf32>, vector<128x4xf32>, vector<128x4xf32> -> vector<128x4xf32>
    %cst_7 = arith.constant 9.99999974E-6 : f32
    %8 = vector.broadcast %cst_7 : f32 to vector<128x4xf32>
    %9 = arith.addf %7, %8 : vector<128x4xf32>
    %10 = math.rsqrt %9 : vector<128x4xf32>
    %cst_8 = arith.constant dense<0.000000e+00> : vector<128x128xf32>
    %11 = tpu.matmul %10, %2, %cst_8 {dimension_numbers = #tpu.dot_dimension_numbers<[1], [0], [0], [1], [0, 0, 1, 1], [], []>, precision = #tpu.contract_precision<fp32>} : vector<128x4xf32>, vector<4x128xf32>, vector<128x128xf32> -> vector<128x128xf32>
    %c0_9 = arith.constant 0 : index
    %c0_10 = arith.constant 0 : index
    %12 = vector.load %arg2[%c0_9, %c0_10] : memref<1x128xf32, #tpu.memory_space<vmem>>, vector<1x128xf32>
    %13 = vector.broadcast %12 : vector<1x128xf32> to vector<128x128xf32>
    %14 = arith.mulf %11, %13 : vector<128x128xf32>
    %15 = arith.mulf %5, %14 : vector<128x128xf32>
    %c0_11 = arith.constant 0 : index
    %c0_12 = arith.constant 0 : index
    %16 = vector.load %arg3[%c0_11, %c0_12] : memref<1x128xf32, #tpu.memory_space<vmem>>, vector<1x128xf32>
    %17 = vector.broadcast %16 : vector<1x128xf32> to vector<128x128xf32>
    %18 = arith.addf %15, %17 : vector<128x128xf32>
    %c0_13 = arith.constant 0 : index
    %c0_14 = arith.constant 0 : index
    %19 = vector.load %arg6[%c0_13, %c0_14] : memref<128x128xf32, #tpu.memory_space<vmem>>, vector<128x128xf32>
    tpu.vector_store %arg6[%c0_13, %c0_14], %18 {strides = array<i32>} : memref<128x128xf32, #tpu.memory_space<vmem>>, vector<128x128xf32>,
    return
  }
  func.func @transform_0(%arg0: i32) -> (i32, i32) {
    %c0_i32 = arith.constant 0 : i32
    %c0_i32_0 = arith.constant 0 : i32
    return %arg0, %c0_i32 : i32, i32
  }
  func.func @transform_1(%arg0: i32) -> (i32, i32) {
    %c0_i32 = arith.constant 0 : i32
    %c0_i32_0 = arith.constant 0 : i32
    %c0_i32_1 = arith.constant 0 : i32
    return %c0_i32, %c0_i32_0 : i32, i32
  }
  func.func @transform_2(%arg0: i32) -> (i32, i32) {
    %c0_i32 = arith.constant 0 : i32
    %c0_i32_0 = arith.constant 0 : i32
    %c0_i32_1 = arith.constant 0 : i32
    return %c0_i32, %c0_i32_0 : i32, i32
  }
  func.func @transform_3(%arg0: i32) -> (i32, i32) {
    %c0_i32 = arith.constant 0 : i32
    %c0_i32_0 = arith.constant 0 : i32
    %c0_i32_1 = arith.constant 0 : i32
    return %c0_i32, %c0_i32_0 : i32, i32
  }
  func.func @transform_4(%arg0: i32) -> (i32, i32) {
    %c0_i32 = arith.constant 0 : i32
    %c0_i32_0 = arith.constant 0 : i32
    %c0_i32_1 = arith.constant 0 : i32
    return %c0_i32, %c0_i32_0 : i32, i32
  }
  func.func @transform_5(%arg0: i32) -> (i32, i32) {
    %c0_i32 = arith.constant 0 : i32
    %c0_i32_0 = arith.constant 0 : i32
    return %arg0, %c0_i32 : i32, i32
  }
}

</mosaic_0001>

<llo_original>
// kernel: tile.13
$region0: #{tile.13}
  #allocation0 [shape = 's32[1]{0}', space=sflag, size = 0x4, scoped, tag = 'scoped memory for tile.13']
  %s0 = inlined_call_operand.vmem [shape: f32[32], index: 0, kind: input, shape index: {}]
  %s1 = inlined_call_operand.vmem [shape: f32[4,32], index: 1, kind: output, shape index: {}]
  // Predicated region
  $region2: #{tile.13} parent=0 // pred_check
    _
  $region3: #{tile.13} parent=0 // pred_check_branch
    %3 = sbr.rel (0) target = $region5
  $region4: #{tile.13} parent=0 // pred_region
    _
  $region5: #{tile.13} parent=0 // pred_fallthru
    _
  %v4 = vld [vmem:[%s0] ss:$0 sm:$0xff]
  %5 = vst [vmem:[%s1] sm:$0xf] %v4

// kernel: tile.18
$region0: #{tile.18}
  %s0 = inlined_call_operand.vmem [shape: f32[4,32], index: 0, kind: input, shape index: {}]
  %s1 = inlined_call_operand.vmem [shape: f32[1,128], index: 1, kind: output, shape index: {}]
  $region1: #{tile.18} parent=0
    #allocation0 [shape = 'u8[4096]{0}', space=vmem, size = 0x1000, scoped, tag = 'scoped mem for output reshape']
    #allocation1 [shape = 'u8[4096]{0}', space=vmem, size = 0x1000, scoped, tag = 'scoped mem for input reshape']
    %s3 = sshllo.u32 0, 4
    %v4 = vld [vmem:[%s0] sm:%s3]
    %5 = vst [vmem:[#allocation1] sm:%s3] %v4
    %v6 = vld [vmem:[#allocation1] sm:$0x1]
    %vm7 = vcmask 261120
    %8 = vst.msk [vmem:[#allocation0] sm:$0x1] %vm7, %v6
    %s9 = scalar_lea.vmem [#allocation1], 3
    %v10 = vld [vmem:[%s9] sm:$0x1]
    %11 = vrot.lane.b32.xlu0 %v10, 96
    %v12 = vpop.permute.xlu0 %11
    %vm13 = vcmask 1048320
    %14 = vst.msk [vmem:[#allocation0] sm:$0x1] %vm13, %v12
    %s15 = scalar_lea.vmem [#allocation1], 2
    %v16 = vld [vmem:[%s15] sm:$0x1]
    %17 = vrot.lane.b32.xlu0 %v16, 64
    %v18 = vpop.permute.xlu0 %17
    %vm19 = vcmask 785920
    %20 = vst.msk [vmem:[#allocation0] sm:$0x1] %vm19, %v18
    %s21 = scalar_lea.vmem [#allocation1], 1
    %v22 = vld [vmem:[%s21] sm:$0x1]
    %23 = vrot.lane.b32.xlu0 %v22, 32
    %v24 = vpop.permute.xlu0 %23
    %vm25 = vcmask 523520
    %26 = vst.msk [vmem:[#allocation0] sm:$0x1] %vm25, %v24
    %s28 = sshllo.u32 0, 1
    %v30 = vld [vmem:[#allocation0] sm:%s28]
    %s31 = sshllo.u32 0, 1
    %32 = vst [vmem:[%s1] sm:%s31] %v30

// kernel: with_bias_layernorm.1
$region0: #{with_bias_layernorm.1}
  #allocation0 [shape = 'u32[]', space=smem, size = 0x4, offset = 0x4, fixed_abs, tag = 'smem constant byte address 0x4 - core index']
  #allocation1 [shape = 'u32[144,128]{1,0:T(1,128)}', space=vmem, size = 0x12000, scoped, tag = 'internal scratch']
  %s0 = inlined_call_operand.vmem [shape: f32[128,128], index: 0, kind: input, shape index: {}]
  %s1 = inlined_call_operand.vmem [shape: f32[1,128], index: 1, kind: input, shape index: {}]
  %s2 = inlined_call_operand.vmem [shape: f32[1,128], index: 2, kind: input, shape index: {}]
  %s3 = inlined_call_operand.vmem [shape: f32[128,4], index: 3, kind: input, shape index: {}]
  %s4 = inlined_call_operand.vmem [shape: f32[4,128], index: 4, kind: input, shape index: {}]
  %s5 = inlined_call_operand.vmem [shape: f32[128,128], index: 5, kind: output, shape index: {}]
  %s6 = sld [smem:[#allocation0]]
  $region30: #{with_bias_layernorm.1} parent=0
    _
  %s8 = ssub.s32 1, %s6
  %s9 = scalar_select 0, %s8, %s6
  // Predicated region
  $region2: #{with_bias_layernorm.1} parent=0 // pred_check
    _
  $region3: #{with_bias_layernorm.1} parent=0 // pred_check_branch
    %11 = sbr.rel (0) target = $region5
  $region4: #{with_bias_layernorm.1} parent=0 // pred_region
    _
  $region5: #{with_bias_layernorm.1} parent=0 // pred_fallthru
    _
  // Predicated region
  $region6: #{with_bias_layernorm.1} parent=0 // pred_check
    _
  $region7: #{with_bias_layernorm.1} parent=0 // pred_check_branch
    %13 = sbr.rel (0) target = $region9
  $region8: #{with_bias_layernorm.1} parent=0 // pred_region
    _
  $region9: #{with_bias_layernorm.1} parent=0 // pred_fallthru
    _
  // Predicated region
  $region10: #{with_bias_layernorm.1} parent=0 // pred_check
    _
  $region11: #{with_bias_layernorm.1} parent=0 // pred_check_branch
    %15 = sbr.rel (0) target = $region13
  $region12: #{with_bias_layernorm.1} parent=0 // pred_region
    _
  $region13: #{with_bias_layernorm.1} parent=0 // pred_fallthru
    _
  // Predicated region
  $region14: #{with_bias_layernorm.1} parent=0 // pred_check
    _
  $region15: #{with_bias_layernorm.1} parent=0 // pred_check_branch
    %17 = sbr.rel (0) target = $region17
  $region16: #{with_bias_layernorm.1} parent=0 // pred_region
    _
  $region17: #{with_bias_layernorm.1} parent=0 // pred_fallthru
    _
  // Predicated region
  $region18: #{with_bias_layernorm.1} parent=0 // pred_check
    _
  $region19: #{with_bias_layernorm.1} parent=0 // pred_check_branch
    %19 = sbr.rel (0) target = $region21
  $region20: #{with_bias_layernorm.1} parent=0 // pred_region
    _
  $region21: #{with_bias_layernorm.1} parent=0 // pred_fallthru
    _
  %v20 = vld [vmem:[%s0] sm:$0xff]
  %v21 = vld [vmem:[%s0 + $0x8] sm:$0xff]
  %v22 = vld [vmem:[%s0 + $0x10] sm:$0xff]
  %v23 = vld [vmem:[%s0 + $0x18] sm:$0xff]
  %v24 = vld [vmem:[%s0 + $0x20] sm:$0xff]
  %v25 = vld [vmem:[%s0 + $0x28] sm:$0xff]
  %v26 = vld [vmem:[%s0 + $0x30] sm:$0xff]
  %v27 = vld [vmem:[%s0 + $0x38] sm:$0xff]
  %v28 = vld [vmem:[%s0 + $0x40] sm:$0xff]
  %v29 = vld [vmem:[%s0 + $0x48] sm:$0xff]
  %v30 = vld [vmem:[%s0 + $0x50] sm:$0xff]
  %v31 = vld [vmem:[%s0 + $0x58] sm:$0xff]
  %v32 = vld [vmem:[%s0 + $0x60] sm:$0xff]
  %v33 = vld [vmem:[%s0 + $0x68] sm:$0xff]
  %v34 = vld [vmem:[%s0 + $0x70] sm:$0xff]
  %v35 = vld [vmem:[%s0 + $0x78] sm:$0xff]
  %v36 = vld [vmem:[%s3] sm:$0xff]
  %v37 = vld [vmem:[%s3 + $0x8] sm:$0xff]
  %v38 = vld [vmem:[%s3 + $0x10] sm:$0xff]
  %v39 = vld [vmem:[%s3 + $0x18] sm:$0xff]
  %v40 = vld [vmem:[%s3 + $0x20] sm:$0xff]
  %v41 = vld [vmem:[%s3 + $0x28] sm:$0xff]
  %v42 = vld [vmem:[%s3 + $0x30] sm:$0xff]
  %v43 = vld [vmem:[%s3 + $0x38] sm:$0xff]
  %v44 = vld [vmem:[%s3 + $0x40] sm:$0xff]
  %v45 = vld [vmem:[%s3 + $0x48] sm:$0xff]
  %v46 = vld [vmem:[%s3 + $0x50] sm:$0xff]
  %v47 = vld [vmem:[%s3 + $0x58] sm:$0xff]
  %v48 = vld [vmem:[%s3 + $0x60] sm:$0xff]
  %v49 = vld [vmem:[%s3 + $0x68] sm:$0xff]
  %v50 = vld [vmem:[%s3 + $0x70] sm:$0xff]
  %v51 = vld [vmem:[%s3 + $0x78] sm:$0xff]
  %v52 = vld [vmem:[%s4] sm:$0xf]
  %53 = vmatprep.subr.mxu0 0.0
  %v54 = vand.u32 %v36, 4294901760
  %55 = vmatpush1.msra.mxu0 %v54
  %56 = vmatprep.subr.mxu0 0.0
  %v57 = vand.u32 %v37, 4294901760
  %58 = vmatpush1.msra.mxu0 %v57
  %59 = vmatprep.subr.mxu0 0.0
  %v60 = vand.u32 %v38, 4294901760
  %61 = vmatpush1.msra.mxu0 %v60
  %62 = vmatprep.subr.mxu0 0.0
  %v63 = vand.u32 %v39, 4294901760
  %64 = vmatpush1.msra.mxu0 %v63
  %65 = vmatprep.subr.mxu0 0.0
  %v66 = vand.u32 %v40, 4294901760
  %67 = vmatpush1.msra.mxu0 %v66
  %68 = vmatprep.subr.mxu0 0.0
  %v69 = vand.u32 %v41, 4294901760
  %70 = vmatpush1.msra.mxu0 %v69
  %71 = vmatprep.subr.mxu0 0.0
  %v72 = vand.u32 %v42, 4294901760
  %73 = vmatpush1.msra.mxu0 %v72
  %74 = vmatprep.subr.mxu0 0.0
  %v75 = vand.u32 %v43, 4294901760
  %76 = vmatpush1.msra.mxu0 %v75
  %77 = vmatprep.subr.mxu0 0.0
  %v78 = vand.u32 %v44, 4294901760
  %79 = vmatpush1.msra.mxu0 %v78
  %80 = vmatprep.subr.mxu0 0.0
  %v81 = vand.u32 %v45, 4294901760
  %82 = vmatpush1.msra.mxu0 %v81
  %83 = vmatprep.subr.mxu0 0.0
  %v84 = vand.u32 %v46, 4294901760
  %85 = vmatpush1.msra.mxu0 %v84
  %86 = vmatprep.subr.mxu0 0.0
  %v87 = vand.u32 %v47, 4294901760
  %88 = vmatpush1.msra.mxu0 %v87
  %89 = vmatprep.subr.mxu0 0.0
  %v90 = vand.u32 %v48, 4294901760
  %91 = vmatpush1.msra.mxu0 %v90
  %92 = vmatprep.subr.mxu0 0.0
  %v93 = vand.u32 %v49, 4294901760
  %94 = vmatpush1.msra.mxu0 %v93
  %95 = vmatprep.subr.mxu0 0.0
  %v96 = vand.u32 %v50, 4294901760
  %97 = vmatpush1.msra.mxu0 %v96
  %98 = vmatprep.subr.mxu0 0.0
  %v99 = vand.u32 %v51, 4294901760
  %100 = vmatpush1.msra.mxu0 %v99
  %101 = vmatprep.subr.mxu0 0.0
  %102 = vmatpush1.msra.mxu0 0.0
  %103 = vmatprep.subr.mxu0 0.0
  %104 = vmatpush1.msra.mxu0 0.0
  %105 = vmatprep.subr.mxu0 0.0
  %106 = vmatpush1.msra.mxu0 0.0
  %107 = vmatprep.subr.mxu0 0.0
  %108 = vmatpush1.msra.mxu0 0.0
  %109 = vmatprep.subr.mxu0 0.0
  %110 = vmatpush1.msra.mxu0 0.0
  %111 = vmatprep.subr.mxu0 0.0
  %112 = vmatpush1.msra.mxu0 0.0
  %113 = vmatprep.subr.mxu0 0.0
  %114 = vmatpush1.msra.mxu0 0.0
  %115 = vmatprep.subr.mxu0 0.0
  %116 = vmatpush1.msra.mxu0 0.0
  %117 = vmatprep.subr.mxu0 0.0
  %118 = vmatpush1.msra.mxu0 0.0
  %119 = vmatprep.subr.mxu0 0.0
  %120 = vmatpush1.msra.mxu0 0.0
  %121 = vmatprep.subr.mxu0 0.0
  %122 = vmatpush1.msra.mxu0 0.0
  %123 = vmatprep.subr.mxu0 0.0
  %124 = vmatpush1.msra.mxu0 0.0
  %125 = vmatprep.subr.mxu0 0.0
  %126 = vmatpush1.msra.mxu0 0.0
  %127 = vmatprep.subr.mxu0 0.0
  %128 = vmatpush1.msra.mxu0 0.0
  %129 = vmatprep.subr.mxu0 0.0
  %130 = vmatpush1.msra.mxu0 0.0
  %131 = vmatprep.subr.mxu0 0.0
  %132 = vmatpush1.msra.mxu0 0.0
  %133 = vmatprep.mubr.f32.mxu0 0.0
  %v134 = vand.u32 %v20, 4294901760
  %v135 = vsub.f32 %v20, %v134
  %v136 = vand.u32 %v135, 4294901760
  %v137 = vsub.f32 %v135, %v136
  %v138 = vand.u32 %v137, 4294901760
  %139 = vmatmul.mubr.f32.gmra.mrb[0].mxu0 %v138
  %v140 = vpop.f32.mrb[0].mxu0
  %v141 = vadd.f32 0.0, %v140
  %v142 = vpop.f32.mrb[0].mxu0
  %143 = vmatprep.mubr.f32.mxu0 0.0
  %v144 = vand.u32 %v21, 4294901760
  %v145 = vsub.f32 %v21, %v144
  %v146 = vand.u32 %v145, 4294901760
  %v147 = vsub.f32 %v145, %v146
  %v148 = vand.u32 %v147, 4294901760
  %149 = vmatmul.mubr.f32.gmra.mrb[0].mxu0 %v148
  %v150 = vpop.f32.mrb[0].mxu0
  %v151 = vadd.f32 0.0, %v150
  %v152 = vpop.f32.mrb[0].mxu0
  %153 = vmatprep.mubr.f32.mxu0 0.0
  %v154 = vand.u32 %v22, 4294901760
  %v155 = vsub.f32 %v22, %v154
  %v156 = vand.u32 %v155, 4294901760
  %v157 = vsub.f32 %v155, %v156
  %v158 = vand.u32 %v157, 4294901760
  %159 = vmatmul.mubr.f32.gmra.mrb[0].mxu0 %v158
  %v160 = vpop.f32.mrb[0].mxu0
  %v161 = vadd.f32 0.0, %v160
  %v162 = vpop.f32.mrb[0].mxu0
  %163 = vmatprep.mubr.f32.mxu0 0.0
  %v164 = vand.u32 %v23, 4294901760
  %v165 = vsub.f32 %v23, %v164
  %v166 = vand.u32 %v165, 4294901760
  %v167 = vsub.f32 %v165, %v166
  %v168 = vand.u32 %v167, 4294901760
  %169 = vmatmul.mubr.f32.gmra.mrb[0].mxu0 %v168
  %v170 = vpop.f32.mrb[0].mxu0
  %v171 = vadd.f32 0.0, %v170
  %v172 = vpop.f32.mrb[0].mxu0
  %173 = vmatprep.mubr.f32.mxu0 0.0
  %v174 = vand.u32 %v24, 4294901760
  %v175 = vsub.f32 %v24, %v174
  %v176 = vand.u32 %v175, 4294901760
  %v177 = vsub.f32 %v175, %v176
  %v178 = vand.u32 %v177, 4294901760
  %179 = vmatmul.mubr.f32.gmra.mrb[0].mxu0 %v178
  %v180 = vpop.f32.mrb[0].mxu0
  %v181 = vadd.f32 0.0, %v180
  %v182 = vpop.f32.mrb[0].mxu0
  %183 = vmatprep.mubr.f32.mxu0 0.0
  %v184 = vand.u32 %v25, 4294901760
  %v185 = vsub.f32 %v25, %v184
  %v186 = vand.u32 %v185, 4294901760
  %v187 = vsub.f32 %v185, %v186
  %v188 = vand.u32 %v187, 4294901760
  %189 = vmatmul.mubr.f32.gmra.mrb[0].mxu0 %v188
  %v190 = vpop.f32.mrb[0].mxu0
  %v191 = vadd.f32 0.0, %v190
  %v192 = vpop.f32.mrb[0].mxu0
  %193 = vmatprep.mubr.f32.mxu0 0.0
  %v194 = vand.u32 %v26, 4294901760
  %v195 = vsub.f32 %v26, %v194
  %v196 = vand.u32 %v195, 4294901760
  %v197 = vsub.f32 %v195, %v196
  %v198 = vand.u32 %v197, 4294901760
  %199 = vmatmul.mubr.f32.gmra.mrb[0].mxu0 %v198
  %v200 = vpop.f32.mrb[0].mxu0
  %v201 = vadd.f32 0.0, %v200
  %v202 = vpop.f32.mrb[0].mxu0
  %203 = vmatprep.mubr.f32.mxu0 0.0
  %v204 = vand.u32 %v27, 4294901760
  %v205 = vsub.f32 %v27, %v204
  %v206 = vand.u32 %v205, 4294901760
  %v207 = vsub.f32 %v205, %v206
  %v208 = vand.u32 %v207, 4294901760
  %209 = vmatmul.mubr.f32.gmra.mrb[0].mxu0 %v208
  %v210 = vpop.f32.mrb[0].mxu0
  %v211 = vadd.f32 0.0, %v210
  %v212 = vpop.f32.mrb[0].mxu0
  %213 = vmatprep.mubr.f32.mxu0 0.0
  %v214 = vand.u32 %v28, 4294901760
  %v215 = vsub.f32 %v28, %v214
  %v216 = vand.u32 %v215, 4294901760
  %v217 = vsub.f32 %v215, %v216
  %v218 = vand.u32 %v217, 4294901760
  %219 = vmatmul.mubr.f32.gmra.mrb[0].mxu0 %v218
  %v220 = vpop.f32.mrb[0].mxu0
  %v221 = vadd.f32 0.0, %v220
  %v222 = vpop.f32.mrb[0].mxu0
  %223 = vmatprep.mubr.f32.mxu0 0.0
  %v224 = vand.u32 %v29, 4294901760
  %v225 = vsub.f32 %v29, %v224
  %v226 = vand.u32 %v225, 4294901760
  %v227 = vsub.f32 %v225, %v226
  %v228 = vand.u32 %v227, 4294901760
  %229 = vmatmul.mubr.f32.gmra.mrb[0].mxu0 %v228
  %v230 = vpop.f32.mrb[0].mxu0
  %v231 = vadd.f32 0.0, %v230
  %v232 = vpop.f32.mrb[0].mxu0
  %233 = vmatprep.mubr.f32.mxu0 0.0
  %v234 = vand.u32 %v30, 4294901760
  %v235 = vsub.f32 %v30, %v234
  %v236 = vand.u32 %v235, 4294901760
  %v237 = vsub.f32 %v235, %v236
  %v238 = vand.u32 %v237, 4294901760
  %239 = vmatmul.mubr.f32.gmra.mrb[0].mxu0 %v238
  %v240 = vpop.f32.mrb[0].mxu0
  %v241 = vadd.f32 0.0, %v240
  %v242 = vpop.f32.mrb[0].mxu0
  %243 = vmatprep.mubr.f32.mxu0 0.0
  %v244 = vand.u32 %v31, 4294901760
  %v245 = vsub.f32 %v31, %v244
  %v246 = vand.u32 %v245, 4294901760
  %v247 = vsub.f32 %v245, %v246
  %v248 = vand.u32 %v247, 4294901760
  %249 = vmatmul.mubr.f32.gmra.mrb[0].mxu0 %v248
  %v250 = vpop.f32.mrb[0].mxu0
  %v251 = vadd.f32 0.0, %v250
  %v252 = vpop.f32.mrb[0].mxu0
  %253 = vmatprep.mubr.f32.mxu0 0.0
  %v254 = vand.u32 %v32, 4294901760
  %v255 = vsub.f32 %v32, %v254
  %v256 = vand.u32 %v255, 4294901760
  %v257 = vsub.f32 %v255, %v256
  %v258 = vand.u32 %v257, 4294901760
  %259 = vmatmul.mubr.f32.gmra.mrb[0].mxu0 %v258
  %v260 = vpop.f32.mrb[0].mxu0
  %v261 = vadd.f32 0.0, %v260
  %v262 = vpop.f32.mrb[0].mxu0
  %263 = vmatprep.mubr.f32.mxu0 0.0
  %v264 = vand.u32 %v33, 4294901760
  %v265 = vsub.f32 %v33, %v264
  %v266 = vand.u32 %v265, 4294901760
  %v267 = vsub.f32 %v265, %v266
  %v268 = vand.u32 %v267, 4294901760
  %269 = vmatmul.mubr.f32.gmra.mrb[0].mxu0 %v268
  %v270 = vpop.f32.mrb[0].mxu0
  %v271 = vadd.f32 0.0, %v270
  %v272 = vpop.f32.mrb[0].mxu0
  %273 = vmatprep.mubr.f32.mxu0 0.0
  %v274 = vand.u32 %v34, 4294901760
  %v275 = vsub.f32 %v34, %v274
  %v276 = vand.u32 %v275, 4294901760
  %v277 = vsub.f32 %v275, %v276
  %v278 = vand.u32 %v277, 4294901760
  %279 = vmatmul.mubr.f32.gmra.mrb[0].mxu0 %v278
  %v280 = vpop.f32.mrb[0].mxu0
  %v281 = vadd.f32 0.0, %v280
  %v282 = vpop.f32.mrb[0].mxu0
  %283 = vmatprep.mubr.f32.mxu0 0.0
  %v284 = vand.u32 %v35, 4294901760
  %v285 = vsub.f32 %v35, %v284
  %v286 = vand.u32 %v285, 4294901760
  %v287 = vsub.f32 %v285, %v286
  %v288 = vand.u32 %v287, 4294901760
  %289 = vmatmul.mubr.f32.gmra.mrb[0].mxu0 %v288
  %v290 = vpop.f32.mrb[0].mxu0
  %v291 = vadd.f32 0.0, %v290
  %v292 = vpop.f32.mrb[0].mxu0
  %293 = vdwg.mxu0
  %294 = vmatprep.subr.mxu0 0.0
  %v295 = vand.u32 %v36, 4294901760
  %v296 = vsub.f32 %v36, %v295
  %v297 = vand.u32 %v296, 4294901760
  %v298 = vsub.f32 %v296, %v297
  %v299 = vand.u32 %v298, 4294901760
  %300 = vmatpush1.msra.mxu0 %v299
  %301 = vmatprep.subr.mxu0 0.0
  %v302 = vand.u32 %v37, 4294901760
  %v303 = vsub.f32 %v37, %v302
  %v304 = vand.u32 %v303, 4294901760
  %v305 = vsub.f32 %v303, %v304
  %v306 = vand.u32 %v305, 4294901760
  %307 = vmatpush1.msra.mxu0 %v306
  %308 = vmatprep.subr.mxu0 0.0
  %v309 = vand.u32 %v38, 4294901760
  %v310 = vsub.f32 %v38, %v309
  %v311 = vand.u32 %v310, 4294901760
  %v312 = vsub.f32 %v310, %v311
  %v313 = vand.u32 %v312, 4294901760
  %314 = vmatpush1.msra.mxu0 %v313
  %315 = vmatprep.subr.mxu0 0.0
  %v316 = vand.u32 %v39, 4294901760
  %v317 = vsub.f32 %v39, %v316
  %v318 = vand.u32 %v317, 4294901760
  %v319 = vsub.f32 %v317, %v318
  %v320 = vand.u32 %v319, 4294901760
  %321 = vmatpush1.msra.mxu0 %v320
  %322 = vmatprep.subr.mxu0 0.0
  %v323 = vand.u32 %v40, 4294901760
  %v324 = vsub.f32 %v40, %v323
  %v325 = vand.u32 %v324, 4294901760
  %v326 = vsub.f32 %v324, %v325
  %v327 = vand.u32 %v326, 4294901760
  %328 = vmatpush1.msra.mxu0 %v327
  %329 = vmatprep.subr.mxu0 0.0
  %v330 = vand.u32 %v41, 4294901760
  %v331 = vsub.f32 %v41, %v330
  %v332 = vand.u32 %v331, 4294901760
  %v333 = vsub.f32 %v331, %v332
  %v334 = vand.u32 %v333, 4294901760
  %335 = vmatpush1.msra.mxu0 %v334
  %336 = vmatprep.subr.mxu0 0.0
  %v337 = vand.u32 %v42, 4294901760
  %v338 = vsub.f32 %v42, %v337
  %v339 = vand.u32 %v338, 4294901760
  %v340 = vsub.f32 %v338, %v339
  %v341 = vand.u32 %v340, 4294901760
  %342 = vmatpush1.msra.mxu0 %v341
  %343 = vmatprep.subr.mxu0 0.0
  %v344 = vand.u32 %v43, 4294901760
  %v345 = vsub.f32 %v43, %v344
  %v346 = vand.u32 %v345, 4294901760
  %v347 = vsub.f32 %v345, %v346
  %v348 = vand.u32 %v347, 4294901760
  %349 = vmatpush1.msra.mxu0 %v348
  %350 = vmatprep.subr.mxu0 0.0
  %v351 = vand.u32 %v44, 4294901760
  %v352 = vsub.f32 %v44, %v351
  %v353 = vand.u32 %v352, 4294901760
  %v354 = vsub.f32 %v352, %v353
  %v355 = vand.u32 %v354, 4294901760
  %356 = vmatpush1.msra.mxu0 %v355
  %357 = vmatprep.subr.mxu0 0.0
  %v358 = vand.u32 %v45, 4294901760
  %v359 = vsub.f32 %v45, %v358
  %v360 = vand.u32 %v359, 4294901760
  %v361 = vsub.f32 %v359, %v360
  %v362 = vand.u32 %v361, 4294901760
  %363 = vmatpush1.msra.mxu0 %v362
  %364 = vmatprep.subr.mxu0 0.0
  %v365 = vand.u32 %v46, 4294901760
  %v366 = vsub.f32 %v46, %v365
  %v367 = vand.u32 %v366, 4294901760
  %v368 = vsub.f32 %v366, %v367
  %v369 = vand.u32 %v368, 4294901760
  %370 = vmatpush1.msra.mxu0 %v369
  %371 = vmatprep.subr.mxu0 0.0
  %v372 = vand.u32 %v47, 4294901760
  %v373 = vsub.f32 %v47, %v372
  %v374 = vand.u32 %v373, 4294901760
  %v375 = vsub.f32 %v373, %v374
  %v376 = vand.u32 %v375, 4294901760
  %377 = vmatpush1.msra.mxu0 %v376
  %378 = vmatprep.subr.mxu0 0.0
  %v379 = vand.u32 %v48, 4294901760
  %v380 = vsub.f32 %v48, %v379
  %v381 = vand.u32 %v380, 4294901760
  %v382 = vsub.f32 %v380, %v381
  %v383 = vand.u32 %v382, 4294901760
  %384 = vmatpush1.msra.mxu0 %v383
  %385 = vmatprep.subr.mxu0 0.0
  %v386 = vand.u32 %v49, 4294901760
  %v387 = vsub.f32 %v49, %v386
  %v388 = vand.u32 %v387, 4294901760
  %v389 = vsub.f32 %v387, %v388
  %v390 = vand.u32 %v389, 4294901760
  %391 = vmatpush1.msra.mxu0 %v390
  %392 = vmatprep.subr.mxu0 0.0
  %v393 = vand.u32 %v50, 4294901760
  %v394 = vsub.f32 %v50, %v393
  %v395 = vand.u32 %v394, 4294901760
  %v396 = vsub.f32 %v394, %v395
  %v397 = vand.u32 %v396, 4294901760
  %398 = vmatpush1.msra.mxu0 %v397
  %399 = vmatprep.subr.mxu0 0.0
  %v400 = vand.u32 %v51, 4294901760
  %v401 = vsub.f32 %v51, %v400
  %v402 = vand.u32 %v401, 4294901760
  %v403 = vsub.f32 %v401, %v402
  %v404 = vand.u32 %v403, 4294901760
  %405 = vmatpush1.msra.mxu0 %v404
  %406 = vmatprep.subr.mxu0 0.0
  %407 = vmatpush1.msra.mxu0 0.0
  %408 = vmatprep.subr.mxu0 0.0
  %409 = vmatpush1.msra.mxu0 0.0
  %410 = vmatprep.subr.mxu0 0.0
  %411 = vmatpush1.msra.mxu0 0.0
  %412 = vmatprep.subr.mxu0 0.0
  %413 = vmatpush1.msra.mxu0 0.0
  %414 = vmatprep.subr.mxu0 0.0
  %415 = vmatpush1.msra.mxu0 0.0
  %416 = vmatprep.subr.mxu0 0.0
  %417 = vmatpush1.msra.mxu0 0.0
  %418 = vmatprep.subr.mxu0 0.0
  %419 = vmatpush1.msra.mxu0 0.0
  %420 = vmatprep.subr.mxu0 0.0
  %421 = vmatpush1.msra.mxu0 0.0
  %422 = vmatprep.subr.mxu0 0.0
  %423 = vmatpush1.msra.mxu0 0.0
  %424 = vmatprep.subr.mxu0 0.0
  %425 = vmatpush1.msra.mxu0 0.0
  %426 = vmatprep.subr.mxu0 0.0
  %427 = vmatpush1.msra.mxu0 0.0
  %428 = vmatprep.subr.mxu0 0.0
  %429 = vmatpush1.msra.mxu0 0.0
  %430 = vmatprep.subr.mxu0 0.0
  %431 = vmatpush1.msra.mxu0 0.0
  %432 = vmatprep.subr.mxu0 0.0
  %433 = vmatpush1.msra.mxu0 0.0
  %434 = vmatprep.subr.mxu0 0.0
  %435 = vmatpush1.msra.mxu0 0.0
  %436 = vmatprep.subr.mxu0 0.0
  %437 = vmatpush1.msra.mxu0 0.0
  %438 = vmatprep.mubr.f32.mxu0 0.0
  %v439 = vand.u32 %v20, 4294901760
  %440 = vmatmul.mubr.f32.gmra.mrb[0].mxu0 %v439
  %v441 = vpop.f32.mrb[0].mxu0
  %v442 = vadd.f32 %v141, %v441
  %v443 = vpop.f32.mrb[0].mxu0
  %444 = vmatprep.mubr.f32.mxu0 0.0
  %v445 = vand.u32 %v21, 4294901760
  %446 = vmatmul.mubr.f32.gmra.mrb[0].mxu0 %v445
  %v447 = vpop.f32.mrb[0].mxu0
  %v448 = vadd.f32 %v151, %v447
  %v449 = vpop.f32.mrb[0].mxu0
  %450 = vmatprep.mubr.f32.mxu0 0.0
  %v451 = vand.u32 %v22, 4294901760
  %452 = vmatmul.mubr.f32.gmra.mrb[0].mxu0 %v451
  %v453 = vpop.f32.mrb[0].mxu0
  %v454 = vadd.f32 %v161, %v453
  %v455 = vpop.f32.mrb[0].mxu0
  %456 = vmatprep.mubr.f32.mxu0 0.0
  %v457 = vand.u32 %v23, 4294901760
  %458 = vmatmul.mubr.f32.gmra.mrb[0].mxu0 %v457
  %v459 = vpop.f32.mrb[0].mxu0
  %v460 = vadd.f32 %v171, %v459
  %v461 = vpop.f32.mrb[0].mxu0
  %462 = vmatprep.mubr.f32.mxu0 0.0
  %v463 = vand.u32 %v24, 4294901760
  %464 = vmatmul.mubr.f32.gmra.mrb[0].mxu0 %v463
  %v465 = vpop.f32.mrb[0].mxu0
  %v466 = vadd.f32 %v181, %v465
  %v467 = vpop.f32.mrb[0].mxu0
  %468 = vmatprep.mubr.f32.mxu0 0.0
  %v469 = vand.u32 %v25, 4294901760
  %470 = vmatmul.mubr.f32.gmra.mrb[0].mxu0 %v469
  %v471 = vpop.f32.mrb[0].mxu0
  %v472 = vadd.f32 %v191, %v471
  %v473 = vpop.f32.mrb[0].mxu0
  %474 = vmatprep.mubr.f32.mxu0 0.0
  %v475 = vand.u32 %v26, 4294901760
  %476 = vmatmul.mubr.f32.gmra.mrb[0].mxu0 %v475
  %v477 = vpop.f32.mrb[0].mxu0
  %v478 = vadd.f32 %v201, %v477
  %v479 = vpop.f32.mrb[0].mxu0
  %480 = vmatprep.mubr.f32.mxu0 0.0
  %v481 = vand.u32 %v27, 4294901760
  %482 = vmatmul.mubr.f32.gmra.mrb[0].mxu0 %v481
  %v483 = vpop.f32.mrb[0].mxu0
  %v484 = vadd.f32 %v211, %v483
  %v485 = vpop.f32.mrb[0].mxu0
  %486 = vmatprep.mubr.f32.mxu0 0.0
  %v487 = vand.u32 %v28, 4294901760
  %488 = vmatmul.mubr.f32.gmra.mrb[0].mxu0 %v487
  %v489 = vpop.f32.mrb[0].mxu0
  %v490 = vadd.f32 %v221, %v489
  %v491 = vpop.f32.mrb[0].mxu0
  %492 = vmatprep.mubr.f32.mxu0 0.0
  %v493 = vand.u32 %v29, 4294901760
  %494 = vmatmul.mubr.f32.gmra.mrb[0].mxu0 %v493
  %v495 = vpop.f32.mrb[0].mxu0
  %v496 = vadd.f32 %v231, %v495
  %v497 = vpop.f32.mrb[0].mxu0
  %498 = vmatprep.mubr.f32.mxu0 0.0
  %v499 = vand.u32 %v30, 4294901760
  %500 = vmatmul.mubr.f32.gmra.mrb[0].mxu0 %v499
  %v501 = vpop.f32.mrb[0].mxu0
  %v502 = vadd.f32 %v241, %v501
  %v503 = vpop.f32.mrb[0].mxu0
  %504 = vmatprep.mubr.f32.mxu0 0.0
  %v505 = vand.u32 %v31, 4294901760
  %506 = vmatmul.mubr.f32.gmra.mrb[0].mxu0 %v505
  %v507 = vpop.f32.mrb[0].mxu0
  %v508 = vadd.f32 %v251, %v507
  %v509 = vpop.f32.mrb[0].mxu0
  %510 = vmatprep.mubr.f32.mxu0 0.0
  %v511 = vand.u32 %v32, 4294901760
  %512 = vmatmul.mubr.f32.gmra.mrb[0].mxu0 %v511
  %v513 = vpop.f32.mrb[0].mxu0
  %v514 = vadd.f32 %v261, %v513
  %v515 = vpop.f32.mrb[0].mxu0
  %516 = vmatprep.mubr.f32.mxu0 0.0
  %v517 = vand.u32 %v33, 4294901760
  %518 = vmatmul.mubr.f32.gmra.mrb[0].mxu0 %v517
  %v519 = vpop.f32.mrb[0].mxu0
  %v520 = vadd.f32 %v271, %v519
  %v521 = vpop.f32.mrb[0].mxu0
  %522 = vmatprep.mubr.f32.mxu0 0.0
  %v523 = vand.u32 %v34, 4294901760
  %524 = vmatmul.mubr.f32.gmra.mrb[0].mxu0 %v523
  %v525 = vpop.f32.mrb[0].mxu0
  %v526 = vadd.f32 %v281, %v525
  %v527 = vpop.f32.mrb[0].mxu0
  %528 = vmatprep.mubr.f32.mxu0 0.0
  %v529 = vand.u32 %v35, 4294901760
  %530 = vmatmul.mubr.f32.gmra.mrb[0].mxu0 %v529
  %v531 = vpop.f32.mrb[0].mxu0
  %v532 = vadd.f32 %v291, %v531
  %v533 = vpop.f32.mrb[0].mxu0
  %534 = vdwg.mxu0
  %535 = vmatprep.subr.mxu0 0.0
  %v536 = vand.u32 %v36, 4294901760
  %v537 = vsub.f32 %v36, %v536
  %538 = vmatpush1.msra.mxu0 %v537
  %539 = vmatprep.subr.mxu0 0.0
  %v540 = vand.u32 %v37, 4294901760
  %v541 = vsub.f32 %v37, %v540
  %542 = vmatpush1.msra.mxu0 %v541
  %543 = vmatprep.subr.mxu0 0.0
  %v544 = vand.u32 %v38, 4294901760
  %v545 = vsub.f32 %v38, %v544
  %546 = vmatpush1.msra.mxu0 %v545
  %547 = vmatprep.subr.mxu0 0.0
  %v548 = vand.u32 %v39, 4294901760
  %v549 = vsub.f32 %v39, %v548
  %550 = vmatpush1.msra.mxu0 %v549
  %551 = vmatprep.subr.mxu0 0.0
  %v552 = vand.u32 %v40, 4294901760
  %v553 = vsub.f32 %v40, %v552
  %554 = vmatpush1.msra.mxu0 %v553
  %555 = vmatprep.subr.mxu0 0.0
  %v556 = vand.u32 %v41, 4294901760
  %v557 = vsub.f32 %v41, %v556
  %558 = vmatpush1.msra.mxu0 %v557
  %559 = vmatprep.subr.mxu0 0.0
  %v560 = vand.u32 %v42, 4294901760
  %v561 = vsub.f32 %v42, %v560
  %562 = vmatpush1.msra.mxu0 %v561
  %563 = vmatprep.subr.mxu0 0.0
  %v564 = vand.u32 %v43, 4294901760
  %v565 = vsub.f32 %v43, %v564
  %566 = vmatpush1.msra.mxu0 %v565
  %567 = vmatprep.subr.mxu0 0.0
  %v568 = vand.u32 %v44, 4294901760
  %v569 = vsub.f32 %v44, %v568
  %570 = vmatpush1.msra.mxu0 %v569
  %571 = vmatprep.subr.mxu0 0.0
  %v572 = vand.u32 %v45, 4294901760
  %v573 = vsub.f32 %v45, %v572
  %574 = vmatpush1.msra.mxu0 %v573
  %575 = vmatprep.subr.mxu0 0.0
  %v576 = vand.u32 %v46, 4294901760
  %v577 = vsub.f32 %v46, %v576
  %578 = vmatpush1.msra.mxu0 %v577
  %579 = vmatprep.subr.mxu0 0.0
  %v580 = vand.u32 %v47, 4294901760
  %v581 = vsub.f32 %v47, %v580
  %582 = vmatpush1.msra.mxu0 %v581
  %583 = vmatprep.subr.mxu0 0.0
  %v584 = vand.u32 %v48, 4294901760
  %v585 = vsub.f32 %v48, %v584
  %586 = vmatpush1.msra.mxu0 %v585
  %587 = vmatprep.subr.mxu0 0.0
  %v588 = vand.u32 %v49, 4294901760
  %v589 = vsub.f32 %v49, %v588
  %590 = vmatpush1.msra.mxu0 %v589
  %591 = vmatprep.subr.mxu0 0.0
  %v592 = vand.u32 %v50, 4294901760
  %v593 = vsub.f32 %v50, %v592
  %594 = vmatpush1.msra.mxu0 %v593
  %595 = vmatprep.subr.mxu0 0.0
  %v596 = vand.u32 %v51, 4294901760
  %v597 = vsub.f32 %v51, %v596
  %598 = vmatpush1.msra.mxu0 %v597
  %599 = vmatprep.subr.mxu0 0.0
  %600 = vmatpush1.msra.mxu0 0.0
  %601 = vmatprep.subr.mxu0 0.0
  %602 = vmatpush1.msra.mxu0 0.0
  %603 = vmatprep.subr.mxu0 0.0
  %604 = vmatpush1.msra.mxu0 0.0
  %605 = vmatprep.subr.mxu0 0.0
  %606 = vmatpush1.msra.mxu0 0.0
  %607 = vmatprep.subr.mxu0 0.0
  %608 = vmatpush1.msra.mxu0 0.0
  %609 = vmatprep.subr.mxu0 0.0
  %610 = vmatpush1.msra.mxu0 0.0
  %611 = vmatprep.subr.mxu0 0.0
  %612 = vmatpush1.msra.mxu0 0.0
  %613 = vmatprep.subr.mxu0 0.0
  %614 = vmatpush1.msra.mxu0 0.0
  %615 = vmatprep.subr.mxu0 0.0
  %616 = vmatpush1.msra.mxu0 0.0
  %617 = vmatprep.subr.mxu0 0.0
  %618 = vmatpush1.msra.mxu0 0.0
  %619 = vmatprep.subr.mxu0 0.0
  %620 = vmatpush1.msra.mxu0 0.0
  %621 = vmatprep.subr.mxu0 0.0
  %622 = vmatpush1.msra.mxu0 0.0
  %623 = vmatprep.subr.mxu0 0.0
  %624 = vmatpush1.msra.mxu0 0.0
  %625 = vmatprep.subr.mxu0 0.0
  %626 = vmatpush1.msra.mxu0 0.0
  %627 = vmatprep.subr.mxu0 0.0
  %628 = vmatpush1.msra.mxu0 0.0
  %629 = vmatprep.subr.mxu0 0.0
  %630 = vmatpush1.msra.mxu0 0.0
  %631 = vmatprep.mubr.f32.mxu0 0.0
  %v632 = vand.u32 %v20, 4294901760
  %v633 = vsub.f32 %v20, %v632
  %634 = vmatmul.mubr.f32.gmra.mrb[0].mxu0 %v633
  %v635 = vpop.f32.mrb[0].mxu0
  %v636 = vadd.f32 %v442, %v635
  %v637 = vpop.f32.mrb[0].mxu0
  %638 = vmatprep.mubr.f32.mxu0 0.0
  %v639 = vand.u32 %v21, 4294901760
  %v640 = vsub.f32 %v21, %v639
  %641 = vmatmul.mubr.f32.gmra.mrb[0].mxu0 %v640
  %v642 = vpop.f32.mrb[0].mxu0
  %v643 = vadd.f32 %v448, %v642
  %v644 = vpop.f32.mrb[0].mxu0
  %645 = vmatprep.mubr.f32.mxu0 0.0
  %v646 = vand.u32 %v22, 4294901760
  %v647 = vsub.f32 %v22, %v646
  %648 = vmatmul.mubr.f32.gmra.mrb[0].mxu0 %v647
  %v649 = vpop.f32.mrb[0].mxu0
  %v650 = vadd.f32 %v454, %v649
  %v651 = vpop.f32.mrb[0].mxu0
  %652 = vmatprep.mubr.f32.mxu0 0.0
  %v653 = vand.u32 %v23, 4294901760
  %v654 = vsub.f32 %v23, %v653
  %655 = vmatmul.mubr.f32.gmra.mrb[0].mxu0 %v654
  %v656 = vpop.f32.mrb[0].mxu0
  %v657 = vadd.f32 %v460, %v656
  %v658 = vpop.f32.mrb[0].mxu0
  %659 = vmatprep.mubr.f32.mxu0 0.0
  %v660 = vand.u32 %v24, 4294901760
  %v661 = vsub.f32 %v24, %v660
  %662 = vmatmul.mubr.f32.gmra.mrb[0].mxu0 %v661
  %v663 = vpop.f32.mrb[0].mxu0
  %v664 = vadd.f32 %v466, %v663
  %v665 = vpop.f32.mrb[0].mxu0
  %666 = vmatprep.mubr.f32.mxu0 0.0
  %v667 = vand.u32 %v25, 4294901760
  %v668 = vsub.f32 %v25, %v667
  %669 = vmatmul.mubr.f32.gmra.mrb[0].mxu0 %v668
  %v670 = vpop.f32.mrb[0].mxu0
  %v671 = vadd.f32 %v472, %v670
  %v672 = vpop.f32.mrb[0].mxu0
  %673 = vmatprep.mubr.f32.mxu0 0.0
  %v674 = vand.u32 %v26, 4294901760
  %v675 = vsub.f32 %v26, %v674
  %676 = vmatmul.mubr.f32.gmra.mrb[0].mxu0 %v675
  %v677 = vpop.f32.mrb[0].mxu0
  %v678 = vadd.f32 %v478, %v677
  %v679 = vpop.f32.mrb[0].mxu0
  %680 = vmatprep.mubr.f32.mxu0 0.0
  %v681 = vand.u32 %v27, 4294901760
  %v682 = vsub.f32 %v27, %v681
  %683 = vmatmul.mubr.f32.gmra.mrb[0].mxu0 %v682
  %v684 = vpop.f32.mrb[0].mxu0
  %v685 = vadd.f32 %v484, %v684
  %v686 = vpop.f32.mrb[0].mxu0
  %687 = vmatprep.mubr.f32.mxu0 0.0
  %v688 = vand.u32 %v28, 4294901760
  %v689 = vsub.f32 %v28, %v688
  %690 = vmatmul.mubr.f32.gmra.mrb[0].mxu0 %v689
  %v691 = vpop.f32.mrb[0].mxu0
  %v692 = vadd.f32 %v490, %v691
  %v693 = vpop.f32.mrb[0].mxu0
  %694 = vmatprep.mubr.f32.mxu0 0.0
  %v695 = vand.u32 %v29, 4294901760
  %v696 = vsub.f32 %v29, %v695
  %697 = vmatmul.mubr.f32.gmra.mrb[0].mxu0 %v696
  %v698 = vpop.f32.mrb[0].mxu0
  %v699 = vadd.f32 %v496, %v698
  %v700 = vpop.f32.mrb[0].mxu0
  %701 = vmatprep.mubr.f32.mxu0 0.0
  %v702 = vand.u32 %v30, 4294901760
  %v703 = vsub.f32 %v30, %v702
  %704 = vmatmul.mubr.f32.gmra.mrb[0].mxu0 %v703
  %v705 = vpop.f32.mrb[0].mxu0
  %v706 = vadd.f32 %v502, %v705
  %v707 = vpop.f32.mrb[0].mxu0
  %708 = vmatprep.mubr.f32.mxu0 0.0
  %v709 = vand.u32 %v31, 4294901760
  %v710 = vsub.f32 %v31, %v709
  %711 = vmatmul.mubr.f32.gmra.mrb[0].mxu0 %v710
  %v712 = vpop.f32.mrb[0].mxu0
  %v713 = vadd.f32 %v508, %v712
  %v714 = vpop.f32.mrb[0].mxu0
  %715 = vmatprep.mubr.f32.mxu0 0.0
  %v716 = vand.u32 %v32, 4294901760
  %v717 = vsub.f32 %v32, %v716
  %718 = vmatmul.mubr.f32.gmra.mrb[0].mxu0 %v717
  %v719 = vpop.f32.mrb[0].mxu0
  %v720 = vadd.f32 %v514, %v719
  %v721 = vpop.f32.mrb[0].mxu0
  %722 = vmatprep.mubr.f32.mxu0 0.0
  %v723 = vand.u32 %v33, 4294901760
  %v724 = vsub.f32 %v33, %v723
  %725 = vmatmul.mubr.f32.gmra.mrb[0].mxu0 %v724
  %v726 = vpop.f32.mrb[0].mxu0
  %v727 = vadd.f32 %v520, %v726
  %v728 = vpop.f32.mrb[0].mxu0
  %729 = vmatprep.mubr.f32.mxu0 0.0
  %v730 = vand.u32 %v34, 4294901760
  %v731 = vsub.f32 %v34, %v730
  %732 = vmatmul.mubr.f32.gmra.mrb[0].mxu0 %v731
  %v733 = vpop.f32.mrb[0].mxu0
  %v734 = vadd.f32 %v526, %v733
  %v735 = vpop.f32.mrb[0].mxu0
  %736 = vmatprep.mubr.f32.mxu0 0.0
  %v737 = vand.u32 %v35, 4294901760
  %v738 = vsub.f32 %v35, %v737
  %739 = vmatmul.mubr.f32.gmra.mrb[0].mxu0 %v738
  %v740 = vpop.f32.mrb[0].mxu0
  %v741 = vadd.f32 %v532, %v740
  %v742 = vpop.f32.mrb[0].mxu0
  %743 = vdwg.mxu0
  %744 = vmatprep.subr.mxu0 0.0
  %v745 = vand.u32 %v36, 4294901760
  %746 = vmatpush1.msra.mxu0 %v745
  %747 = vmatprep.subr.mxu0 0.0
  %v748 = vand.u32 %v37, 4294901760
  %749 = vmatpush1.msra.mxu0 %v748
  %750 = vmatprep.subr.mxu0 0.0
  %v751 = vand.u32 %v38, 4294901760
  %752 = vmatpush1.msra.mxu0 %v751
  %753 = vmatprep.subr.mxu0 0.0
  %v754 = vand.u32 %v39, 4294901760
  %755 = vmatpush1.msra.mxu0 %v754
  %756 = vmatprep.subr.mxu0 0.0
  %v757 = vand.u32 %v40, 4294901760
  %758 = vmatpush1.msra.mxu0 %v757
  %759 = vmatprep.subr.mxu0 0.0
  %v760 = vand.u32 %v41, 4294901760
  %761 = vmatpush1.msra.mxu0 %v760
  %762 = vmatprep.subr.mxu0 0.0
  %v763 = vand.u32 %v42, 4294901760
  %764 = vmatpush1.msra.mxu0 %v763
  %765 = vmatprep.subr.mxu0 0.0
  %v766 = vand.u32 %v43, 4294901760
  %767 = vmatpush1.msra.mxu0 %v766
  %768 = vmatprep.subr.mxu0 0.0
  %v769 = vand.u32 %v44, 4294901760
  %770 = vmatpush1.msra.mxu0 %v769
  %771 = vmatprep.subr.mxu0 0.0
  %v772 = vand.u32 %v45, 4294901760
  %773 = vmatpush1.msra.mxu0 %v772
  %774 = vmatprep.subr.mxu0 0.0
  %v775 = vand.u32 %v46, 4294901760
  %776 = vmatpush1.msra.mxu0 %v775
  %777 = vmatprep.subr.mxu0 0.0
  %v778 = vand.u32 %v47, 4294901760
  %779 = vmatpush1.msra.mxu0 %v778
  %780 = vmatprep.subr.mxu0 0.0
  %v781 = vand.u32 %v48, 4294901760
  %782 = vmatpush1.msra.mxu0 %v781
  %783 = vmatprep.subr.mxu0 0.0
  %v784 = vand.u32 %v49, 4294901760
  %785 = vmatpush1.msra.mxu0 %v784
  %786 = vmatprep.subr.mxu0 0.0
  %v787 = vand.u32 %v50, 4294901760
  %788 = vmatpush1.msra.mxu0 %v787
  %789 = vmatprep.subr.mxu0 0.0
  %v790 = vand.u32 %v51, 4294901760
  %791 = vmatpush1.msra.mxu0 %v790
  %792 = vmatprep.subr.mxu0 0.0
  %793 = vmatpush1.msra.mxu0 0.0
  %794 = vmatprep.subr.mxu0 0.0
  %795 = vmatpush1.msra.mxu0 0.0
  %796 = vmatprep.subr.mxu0 0.0
  %797 = vmatpush1.msra.mxu0 0.0
  %798 = vmatprep.subr.mxu0 0.0
  %799 = vmatpush1.msra.mxu0 0.0
  %800 = vmatprep.subr.mxu0 0.0
  %801 = vmatpush1.msra.mxu0 0.0
  %802 = vmatprep.subr.mxu0 0.0
  %803 = vmatpush1.msra.mxu0 0.0
  %804 = vmatprep.subr.mxu0 0.0
  %805 = vmatpush1.msra.mxu0 0.0
  %806 = vmatprep.subr.mxu0 0.0
  %807 = vmatpush1.msra.mxu0 0.0
  %808 = vmatprep.subr.mxu0 0.0
  %809 = vmatpush1.msra.mxu0 0.0
  %810 = vmatprep.subr.mxu0 0.0
  %811 = vmatpush1.msra.mxu0 0.0
  %812 = vmatprep.subr.mxu0 0.0
  %813 = vmatpush1.msra.mxu0 0.0
  %814 = vmatprep.subr.mxu0 0.0
  %815 = vmatpush1.msra.mxu0 0.0
  %816 = vmatprep.subr.mxu0 0.0
  %817 = vmatpush1.msra.mxu0 0.0
  %818 = vmatprep.subr.mxu0 0.0
  %819 = vmatpush1.msra.mxu0 0.0
  %820 = vmatprep.subr.mxu0 0.0
  %821 = vmatpush1.msra.mxu0 0.0
  %822 = vmatprep.subr.mxu0 0.0
  %823 = vmatpush1.msra.mxu0 0.0
  %824 = vmatprep.mubr.f32.mxu0 0.0
  %v825 = vand.u32 %v20, 4294901760
  %v826 = vsub.f32 %v20, %v825
  %v827 = vand.u32 %v826, 4294901760
  %828 = vmatmul.mubr.f32.gmra.mrb[0].mxu0 %v827
  %v829 = vpop.f32.mrb[0].mxu0
  %v830 = vadd.f32 %v636, %v829
  %v831 = vpop.f32.mrb[0].mxu0
  %832 = vmatprep.mubr.f32.mxu0 0.0
  %v833 = vand.u32 %v21, 4294901760
  %v834 = vsub.f32 %v21, %v833
  %v835 = vand.u32 %v834, 4294901760
  %836 = vmatmul.mubr.f32.gmra.mrb[0].mxu0 %v835
  %v837 = vpop.f32.mrb[0].mxu0
  %v838 = vadd.f32 %v643, %v837
  %v839 = vpop.f32.mrb[0].mxu0
  %840 = vmatprep.mubr.f32.mxu0 0.0
  %v841 = vand.u32 %v22, 4294901760
  %v842 = vsub.f32 %v22, %v841
  %v843 = vand.u32 %v842, 4294901760
  %844 = vmatmul.mubr.f32.gmra.mrb[0].mxu0 %v843
  %v845 = vpop.f32.mrb[0].mxu0
  %v846 = vadd.f32 %v650, %v845
  %v847 = vpop.f32.mrb[0].mxu0
  %848 = vmatprep.mubr.f32.mxu0 0.0
  %v849 = vand.u32 %v23, 4294901760
  %v850 = vsub.f32 %v23, %v849
  %v851 = vand.u32 %v850, 4294901760
  %852 = vmatmul.mubr.f32.gmra.mrb[0].mxu0 %v851
  %v853 = vpop.f32.mrb[0].mxu0
  %v854 = vadd.f32 %v657, %v853
  %v855 = vpop.f32.mrb[0].mxu0
  %856 = vmatprep.mubr.f32.mxu0 0.0
  %v857 = vand.u32 %v24, 4294901760
  %v858 = vsub.f32 %v24, %v857
  %v859 = vand.u32 %v858, 4294901760
  %860 = vmatmul.mubr.f32.gmra.mrb[0].mxu0 %v859
  %v861 = vpop.f32.mrb[0].mxu0
  %v862 = vadd.f32 %v664, %v861
  %v863 = vpop.f32.mrb[0].mxu0
  %864 = vmatprep.mubr.f32.mxu0 0.0
  %v865 = vand.u32 %v25, 4294901760
  %v866 = vsub.f32 %v25, %v865
  %v867 = vand.u32 %v866, 4294901760
  %868 = vmatmul.mubr.f32.gmra.mrb[0].mxu0 %v867
  %v869 = vpop.f32.mrb[0].mxu0
  %v870 = vadd.f32 %v671, %v869
  %v871 = vpop.f32.mrb[0].mxu0
  %872 = vmatprep.mubr.f32.mxu0 0.0
  %v873 = vand.u32 %v26, 4294901760
  %v874 = vsub.f32 %v26, %v873
  %v875 = vand.u32 %v874, 4294901760
  %876 = vmatmul.mubr.f32.gmra.mrb[0].mxu0 %v875
  %v877 = vpop.f32.mrb[0].mxu0
  %v878 = vadd.f32 %v678, %v877
  %v879 = vpop.f32.mrb[0].mxu0
  %880 = vmatprep.mubr.f32.mxu0 0.0
  %v881 = vand.u32 %v27, 4294901760
  %v882 = vsub.f32 %v27, %v881
  %v883 = vand.u32 %v882, 4294901760
  %884 = vmatmul.mubr.f32.gmra.mrb[0].mxu0 %v883
  %v885 = vpop.f32.mrb[0].mxu0
  %v886 = vadd.f32 %v685, %v885
  %v887 = vpop.f32.mrb[0].mxu0
  %888 = vmatprep.mubr.f32.mxu0 0.0
  %v889 = vand.u32 %v28, 4294901760
  %v890 = vsub.f32 %v28, %v889
  %v891 = vand.u32 %v890, 4294901760
  %892 = vmatmul.mubr.f32.gmra.mrb[0].mxu0 %v891
  %v893 = vpop.f32.mrb[0].mxu0
  %v894 = vadd.f32 %v692, %v893
  %v895 = vpop.f32.mrb[0].mxu0
  %896 = vmatprep.mubr.f32.mxu0 0.0
  %v897 = vand.u32 %v29, 4294901760
  %v898 = vsub.f32 %v29, %v897
  %v899 = vand.u32 %v898, 4294901760
  %900 = vmatmul.mubr.f32.gmra.mrb[0].mxu0 %v899
  %v901 = vpop.f32.mrb[0].mxu0
  %v902 = vadd.f32 %v699, %v901
  %v903 = vpop.f32.mrb[0].mxu0
  %904 = vmatprep.mubr.f32.mxu0 0.0
  %v905 = vand.u32 %v30, 4294901760
  %v906 = vsub.f32 %v30, %v905
  %v907 = vand.u32 %v906, 4294901760
  %908 = vmatmul.mubr.f32.gmra.mrb[0].mxu0 %v907
  %v909 = vpop.f32.mrb[0].mxu0
  %v910 = vadd.f32 %v706, %v909
  %v911 = vpop.f32.mrb[0].mxu0
  %912 = vmatprep.mubr.f32.mxu0 0.0
  %v913 = vand.u32 %v31, 4294901760
  %v914 = vsub.f32 %v31, %v913
  %v915 = vand.u32 %v914, 4294901760
  %916 = vmatmul.mubr.f32.gmra.mrb[0].mxu0 %v915
  %v917 = vpop.f32.mrb[0].mxu0
  %v918 = vadd.f32 %v713, %v917
  %v919 = vpop.f32.mrb[0].mxu0
  %920 = vmatprep.mubr.f32.mxu0 0.0
  %v921 = vand.u32 %v32, 4294901760
  %v922 = vsub.f32 %v32, %v921
  %v923 = vand.u32 %v922, 4294901760
  %924 = vmatmul.mubr.f32.gmra.mrb[0].mxu0 %v923
  %v925 = vpop.f32.mrb[0].mxu0
  %v926 = vadd.f32 %v720, %v925
  %v927 = vpop.f32.mrb[0].mxu0
  %928 = vmatprep.mubr.f32.mxu0 0.0
  %v929 = vand.u32 %v33, 4294901760
  %v930 = vsub.f32 %v33, %v929
  %v931 = vand.u32 %v930, 4294901760
  %932 = vmatmul.mubr.f32.gmra.mrb[0].mxu0 %v931
  %v933 = vpop.f32.mrb[0].mxu0
  %v934 = vadd.f32 %v727, %v933
  %v935 = vpop.f32.mrb[0].mxu0
  %936 = vmatprep.mubr.f32.mxu0 0.0
  %v937 = vand.u32 %v34, 4294901760
  %v938 = vsub.f32 %v34, %v937
  %v939 = vand.u32 %v938, 4294901760
  %940 = vmatmul.mubr.f32.gmra.mrb[0].mxu0 %v939
  %v941 = vpop.f32.mrb[0].mxu0
  %v942 = vadd.f32 %v734, %v941
  %v943 = vpop.f32.mrb[0].mxu0
  %944 = vmatprep.mubr.f32.mxu0 0.0
  %v945 = vand.u32 %v35, 4294901760
  %v946 = vsub.f32 %v35, %v945
  %v947 = vand.u32 %v946, 4294901760
  %948 = vmatmul.mubr.f32.gmra.mrb[0].mxu0 %v947
  %v949 = vpop.f32.mrb[0].mxu0
  %v950 = vadd.f32 %v741, %v949
  %v951 = vpop.f32.mrb[0].mxu0
  %952 = vdwg.mxu0
  %953 = vmatprep.subr.mxu0 0.0
  %v954 = vand.u32 %v36, 4294901760
  %v955 = vsub.f32 %v36, %v954
  %v956 = vand.u32 %v955, 4294901760
  %957 = vmatpush1.msra.mxu0 %v956
  %958 = vmatprep.subr.mxu0 0.0
  %v959 = vand.u32 %v37, 4294901760
  %v960 = vsub.f32 %v37, %v959
  %v961 = vand.u32 %v960, 4294901760
  %962 = vmatpush1.msra.mxu0 %v961
  %963 = vmatprep.subr.mxu0 0.0
  %v964 = vand.u32 %v38, 4294901760
  %v965 = vsub.f32 %v38, %v964
  %v966 = vand.u32 %v965, 4294901760
  %967 = vmatpush1.msra.mxu0 %v966
  %968 = vmatprep.subr.mxu0 0.0
  %v969 = vand.u32 %v39, 4294901760
  %v970 = vsub.f32 %v39, %v969
  %v971 = vand.u32 %v970, 4294901760
  %972 = vmatpush1.msra.mxu0 %v971
  %973 = vmatprep.subr.mxu0 0.0
  %v974 = vand.u32 %v40, 4294901760
  %v975 = vsub.f32 %v40, %v974
  %v976 = vand.u32 %v975, 4294901760
  %977 = vmatpush1.msra.mxu0 %v976
  %978 = vmatprep.subr.mxu0 0.0
  %v979 = vand.u32 %v41, 4294901760
  %v980 = vsub.f32 %v41, %v979
  %v981 = vand.u32 %v980, 4294901760
  %982 = vmatpush1.msra.mxu0 %v981
  %983 = vmatprep.subr.mxu0 0.0
  %v984 = vand.u32 %v42, 4294901760
  %v985 = vsub.f32 %v42, %v984
  %v986 = vand.u32 %v985, 4294901760
  %987 = vmatpush1.msra.mxu0 %v986
  %988 = vmatprep.subr.mxu0 0.0
  %v989 = vand.u32 %v43, 4294901760
  %v990 = vsub.f32 %v43, %v989
  %v991 = vand.u32 %v990, 4294901760
  %992 = vmatpush1.msra.mxu0 %v991
  %993 = vmatprep.subr.mxu0 0.0
  %v994 = vand.u32 %v44, 4294901760
  %v995 = vsub.f32 %v44, %v994
  %v996 = vand.u32 %v995, 4294901760
  %997 = vmatpush1.msra.mxu0 %v996
  %998 = vmatprep.subr.mxu0 0.0
  %v999 = vand.u32 %v45, 4294901760
  %v1000 = vsub.f32 %v45, %v999
  %v1001 = vand.u32 %v1000, 4294901760
  %1002 = vmatpush1.msra.mxu0 %v1001
  %1003 = vmatprep.subr.mxu0 0.0
  %v1004 = vand.u32 %v46, 4294901760
  %v1005 = vsub.f32 %v46, %v1004
  %v1006 = vand.u32 %v1005, 4294901760
  %1007 = vmatpush1.msra.mxu0 %v1006
  %1008 = vmatprep.subr.mxu0 0.0
  %v1009 = vand.u32 %v47, 4294901760
  %v1010 = vsub.f32 %v47, %v1009
  %v1011 = vand.u32 %v1010, 4294901760
  %1012 = vmatpush1.msra.mxu0 %v1011
  %1013 = vmatprep.subr.mxu0 0.0
  %v1014 = vand.u32 %v48, 4294901760
  %v1015 = vsub.f32 %v48, %v1014
  %v1016 = vand.u32 %v1015, 4294901760
  %1017 = vmatpush1.msra.mxu0 %v1016
  %1018 = vmatprep.subr.mxu0 0.0
  %v1019 = vand.u32 %v49, 4294901760
  %v1020 = vsub.f32 %v49, %v1019
  %v1021 = vand.u32 %v1020, 4294901760
  %1022 = vmatpush1.msra.mxu0 %v1021
  %1023 = vmatprep.subr.mxu0 0.0
  %v1024 = vand.u32 %v50, 4294901760
  %v1025 = vsub.f32 %v50, %v1024
  %v1026 = vand.u32 %v1025, 4294901760
  %1027 = vmatpush1.msra.mxu0 %v1026
  %1028 = vmatprep.subr.mxu0 0.0
  %v1029 = vand.u32 %v51, 4294901760
  %v1030 = vsub.f32 %v51, %v1029
  %v1031 = vand.u32 %v1030, 4294901760
  %1032 = vmatpush1.msra.mxu0 %v1031
  %1033 = vmatprep.subr.mxu0 0.0
  %1034 = vmatpush1.msra.mxu0 0.0
  %1035 = vmatprep.subr.mxu0 0.0
  %1036 = vmatpush1.msra.mxu0 0.0
  %1037 = vmatprep.subr.mxu0 0.0
  %1038 = vmatpush1.msra.mxu0 0.0
  %1039 = vmatprep.subr.mxu0 0.0
  %1040 = vmatpush1.msra.mxu0 0.0
  %1041 = vmatprep.subr.mxu0 0.0
  %1042 = vmatpush1.msra.mxu0 0.0
  %1043 = vmatprep.subr.mxu0 0.0
  %1044 = vmatpush1.msra.mxu0 0.0
  %1045 = vmatprep.subr.mxu0 0.0
  %1046 = vmatpush1.msra.mxu0 0.0
  %1047 = vmatprep.subr.mxu0 0.0
  %1048 = vmatpush1.msra.mxu0 0.0
  %1049 = vmatprep.subr.mxu0 0.0
  %1050 = vmatpush1.msra.mxu0 0.0
  %1051 = vmatprep.subr.mxu0 0.0
  %1052 = vmatpush1.msra.mxu0 0.0
  %1053 = vmatprep.subr.mxu0 0.0
  %1054 = vmatpush1.msra.mxu0 0.0
  %1055 = vmatprep.subr.mxu0 0.0
  %1056 = vmatpush1.msra.mxu0 0.0
  %1057 = vmatprep.subr.mxu0 0.0
  %1058 = vmatpush1.msra.mxu0 0.0
  %1059 = vmatprep.subr.mxu0 0.0
  %1060 = vmatpush1.msra.mxu0 0.0
  %1061 = vmatprep.subr.mxu0 0.0
  %1062 = vmatpush1.msra.mxu0 0.0
  %1063 = vmatprep.subr.mxu0 0.0
  %1064 = vmatpush1.msra.mxu0 0.0
  %1065 = vmatprep.mubr.f32.mxu0 0.0
  %v1066 = vand.u32 %v20, 4294901760
  %1067 = vmatmul.mubr.f32.gmra.mrb[0].mxu0 %v1066
  %v1068 = vpop.f32.mrb[0].mxu0
  %v1069 = vadd.f32 %v830, %v1068
  %v1070 = vpop.f32.mrb[0].mxu0
  %1071 = vmatprep.mubr.f32.mxu0 0.0
  %v1072 = vand.u32 %v21, 4294901760
  %1073 = vmatmul.mubr.f32.gmra.mrb[0].mxu0 %v1072
  %v1074 = vpop.f32.mrb[0].mxu0
  %v1075 = vadd.f32 %v838, %v1074
  %v1076 = vpop.f32.mrb[0].mxu0
  %1077 = vmatprep.mubr.f32.mxu0 0.0
  %v1078 = vand.u32 %v22, 4294901760
  %1079 = vmatmul.mubr.f32.gmra.mrb[0].mxu0 %v1078
  %v1080 = vpop.f32.mrb[0].mxu0
  %v1081 = vadd.f32 %v846, %v1080
  %v1082 = vpop.f32.mrb[0].mxu0
  %1083 = vmatprep.mubr.f32.mxu0 0.0
  %v1084 = vand.u32 %v23, 4294901760
  %1085 = vmatmul.mubr.f32.gmra.mrb[0].mxu0 %v1084
  %v1086 = vpop.f32.mrb[0].mxu0
  %v1087 = vadd.f32 %v854, %v1086
  %v1088 = vpop.f32.mrb[0].mxu0
  %1089 = vmatprep.mubr.f32.mxu0 0.0
  %v1090 = vand.u32 %v24, 4294901760
  %1091 = vmatmul.mubr.f32.gmra.mrb[0].mxu0 %v1090
  %v1092 = vpop.f32.mrb[0].mxu0
  %v1093 = vadd.f32 %v862, %v1092
  %v1094 = vpop.f32.mrb[0].mxu0
  %1095 = vmatprep.mubr.f32.mxu0 0.0
  %v1096 = vand.u32 %v25, 4294901760
  %1097 = vmatmul.mubr.f32.gmra.mrb[0].mxu0 %v1096
  %v1098 = vpop.f32.mrb[0].mxu0
  %v1099 = vadd.f32 %v870, %v1098
  %v1100 = vpop.f32.mrb[0].mxu0
  %1101 = vmatprep.mubr.f32.mxu0 0.0
  %v1102 = vand.u32 %v26, 4294901760
  %1103 = vmatmul.mubr.f32.gmra.mrb[0].mxu0 %v1102
  %v1104 = vpop.f32.mrb[0].mxu0
  %v1105 = vadd.f32 %v878, %v1104
  %v1106 = vpop.f32.mrb[0].mxu0
  %1107 = vmatprep.mubr.f32.mxu0 0.0
  %v1108 = vand.u32 %v27, 4294901760
  %1109 = vmatmul.mubr.f32.gmra.mrb[0].mxu0 %v1108
  %v1110 = vpop.f32.mrb[0].mxu0
  %v1111 = vadd.f32 %v886, %v1110
  %v1112 = vpop.f32.mrb[0].mxu0
  %1113 = vmatprep.mubr.f32.mxu0 0.0
  %v1114 = vand.u32 %v28, 4294901760
  %1115 = vmatmul.mubr.f32.gmra.mrb[0].mxu0 %v1114
  %v1116 = vpop.f32.mrb[0].mxu0
  %v1117 = vadd.f32 %v894, %v1116
  %v1118 = vpop.f32.mrb[0].mxu0
  %1119 = vmatprep.mubr.f32.mxu0 0.0
  %v1120 = vand.u32 %v29, 4294901760
  %1121 = vmatmul.mubr.f32.gmra.mrb[0].mxu0 %v1120
  %v1122 = vpop.f32.mrb[0].mxu0
  %v1123 = vadd.f32 %v902, %v1122
  %v1124 = vpop.f32.mrb[0].mxu0
  %1125 = vmatprep.mubr.f32.mxu0 0.0
  %v1126 = vand.u32 %v30, 4294901760
  %1127 = vmatmul.mubr.f32.gmra.mrb[0].mxu0 %v1126
  %v1128 = vpop.f32.mrb[0].mxu0
  %v1129 = vadd.f32 %v910, %v1128
  %v1130 = vpop.f32.mrb[0].mxu0
  %1131 = vmatprep.mubr.f32.mxu0 0.0
  %v1132 = vand.u32 %v31, 4294901760
  %1133 = vmatmul.mubr.f32.gmra.mrb[0].mxu0 %v1132
  %v1134 = vpop.f32.mrb[0].mxu0
  %v1135 = vadd.f32 %v918, %v1134
  %v1136 = vpop.f32.mrb[0].mxu0
  %1137 = vmatprep.mubr.f32.mxu0 0.0
  %v1138 = vand.u32 %v32, 4294901760
  %1139 = vmatmul.mubr.f32.gmra.mrb[0].mxu0 %v1138
  %v1140 = vpop.f32.mrb[0].mxu0
  %v1141 = vadd.f32 %v926, %v1140
  %v1142 = vpop.f32.mrb[0].mxu0
  %1143 = vmatprep.mubr.f32.mxu0 0.0
  %v1144 = vand.u32 %v33, 4294901760
  %1145 = vmatmul.mubr.f32.gmra.mrb[0].mxu0 %v1144
  %v1146 = vpop.f32.mrb[0].mxu0
  %v1147 = vadd.f32 %v934, %v1146
  %v1148 = vpop.f32.mrb[0].mxu0
  %1149 = vmatprep.mubr.f32.mxu0 0.0
  %v1150 = vand.u32 %v34, 4294901760
  %1151 = vmatmul.mubr.f32.gmra.mrb[0].mxu0 %v1150
  %v1152 = vpop.f32.mrb[0].mxu0
  %v1153 = vadd.f32 %v942, %v1152
  %v1154 = vpop.f32.mrb[0].mxu0
  %1155 = vmatprep.mubr.f32.mxu0 0.0
  %v1156 = vand.u32 %v35, 4294901760
  %1157 = vmatmul.mubr.f32.gmra.mrb[0].mxu0 %v1156
  %v1158 = vpop.f32.mrb[0].mxu0
  %v1159 = vadd.f32 %v950, %v1158
  %v1160 = vpop.f32.mrb[0].mxu0
  %1161 = vdwg.mxu0
  %1162 = vmatprep.subr.mxu0 0.0
  %v1163 = vand.u32 %v36, 4294901760
  %1164 = vmatpush1.msra.mxu0 %v1163
  %1165 = vmatprep.subr.mxu0 0.0
  %v1166 = vand.u32 %v37, 4294901760
  %1167 = vmatpush1.msra.mxu0 %v1166
  %1168 = vmatprep.subr.mxu0 0.0
  %v1169 = vand.u32 %v38, 4294901760
  %1170 = vmatpush1.msra.mxu0 %v1169
  %1171 = vmatprep.subr.mxu0 0.0
  %v1172 = vand.u32 %v39, 4294901760
  %1173 = vmatpush1.msra.mxu0 %v1172
  %1174 = vmatprep.subr.mxu0 0.0
  %v1175 = vand.u32 %v40, 4294901760
  %1176 = vmatpush1.msra.mxu0 %v1175
  %1177 = vmatprep.subr.mxu0 0.0
  %v1178 = vand.u32 %v41, 4294901760
  %1179 = vmatpush1.msra.mxu0 %v1178
  %1180 = vmatprep.subr.mxu0 0.0
  %v1181 = vand.u32 %v42, 4294901760
  %1182 = vmatpush1.msra.mxu0 %v1181
  %1183 = vmatprep.subr.mxu0 0.0
  %v1184 = vand.u32 %v43, 4294901760
  %1185 = vmatpush1.msra.mxu0 %v1184
  %1186 = vmatprep.subr.mxu0 0.0
  %v1187 = vand.u32 %v44, 4294901760
  %1188 = vmatpush1.msra.mxu0 %v1187
  %1189 = vmatprep.subr.mxu0 0.0
  %v1190 = vand.u32 %v45, 4294901760
  %1191 = vmatpush1.msra.mxu0 %v1190
  %1192 = vmatprep.subr.mxu0 0.0
  %v1193 = vand.u32 %v46, 4294901760
  %1194 = vmatpush1.msra.mxu0 %v1193
  %1195 = vmatprep.subr.mxu0 0.0
  %v1196 = vand.u32 %v47, 4294901760
  %1197 = vmatpush1.msra.mxu0 %v1196
  %1198 = vmatprep.subr.mxu0 0.0
  %v1199 = vand.u32 %v48, 4294901760
  %1200 = vmatpush1.msra.mxu0 %v1199
  %1201 = vmatprep.subr.mxu0 0.0
  %v1202 = vand.u32 %v49, 4294901760
  %1203 = vmatpush1.msra.mxu0 %v1202
  %1204 = vmatprep.subr.mxu0 0.0
  %v1205 = vand.u32 %v50, 4294901760
  %1206 = vmatpush1.msra.mxu0 %v1205
  %1207 = vmatprep.subr.mxu0 0.0
  %v1208 = vand.u32 %v51, 4294901760
  %1209 = vmatpush1.msra.mxu0 %v1208
  %1210 = vmatprep.subr.mxu0 0.0
  %1211 = vmatpush1.msra.mxu0 0.0
  %1212 = vmatprep.subr.mxu0 0.0
  %1213 = vmatpush1.msra.mxu0 0.0
  %1214 = vmatprep.subr.mxu0 0.0
  %1215 = vmatpush1.msra.mxu0 0.0
  %1216 = vmatprep.subr.mxu0 0.0
  %1217 = vmatpush1.msra.mxu0 0.0
  %1218 = vmatprep.subr.mxu0 0.0
  %1219 = vmatpush1.msra.mxu0 0.0
  %1220 = vmatprep.subr.mxu0 0.0
  %1221 = vmatpush1.msra.mxu0 0.0
  %1222 = vmatprep.subr.mxu0 0.0
  %1223 = vmatpush1.msra.mxu0 0.0
  %1224 = vmatprep.subr.mxu0 0.0
  %1225 = vmatpush1.msra.mxu0 0.0
  %1226 = vmatprep.subr.mxu0 0.0
  %1227 = vmatpush1.msra.mxu0 0.0
  %1228 = vmatprep.subr.mxu0 0.0
  %1229 = vmatpush1.msra.mxu0 0.0
  %1230 = vmatprep.subr.mxu0 0.0
  %1231 = vmatpush1.msra.mxu0 0.0
  %1232 = vmatprep.subr.mxu0 0.0
  %1233 = vmatpush1.msra.mxu0 0.0
  %1234 = vmatprep.subr.mxu0 0.0
  %1235 = vmatpush1.msra.mxu0 0.0
  %1236 = vmatprep.subr.mxu0 0.0
  %1237 = vmatpush1.msra.mxu0 0.0
  %1238 = vmatprep.subr.mxu0 0.0
  %1239 = vmatpush1.msra.mxu0 0.0
  %1240 = vmatprep.subr.mxu0 0.0
  %1241 = vmatpush1.msra.mxu0 0.0
  %1242 = vmatprep.mubr.f32.mxu0 0.0
  %v1243 = vand.u32 %v20, 4294901760
  %1244 = vmatmul.mubr.f32.gmra.mrb[0].mxu0 %v1243
  %v1245 = vpop.f32.mrb[0].mxu0
  %v1246 = vadd.f32 %v1069, %v1245
  %v1247 = vpop.f32.mrb[0].mxu0
  %1248 = vmatprep.mubr.f32.mxu0 0.0
  %v1249 = vand.u32 %v21, 4294901760
  %1250 = vmatmul.mubr.f32.gmra.mrb[0].mxu0 %v1249
  %v1251 = vpop.f32.mrb[0].mxu0
  %v1252 = vadd.f32 %v1075, %v1251
  %v1253 = vpop.f32.mrb[0].mxu0
  %1254 = vmatprep.mubr.f32.mxu0 0.0
  %v1255 = vand.u32 %v22, 4294901760
  %1256 = vmatmul.mubr.f32.gmra.mrb[0].mxu0 %v1255
  %v1257 = vpop.f32.mrb[0].mxu0
  %v1258 = vadd.f32 %v1081, %v1257
  %v1259 = vpop.f32.mrb[0].mxu0
  %1260 = vmatprep.mubr.f32.mxu0 0.0
  %v1261 = vand.u32 %v23, 4294901760
  %1262 = vmatmul.mubr.f32.gmra.mrb[0].mxu0 %v1261
  %v1263 = vpop.f32.mrb[0].mxu0
  %v1264 = vadd.f32 %v1087, %v1263
  %v1265 = vpop.f32.mrb[0].mxu0
  %1266 = vmatprep.mubr.f32.mxu0 0.0
  %v1267 = vand.u32 %v24, 4294901760
  %1268 = vmatmul.mubr.f32.gmra.mrb[0].mxu0 %v1267
  %v1269 = vpop.f32.mrb[0].mxu0
  %v1270 = vadd.f32 %v1093, %v1269
  %v1271 = vpop.f32.mrb[0].mxu0
  %1272 = vmatprep.mubr.f32.mxu0 0.0
  %v1273 = vand.u32 %v25, 4294901760
  %1274 = vmatmul.mubr.f32.gmra.mrb[0].mxu0 %v1273
  %v1275 = vpop.f32.mrb[0].mxu0
  %v1276 = vadd.f32 %v1099, %v1275
  %v1277 = vpop.f32.mrb[0].mxu0
  %1278 = vmatprep.mubr.f32.mxu0 0.0
  %v1279 = vand.u32 %v26, 4294901760
  %1280 = vmatmul.mubr.f32.gmra.mrb[0].mxu0 %v1279
  %v1281 = vpop.f32.mrb[0].mxu0
  %v1282 = vadd.f32 %v1105, %v1281
  %v1283 = vpop.f32.mrb[0].mxu0
  %1284 = vmatprep.mubr.f32.mxu0 0.0
  %v1285 = vand.u32 %v27, 4294901760
  %1286 = vmatmul.mubr.f32.gmra.mrb[0].mxu0 %v1285
  %v1287 = vpop.f32.mrb[0].mxu0
  %v1288 = vadd.f32 %v1111, %v1287
  %v1289 = vpop.f32.mrb[0].mxu0
  %1290 = vmatprep.mubr.f32.mxu0 0.0
  %v1291 = vand.u32 %v28, 4294901760
  %1292 = vmatmul.mubr.f32.gmra.mrb[0].mxu0 %v1291
  %v1293 = vpop.f32.mrb[0].mxu0
  %v1294 = vadd.f32 %v1117, %v1293
  %v1295 = vpop.f32.mrb[0].mxu0
  %1296 = vmatprep.mubr.f32.mxu0 0.0
  %v1297 = vand.u32 %v29, 4294901760
  %1298 = vmatmul.mubr.f32.gmra.mrb[0].mxu0 %v1297
  %v1299 = vpop.f32.mrb[0].mxu0
  %v1300 = vadd.f32 %v1123, %v1299
  %v1301 = vpop.f32.mrb[0].mxu0
  %1302 = vmatprep.mubr.f32.mxu0 0.0
  %v1303 = vand.u32 %v30, 4294901760
  %1304 = vmatmul.mubr.f32.gmra.mrb[0].mxu0 %v1303
  %v1305 = vpop.f32.mrb[0].mxu0
  %v1306 = vadd.f32 %v1129, %v1305
  %v1307 = vpop.f32.mrb[0].mxu0
  %1308 = vmatprep.mubr.f32.mxu0 0.0
  %v1309 = vand.u32 %v31, 4294901760
  %1310 = vmatmul.mubr.f32.gmra.mrb[0].mxu0 %v1309
  %v1311 = vpop.f32.mrb[0].mxu0
  %v1312 = vadd.f32 %v1135, %v1311
  %v1313 = vpop.f32.mrb[0].mxu0
  %1314 = vmatprep.mubr.f32.mxu0 0.0
  %v1315 = vand.u32 %v32, 4294901760
  %1316 = vmatmul.mubr.f32.gmra.mrb[0].mxu0 %v1315
  %v1317 = vpop.f32.mrb[0].mxu0
  %v1318 = vadd.f32 %v1141, %v1317
  %v1319 = vpop.f32.mrb[0].mxu0
  %1320 = vmatprep.mubr.f32.mxu0 0.0
  %v1321 = vand.u32 %v33, 4294901760
  %1322 = vmatmul.mubr.f32.gmra.mrb[0].mxu0 %v1321
  %v1323 = vpop.f32.mrb[0].mxu0
  %v1324 = vadd.f32 %v1147, %v1323
  %v1325 = vpop.f32.mrb[0].mxu0
  %1326 = vmatprep.mubr.f32.mxu0 0.0
  %v1327 = vand.u32 %v34, 4294901760
  %1328 = vmatmul.mubr.f32.gmra.mrb[0].mxu0 %v1327
  %v1329 = vpop.f32.mrb[0].mxu0
  %v1330 = vadd.f32 %v1153, %v1329
  %v1331 = vpop.f32.mrb[0].mxu0
  %1332 = vmatprep.mubr.f32.mxu0 0.0
  %v1333 = vand.u32 %v35, 4294901760
  %1334 = vmatmul.mubr.f32.gmra.mrb[0].mxu0 %v1333
  %v1335 = vpop.f32.mrb[0].mxu0
  %v1336 = vadd.f32 %v1159, %v1335
  %v1337 = vpop.f32.mrb[0].mxu0
  %1338 = vdwg.mxu0
  %vm1339 = vcmask 31744
  %v1341 = vsel %vm1339, %v1246, 0
  %v1344 = vsel %vm1339, %v1252, 0
  %v1347 = vsel %vm1339, %v1258, 0
  %v1350 = vsel %vm1339, %v1264, 0
  %v1353 = vsel %vm1339, %v1270, 0
  %v1356 = vsel %vm1339, %v1276, 0
  %v1359 = vsel %vm1339, %v1282, 0
  %v1362 = vsel %vm1339, %v1288, 0
  %v1365 = vsel %vm1339, %v1294, 0
  %v1368 = vsel %vm1339, %v1300, 0
  %v1371 = vsel %vm1339, %v1306, 0
  %v1374 = vsel %vm1339, %v1312, 0
  %v1377 = vsel %vm1339, %v1318, 0
  %v1380 = vsel %vm1339, %v1324, 0
  %v1383 = vsel %vm1339, %v1330, 0
  %v1386 = vsel %vm1339, %v1336, 0
  %vm1388 = vcmask 1043456
  %v1390 = vsel %vm1388, %v52, 0
  %1392 = vmatprep.subr.mxu0 0.0
  %v1393 = vand.u32 %v1390, 4294901760
  %1394 = vmatpush1.msra.mxu0 %v1393
  %1395 = vmatprep.subr.mxu0 0.0
  %1396 = vmatpush1.msra.mxu0 0.0
  %1397 = vmatprep.subr.mxu0 0.0
  %1398 = vmatpush1.msra.mxu0 0.0
  %1399 = vmatprep.subr.mxu0 0.0
  %1400 = vmatpush1.msra.mxu0 0.0
  %1401 = vmatprep.subr.mxu0 0.0
  %1402 = vmatpush1.msra.mxu0 0.0
  %1403 = vmatprep.subr.mxu0 0.0
  %1404 = vmatpush1.msra.mxu0 0.0
  %1405 = vmatprep.subr.mxu0 0.0
  %1406 = vmatpush1.msra.mxu0 0.0
  %1407 = vmatprep.subr.mxu0 0.0
  %1408 = vmatpush1.msra.mxu0 0.0
  %1409 = vmatprep.subr.mxu0 0.0
  %1410 = vmatpush1.msra.mxu0 0.0
  %1411 = vmatprep.subr.mxu0 0.0
  %1412 = vmatpush1.msra.mxu0 0.0
  %1413 = vmatprep.subr.mxu0 0.0
  %1414 = vmatpush1.msra.mxu0 0.0
  %1415 = vmatprep.subr.mxu0 0.0
  %1416 = vmatpush1.msra.mxu0 0.0
  %1417 = vmatprep.subr.mxu0 0.0
  %1418 = vmatpush1.msra.mxu0 0.0
  %1419 = vmatprep.subr.mxu0 0.0
  %1420 = vmatpush1.msra.mxu0 0.0
  %1421 = vmatprep.subr.mxu0 0.0
  %1422 = vmatpush1.msra.mxu0 0.0
  %1423 = vmatprep.subr.mxu0 0.0
  %1424 = vmatpush1.msra.mxu0 0.0
  %1425 = vmatprep.subr.mxu0 0.0
  %1426 = vmatpush1.msra.mxu0 0.0
  %1427 = vmatprep.subr.mxu0 0.0
  %1428 = vmatpush1.msra.mxu0 0.0
  %1429 = vmatprep.subr.mxu0 0.0
  %1430 = vmatpush1.msra.mxu0 0.0
  %1431 = vmatprep.subr.mxu0 0.0
  %1432 = vmatpush1.msra.mxu0 0.0
  %1433 = vmatprep.subr.mxu0 0.0
  %1434 = vmatpush1.msra.mxu0 0.0
  %1435 = vmatprep.subr.mxu0 0.0
  %1436 = vmatpush1.msra.mxu0 0.0
  %1437 = vmatprep.subr.mxu0 0.0
  %1438 = vmatpush1.msra.mxu0 0.0
  %1439 = vmatprep.subr.mxu0 0.0
  %1440 = vmatpush1.msra.mxu0 0.0
  %1441 = vmatprep.subr.mxu0 0.0
  %1442 = vmatpush1.msra.mxu0 0.0
  %1443 = vmatprep.subr.mxu0 0.0
  %1444 = vmatpush1.msra.mxu0 0.0
  %1445 = vmatprep.subr.mxu0 0.0
  %1446 = vmatpush1.msra.mxu0 0.0
  %1447 = vmatprep.subr.mxu0 0.0
  %1448 = vmatpush1.msra.mxu0 0.0
  %1449 = vmatprep.subr.mxu0 0.0
  %1450 = vmatpush1.msra.mxu0 0.0
  %1451 = vmatprep.subr.mxu0 0.0
  %1452 = vmatpush1.msra.mxu0 0.0
  %1453 = vmatprep.subr.mxu0 0.0
  %1454 = vmatpush1.msra.mxu0 0.0
  %1455 = vmatprep.subr.mxu0 0.0
  %1456 = vmatpush1.msra.mxu0 0.0
  %1457 = vmatprep.mubr.f32.mxu0 0.0
  %v1458 = vand.u32 %v1341, 4294901760
  %v1459 = vsub.f32 %v1341, %v1458
  %v1460 = vand.u32 %v1459, 4294901760
  %v1461 = vsub.f32 %v1459, %v1460
  %v1462 = vand.u32 %v1461, 4294901760
  %1463 = vmatmul.mubr.f32.gmra.mrb[0].mxu0 %v1462
  %v1464 = vpop.f32.mrb[0].mxu0
  %v1465 = vadd.f32 0.0, %v1464
  %v1466 = vpop.f32.mrb[0].mxu0
  %1467 = vmatprep.mubr.f32.mxu0 0.0
  %v1468 = vand.u32 %v1344, 4294901760
  %v1469 = vsub.f32 %v1344, %v1468
  %v1470 = vand.u32 %v1469, 4294901760
  %v1471 = vsub.f32 %v1469, %v1470
  %v1472 = vand.u32 %v1471, 4294901760
  %1473 = vmatmul.mubr.f32.gmra.mrb[0].mxu0 %v1472
  %v1474 = vpop.f32.mrb[0].mxu0
  %v1475 = vadd.f32 0.0, %v1474
  %v1476 = vpop.f32.mrb[0].mxu0
  %1477 = vmatprep.mubr.f32.mxu0 0.0
  %v1478 = vand.u32 %v1347, 4294901760
  %v1479 = vsub.f32 %v1347, %v1478
  %v1480 = vand.u32 %v1479, 4294901760
  %v1481 = vsub.f32 %v1479, %v1480
  %v1482 = vand.u32 %v1481, 4294901760
  %1483 = vmatmul.mubr.f32.gmra.mrb[0].mxu0 %v1482
  %v1484 = vpop.f32.mrb[0].mxu0
  %v1485 = vadd.f32 0.0, %v1484
  %v1486 = vpop.f32.mrb[0].mxu0
  %1487 = vmatprep.mubr.f32.mxu0 0.0
  %v1488 = vand.u32 %v1350, 4294901760
  %v1489 = vsub.f32 %v1350, %v1488
  %v1490 = vand.u32 %v1489, 4294901760
  %v1491 = vsub.f32 %v1489, %v1490
  %v1492 = vand.u32 %v1491, 4294901760
  %1493 = vmatmul.mubr.f32.gmra.mrb[0].mxu0 %v1492
  %v1494 = vpop.f32.mrb[0].mxu0
  %v1495 = vadd.f32 0.0, %v1494
  %v1496 = vpop.f32.mrb[0].mxu0
  %1497 = vmatprep.mubr.f32.mxu0 0.0
  %v1498 = vand.u32 %v1353, 4294901760
  %v1499 = vsub.f32 %v1353, %v1498
  %v1500 = vand.u32 %v1499, 4294901760
  %v1501 = vsub.f32 %v1499, %v1500
  %v1502 = vand.u32 %v1501, 4294901760
  %1503 = vmatmul.mubr.f32.gmra.mrb[0].mxu0 %v1502
  %v1504 = vpop.f32.mrb[0].mxu0
  %v1505 = vadd.f32 0.0, %v1504
  %v1506 = vpop.f32.mrb[0].mxu0
  %1507 = vmatprep.mubr.f32.mxu0 0.0
  %v1508 = vand.u32 %v1356, 4294901760
  %v1509 = vsub.f32 %v1356, %v1508
  %v1510 = vand.u32 %v1509, 4294901760
  %v1511 = vsub.f32 %v1509, %v1510
  %v1512 = vand.u32 %v1511, 4294901760
  %1513 = vmatmul.mubr.f32.gmra.mrb[0].mxu0 %v1512
  %v1514 = vpop.f32.mrb[0].mxu0
  %v1515 = vadd.f32 0.0, %v1514
  %v1516 = vpop.f32.mrb[0].mxu0
  %1517 = vmatprep.mubr.f32.mxu0 0.0
  %v1518 = vand.u32 %v1359, 4294901760
  %v1519 = vsub.f32 %v1359, %v1518
  %v1520 = vand.u32 %v1519, 4294901760
  %v1521 = vsub.f32 %v1519, %v1520
  %v1522 = vand.u32 %v1521, 4294901760
  %1523 = vmatmul.mubr.f32.gmra.mrb[0].mxu0 %v1522
  %v1524 = vpop.f32.mrb[0].mxu0
  %v1525 = vadd.f32 0.0, %v1524
  %v1526 = vpop.f32.mrb[0].mxu0
  %1527 = vmatprep.mubr.f32.mxu0 0.0
  %v1528 = vand.u32 %v1362, 4294901760
  %v1529 = vsub.f32 %v1362, %v1528
  %v1530 = vand.u32 %v1529, 4294901760
  %v1531 = vsub.f32 %v1529, %v1530
  %v1532 = vand.u32 %v1531, 4294901760
  %1533 = vmatmul.mubr.f32.gmra.mrb[0].mxu0 %v1532
  %v1534 = vpop.f32.mrb[0].mxu0
  %v1535 = vadd.f32 0.0, %v1534
  %v1536 = vpop.f32.mrb[0].mxu0
  %1537 = vmatprep.mubr.f32.mxu0 0.0
  %v1538 = vand.u32 %v1365, 4294901760
  %v1539 = vsub.f32 %v1365, %v1538
  %v1540 = vand.u32 %v1539, 4294901760
  %v1541 = vsub.f32 %v1539, %v1540
  %v1542 = vand.u32 %v1541, 4294901760
  %1543 = vmatmul.mubr.f32.gmra.mrb[0].mxu0 %v1542
  %v1544 = vpop.f32.mrb[0].mxu0
  %v1545 = vadd.f32 0.0, %v1544
  %v1546 = vpop.f32.mrb[0].mxu0
  %1547 = vmatprep.mubr.f32.mxu0 0.0
  %v1548 = vand.u32 %v1368, 4294901760
  %v1549 = vsub.f32 %v1368, %v1548
  %v1550 = vand.u32 %v1549, 4294901760
  %v1551 = vsub.f32 %v1549, %v1550
  %v1552 = vand.u32 %v1551, 4294901760
  %1553 = vmatmul.mubr.f32.gmra.mrb[0].mxu0 %v1552
  %v1554 = vpop.f32.mrb[0].mxu0
  %v1555 = vadd.f32 0.0, %v1554
  %v1556 = vpop.f32.mrb[0].mxu0
  %1557 = vmatprep.mubr.f32.mxu0 0.0
  %v1558 = vand.u32 %v1371, 4294901760
  %v1559 = vsub.f32 %v1371, %v1558
  %v1560 = vand.u32 %v1559, 4294901760
  %v1561 = vsub.f32 %v1559, %v1560
  %v1562 = vand.u32 %v1561, 4294901760
  %1563 = vmatmul.mubr.f32.gmra.mrb[0].mxu0 %v1562
  %v1564 = vpop.f32.mrb[0].mxu0
  %v1565 = vadd.f32 0.0, %v1564
  %v1566 = vpop.f32.mrb[0].mxu0
  %1567 = vmatprep.mubr.f32.mxu0 0.0
  %v1568 = vand.u32 %v1374, 4294901760
  %v1569 = vsub.f32 %v1374, %v1568
  %v1570 = vand.u32 %v1569, 4294901760
  %v1571 = vsub.f32 %v1569, %v1570
  %v1572 = vand.u32 %v1571, 4294901760
  %1573 = vmatmul.mubr.f32.gmra.mrb[0].mxu0 %v1572
  %v1574 = vpop.f32.mrb[0].mxu0
  %v1575 = vadd.f32 0.0, %v1574
  %v1576 = vpop.f32.mrb[0].mxu0
  %1577 = vmatprep.mubr.f32.mxu0 0.0
  %v1578 = vand.u32 %v1377, 4294901760
  %v1579 = vsub.f32 %v1377, %v1578
  %v1580 = vand.u32 %v1579, 4294901760
  %v1581 = vsub.f32 %v1579, %v1580
  %v1582 = vand.u32 %v1581, 4294901760
  %1583 = vmatmul.mubr.f32.gmra.mrb[0].mxu0 %v1582
  %v1584 = vpop.f32.mrb[0].mxu0
  %v1585 = vadd.f32 0.0, %v1584
  %v1586 = vpop.f32.mrb[0].mxu0
  %1587 = vmatprep.mubr.f32.mxu0 0.0
  %v1588 = vand.u32 %v1380, 4294901760
  %v1589 = vsub.f32 %v1380, %v1588
  %v1590 = vand.u32 %v1589, 4294901760
  %v1591 = vsub.f32 %v1589, %v1590
  %v1592 = vand.u32 %v1591, 4294901760
  %1593 = vmatmul.mubr.f32.gmra.mrb[0].mxu0 %v1592
  %v1594 = vpop.f32.mrb[0].mxu0
  %v1595 = vadd.f32 0.0, %v1594
  %v1596 = vpop.f32.mrb[0].mxu0
  %1597 = vmatprep.mubr.f32.mxu0 0.0
  %v1598 = vand.u32 %v1383, 4294901760
  %v1599 = vsub.f32 %v1383, %v1598
  %v1600 = vand.u32 %v1599, 4294901760
  %v1601 = vsub.f32 %v1599, %v1600
  %v1602 = vand.u32 %v1601, 4294901760
  %1603 = vmatmul.mubr.f32.gmra.mrb[0].mxu0 %v1602
  %v1604 = vpop.f32.mrb[0].mxu0
  %v1605 = vadd.f32 0.0, %v1604
  %v1606 = vpop.f32.mrb[0].mxu0
  %1607 = vmatprep.mubr.f32.mxu0 0.0
  %v1608 = vand.u32 %v1386, 4294901760
  %v1609 = vsub.f32 %v1386, %v1608
  %v1610 = vand.u32 %v1609, 4294901760
  %v1611 = vsub.f32 %v1609, %v1610
  %v1612 = vand.u32 %v1611, 4294901760
  %1613 = vmatmul.mubr.f32.gmra.mrb[0].mxu0 %v1612
  %v1614 = vpop.f32.mrb[0].mxu0
  %v1615 = vadd.f32 0.0, %v1614
  %v1616 = vpop.f32.mrb[0].mxu0
  %1617 = vdwg.mxu0
  %1618 = vmatprep.subr.mxu0 0.0
  %v1619 = vand.u32 %v1390, 4294901760
  %v1620 = vsub.f32 %v1390, %v1619
  %v1621 = vand.u32 %v1620, 4294901760
  %v1622 = vsub.f32 %v1620, %v1621
  %v1623 = vand.u32 %v1622, 4294901760
  %1624 = vmatpush1.msra.mxu0 %v1623
  %1625 = vmatprep.subr.mxu0 0.0
  %1626 = vmatpush1.msra.mxu0 0.0
  %1627 = vmatprep.subr.mxu0 0.0
  %1628 = vmatpush1.msra.mxu0 0.0
  %1629 = vmatprep.subr.mxu0 0.0
  %1630 = vmatpush1.msra.mxu0 0.0
  %1631 = vmatprep.subr.mxu0 0.0
  %1632 = vmatpush1.msra.mxu0 0.0
  %1633 = vmatprep.subr.mxu0 0.0
  %1634 = vmatpush1.msra.mxu0 0.0
  %1635 = vmatprep.subr.mxu0 0.0
  %1636 = vmatpush1.msra.mxu0 0.0
  %1637 = vmatprep.subr.mxu0 0.0
  %1638 = vmatpush1.msra.mxu0 0.0
  %1639 = vmatprep.subr.mxu0 0.0
  %1640 = vmatpush1.msra.mxu0 0.0
  %1641 = vmatprep.subr.mxu0 0.0
  %1642 = vmatpush1.msra.mxu0 0.0
  %1643 = vmatprep.subr.mxu0 0.0
  %1644 = vmatpush1.msra.mxu0 0.0
  %1645 = vmatprep.subr.mxu0 0.0
  %1646 = vmatpush1.msra.mxu0 0.0
  %1647 = vmatprep.subr.mxu0 0.0
  %1648 = vmatpush1.msra.mxu0 0.0
  %1649 = vmatprep.subr.mxu0 0.0
  %1650 = vmatpush1.msra.mxu0 0.0
  %1651 = vmatprep.subr.mxu0 0.0
  %1652 = vmatpush1.msra.mxu0 0.0
  %1653 = vmatprep.subr.mxu0 0.0
  %1654 = vmatpush1.msra.mxu0 0.0
  %1655 = vmatprep.subr.mxu0 0.0
  %1656 = vmatpush1.msra.mxu0 0.0
  %1657 = vmatprep.subr.mxu0 0.0
  %1658 = vmatpush1.msra.mxu0 0.0
  %1659 = vmatprep.subr.mxu0 0.0
  %1660 = vmatpush1.msra.mxu0 0.0
  %1661 = vmatprep.subr.mxu0 0.0
  %1662 = vmatpush1.msra.mxu0 0.0
  %1663 = vmatprep.subr.mxu0 0.0
  %1664 = vmatpush1.msra.mxu0 0.0
  %1665 = vmatprep.subr.mxu0 0.0
  %1666 = vmatpush1.msra.mxu0 0.0
  %1667 = vmatprep.subr.mxu0 0.0
  %1668 = vmatpush1.msra.mxu0 0.0
  %1669 = vmatprep.subr.mxu0 0.0
  %1670 = vmatpush1.msra.mxu0 0.0
  %1671 = vmatprep.subr.mxu0 0.0
  %1672 = vmatpush1.msra.mxu0 0.0
  %1673 = vmatprep.subr.mxu0 0.0
  %1674 = vmatpush1.msra.mxu0 0.0
  %1675 = vmatprep.subr.mxu0 0.0
  %1676 = vmatpush1.msra.mxu0 0.0
  %1677 = vmatprep.subr.mxu0 0.0
  %1678 = vmatpush1.msra.mxu0 0.0
  %1679 = vmatprep.subr.mxu0 0.0
  %1680 = vmatpush1.msra.mxu0 0.0
  %1681 = vmatprep.subr.mxu0 0.0
  %1682 = vmatpush1.msra.mxu0 0.0
  %1683 = vmatprep.subr.mxu0 0.0
  %1684 = vmatpush1.msra.mxu0 0.0
  %1685 = vmatprep.subr.mxu0 0.0
  %1686 = vmatpush1.msra.mxu0 0.0
  %1687 = vmatprep.mubr.f32.mxu0 0.0
  %v1688 = vand.u32 %v1341, 4294901760
  %1689 = vmatmul.mubr.f32.gmra.mrb[0].mxu0 %v1688
  %v1690 = vpop.f32.mrb[0].mxu0
  %v1691 = vadd.f32 %v1465, %v1690
  %v1692 = vpop.f32.mrb[0].mxu0
  %1693 = vmatprep.mubr.f32.mxu0 0.0
  %v1694 = vand.u32 %v1344, 4294901760
  %1695 = vmatmul.mubr.f32.gmra.mrb[0].mxu0 %v1694
  %v1696 = vpop.f32.mrb[0].mxu0
  %v1697 = vadd.f32 %v1475, %v1696
  %v1698 = vpop.f32.mrb[0].mxu0
  %1699 = vmatprep.mubr.f32.mxu0 0.0
  %v1700 = vand.u32 %v1347, 4294901760
  %1701 = vmatmul.mubr.f32.gmra.mrb[0].mxu0 %v1700
  %v1702 = vpop.f32.mrb[0].mxu0
  %v1703 = vadd.f32 %v1485, %v1702
  %v1704 = vpop.f32.mrb[0].mxu0
  %1705 = vmatprep.mubr.f32.mxu0 0.0
  %v1706 = vand.u32 %v1350, 4294901760
  %1707 = vmatmul.mubr.f32.gmra.mrb[0].mxu0 %v1706
  %v1708 = vpop.f32.mrb[0].mxu0
  %v1709 = vadd.f32 %v1495, %v1708
  %v1710 = vpop.f32.mrb[0].mxu0
  %1711 = vmatprep.mubr.f32.mxu0 0.0
  %v1712 = vand.u32 %v1353, 4294901760
  %1713 = vmatmul.mubr.f32.gmra.mrb[0].mxu0 %v1712
  %v1714 = vpop.f32.mrb[0].mxu0
  %v1715 = vadd.f32 %v1505, %v1714
  %v1716 = vpop.f32.mrb[0].mxu0
  %1717 = vmatprep.mubr.f32.mxu0 0.0
  %v1718 = vand.u32 %v1356, 4294901760
  %1719 = vmatmul.mubr.f32.gmra.mrb[0].mxu0 %v1718
  %v1720 = vpop.f32.mrb[0].mxu0
  %v1721 = vadd.f32 %v1515, %v1720
  %v1722 = vpop.f32.mrb[0].mxu0
  %1723 = vmatprep.mubr.f32.mxu0 0.0
  %v1724 = vand.u32 %v1359, 4294901760
  %1725 = vmatmul.mubr.f32.gmra.mrb[0].mxu0 %v1724
  %v1726 = vpop.f32.mrb[0].mxu0
  %v1727 = vadd.f32 %v1525, %v1726
  %v1728 = vpop.f32.mrb[0].mxu0
  %1729 = vmatprep.mubr.f32.mxu0 0.0
  %v1730 = vand.u32 %v1362, 4294901760
  %1731 = vmatmul.mubr.f32.gmra.mrb[0].mxu0 %v1730
  %v1732 = vpop.f32.mrb[0].mxu0
  %v1733 = vadd.f32 %v1535, %v1732
  %v1734 = vpop.f32.mrb[0].mxu0
  %1735 = vmatprep.mubr.f32.mxu0 0.0
  %v1736 = vand.u32 %v1365, 4294901760
  %1737 = vmatmul.mubr.f32.gmra.mrb[0].mxu0 %v1736
  %v1738 = vpop.f32.mrb[0].mxu0
  %v1739 = vadd.f32 %v1545, %v1738
  %v1740 = vpop.f32.mrb[0].mxu0
  %1741 = vmatprep.mubr.f32.mxu0 0.0
  %v1742 = vand.u32 %v1368, 4294901760
  %1743 = vmatmul.mubr.f32.gmra.mrb[0].mxu0 %v1742
  %v1744 = vpop.f32.mrb[0].mxu0
  %v1745 = vadd.f32 %v1555, %v1744
  %v1746 = vpop.f32.mrb[0].mxu0
  %1747 = vmatprep.mubr.f32.mxu0 0.0
  %v1748 = vand.u32 %v1371, 4294901760
  %1749 = vmatmul.mubr.f32.gmra.mrb[0].mxu0 %v1748
  %v1750 = vpop.f32.mrb[0].mxu0
  %v1751 = vadd.f32 %v1565, %v1750
  %v1752 = vpop.f32.mrb[0].mxu0
  %1753 = vmatprep.mubr.f32.mxu0 0.0
  %v1754 = vand.u32 %v1374, 4294901760
  %1755 = vmatmul.mubr.f32.gmra.mrb[0].mxu0 %v1754
  %v1756 = vpop.f32.mrb[0].mxu0
  %v1757 = vadd.f32 %v1575, %v1756
  %v1758 = vpop.f32.mrb[0].mxu0
  %1759 = vmatprep.mubr.f32.mxu0 0.0
  %v1760 = vand.u32 %v1377, 4294901760
  %1761 = vmatmul.mubr.f32.gmra.mrb[0].mxu0 %v1760
  %v1762 = vpop.f32.mrb[0].mxu0
  %v1763 = vadd.f32 %v1585, %v1762
  %v1764 = vpop.f32.mrb[0].mxu0
  %1765 = vmatprep.mubr.f32.mxu0 0.0
  %v1766 = vand.u32 %v1380, 4294901760
  %1767 = vmatmul.mubr.f32.gmra.mrb[0].mxu0 %v1766
  %v1768 = vpop.f32.mrb[0].mxu0
  %v1769 = vadd.f32 %v1595, %v1768
  %v1770 = vpop.f32.mrb[0].mxu0
  %1771 = vmatprep.mubr.f32.mxu0 0.0
  %v1772 = vand.u32 %v1383, 4294901760
  %1773 = vmatmul.mubr.f32.gmra.mrb[0].mxu0 %v1772
  %v1774 = vpop.f32.mrb[0].mxu0
  %v1775 = vadd.f32 %v1605, %v1774
  %v1776 = vpop.f32.mrb[0].mxu0
  %1777 = vmatprep.mubr.f32.mxu0 0.0
  %v1778 = vand.u32 %v1386, 4294901760
  %1779 = vmatmul.mubr.f32.gmra.mrb[0].mxu0 %v1778
  %v1780 = vpop.f32.mrb[0].mxu0
  %v1781 = vadd.f32 %v1615, %v1780
  %v1782 = vpop.f32.mrb[0].mxu0
  %1783 = vdwg.mxu0
  %1784 = vmatprep.subr.mxu0 0.0
  %v1785 = vand.u32 %v1390, 4294901760
  %v1786 = vsub.f32 %v1390, %v1785
  %1787 = vmatpush1.msra.mxu0 %v1786
  %1788 = vmatprep.subr.mxu0 0.0
  %1789 = vmatpush1.msra.mxu0 0.0
  %1790 = vmatprep.subr.mxu0 0.0
  %1791 = vmatpush1.msra.mxu0 0.0
  %1792 = vmatprep.subr.mxu0 0.0
  %1793 = vmatpush1.msra.mxu0 0.0
  %1794 = vmatprep.subr.mxu0 0.0
  %1795 = vmatpush1.msra.mxu0 0.0
  %1796 = vmatprep.subr.mxu0 0.0
  %1797 = vmatpush1.msra.mxu0 0.0
  %1798 = vmatprep.subr.mxu0 0.0
  %1799 = vmatpush1.msra.mxu0 0.0
  %1800 = vmatprep.subr.mxu0 0.0
  %1801 = vmatpush1.msra.mxu0 0.0
  %1802 = vmatprep.subr.mxu0 0.0
  %1803 = vmatpush1.msra.mxu0 0.0
  %1804 = vmatprep.subr.mxu0 0.0
  %1805 = vmatpush1.msra.mxu0 0.0
  %1806 = vmatprep.subr.mxu0 0.0
  %1807 = vmatpush1.msra.mxu0 0.0
  %1808 = vmatprep.subr.mxu0 0.0
  %1809 = vmatpush1.msra.mxu0 0.0
  %1810 = vmatprep.subr.mxu0 0.0
  %1811 = vmatpush1.msra.mxu0 0.0
  %1812 = vmatprep.subr.mxu0 0.0
  %1813 = vmatpush1.msra.mxu0 0.0
  %1814 = vmatprep.subr.mxu0 0.0
  %1815 = vmatpush1.msra.mxu0 0.0
  %1816 = vmatprep.subr.mxu0 0.0
  %1817 = vmatpush1.msra.mxu0 0.0
  %1818 = vmatprep.subr.mxu0 0.0
  %1819 = vmatpush1.msra.mxu0 0.0
  %1820 = vmatprep.subr.mxu0 0.0
  %1821 = vmatpush1.msra.mxu0 0.0
  %1822 = vmatprep.subr.mxu0 0.0
  %1823 = vmatpush1.msra.mxu0 0.0
  %1824 = vmatprep.subr.mxu0 0.0
  %1825 = vmatpush1.msra.mxu0 0.0
  %1826 = vmatprep.subr.mxu0 0.0
  %1827 = vmatpush1.msra.mxu0 0.0
  %1828 = vmatprep.subr.mxu0 0.0
  %1829 = vmatpush1.msra.mxu0 0.0
  %1830 = vmatprep.subr.mxu0 0.0
  %1831 = vmatpush1.msra.mxu0 0.0
  %1832 = vmatprep.subr.mxu0 0.0
  %1833 = vmatpush1.msra.mxu0 0.0
  %1834 = vmatprep.subr.mxu0 0.0
  %1835 = vmatpush1.msra.mxu0 0.0
  %1836 = vmatprep.subr.mxu0 0.0
  %1837 = vmatpush1.msra.mxu0 0.0
  %1838 = vmatprep.subr.mxu0 0.0
  %1839 = vmatpush1.msra.mxu0 0.0
  %1840 = vmatprep.subr.mxu0 0.0
  %1841 = vmatpush1.msra.mxu0 0.0
  %1842 = vmatprep.subr.mxu0 0.0
  %1843 = vmatpush1.msra.mxu0 0.0
  %1844 = vmatprep.subr.mxu0 0.0
  %1845 = vmatpush1.msra.mxu0 0.0
  %1846 = vmatprep.subr.mxu0 0.0
  %1847 = vmatpush1.msra.mxu0 0.0
  %1848 = vmatprep.subr.mxu0 0.0
  %1849 = vmatpush1.msra.mxu0 0.0
  %1850 = vmatprep.mubr.f32.mxu0 0.0
  %v1851 = vand.u32 %v1341, 4294901760
  %v1852 = vsub.f32 %v1341, %v1851
  %1853 = vmatmul.mubr.f32.gmra.mrb[0].mxu0 %v1852
  %v1854 = vpop.f32.mrb[0].mxu0
  %v1855 = vadd.f32 %v1691, %v1854
  %v1856 = vpop.f32.mrb[0].mxu0
  %1857 = vmatprep.mubr.f32.mxu0 0.0
  %v1858 = vand.u32 %v1344, 4294901760
  %v1859 = vsub.f32 %v1344, %v1858
  %1860 = vmatmul.mubr.f32.gmra.mrb[0].mxu0 %v1859
  %v1861 = vpop.f32.mrb[0].mxu0
  %v1862 = vadd.f32 %v1697, %v1861
  %v1863 = vpop.f32.mrb[0].mxu0
  %1864 = vmatprep.mubr.f32.mxu0 0.0
  %v1865 = vand.u32 %v1347, 4294901760
  %v1866 = vsub.f32 %v1347, %v1865
  %1867 = vmatmul.mubr.f32.gmra.mrb[0].mxu0 %v1866
  %v1868 = vpop.f32.mrb[0].mxu0
  %v1869 = vadd.f32 %v1703, %v1868
  %v1870 = vpop.f32.mrb[0].mxu0
  %1871 = vmatprep.mubr.f32.mxu0 0.0
  %v1872 = vand.u32 %v1350, 4294901760
  %v1873 = vsub.f32 %v1350, %v1872
  %1874 = vmatmul.mubr.f32.gmra.mrb[0].mxu0 %v1873
  %v1875 = vpop.f32.mrb[0].mxu0
  %v1876 = vadd.f32 %v1709, %v1875
  %v1877 = vpop.f32.mrb[0].mxu0
  %1878 = vmatprep.mubr.f32.mxu0 0.0
  %v1879 = vand.u32 %v1353, 4294901760
  %v1880 = vsub.f32 %v1353, %v1879
  %1881 = vmatmul.mubr.f32.gmra.mrb[0].mxu0 %v1880
  %v1882 = vpop.f32.mrb[0].mxu0
  %v1883 = vadd.f32 %v1715, %v1882
  %v1884 = vpop.f32.mrb[0].mxu0
  %1885 = vmatprep.mubr.f32.mxu0 0.0
  %v1886 = vand.u32 %v1356, 4294901760
  %v1887 = vsub.f32 %v1356, %v1886
  %1888 = vmatmul.mubr.f32.gmra.mrb[0].mxu0 %v1887
  %v1889 = vpop.f32.mrb[0].mxu0
  %v1890 = vadd.f32 %v1721, %v1889
  %v1891 = vpop.f32.mrb[0].mxu0
  %1892 = vmatprep.mubr.f32.mxu0 0.0
  %v1893 = vand.u32 %v1359, 4294901760
  %v1894 = vsub.f32 %v1359, %v1893
  %1895 = vmatmul.mubr.f32.gmra.mrb[0].mxu0 %v1894
  %v1896 = vpop.f32.mrb[0].mxu0
  %v1897 = vadd.f32 %v1727, %v1896
  %v1898 = vpop.f32.mrb[0].mxu0
  %1899 = vmatprep.mubr.f32.mxu0 0.0
  %v1900 = vand.u32 %v1362, 4294901760
  %v1901 = vsub.f32 %v1362, %v1900
  %1902 = vmatmul.mubr.f32.gmra.mrb[0].mxu0 %v1901
  %v1903 = vpop.f32.mrb[0].mxu0
  %v1904 = vadd.f32 %v1733, %v1903
  %v1905 = vpop.f32.mrb[0].mxu0
  %1906 = vmatprep.mubr.f32.mxu0 0.0
  %v1907 = vand.u32 %v1365, 4294901760
  %v1908 = vsub.f32 %v1365, %v1907
  %1909 = vmatmul.mubr.f32.gmra.mrb[0].mxu0 %v1908
  %v1910 = vpop.f32.mrb[0].mxu0
  %v1911 = vadd.f32 %v1739, %v1910
  %v1912 = vpop.f32.mrb[0].mxu0
  %1913 = vmatprep.mubr.f32.mxu0 0.0
  %v1914 = vand.u32 %v1368, 4294901760
  %v1915 = vsub.f32 %v1368, %v1914
  %1916 = vmatmul.mubr.f32.gmra.mrb[0].mxu0 %v1915
  %v1917 = vpop.f32.mrb[0].mxu0
  %v1918 = vadd.f32 %v1745, %v1917
  %v1919 = vpop.f32.mrb[0].mxu0
  %1920 = vmatprep.mubr.f32.mxu0 0.0
  %v1921 = vand.u32 %v1371, 4294901760
  %v1922 = vsub.f32 %v1371, %v1921
  %1923 = vmatmul.mubr.f32.gmra.mrb[0].mxu0 %v1922
  %v1924 = vpop.f32.mrb[0].mxu0
  %v1925 = vadd.f32 %v1751, %v1924
  %v1926 = vpop.f32.mrb[0].mxu0
  %1927 = vmatprep.mubr.f32.mxu0 0.0
  %v1928 = vand.u32 %v1374, 4294901760
  %v1929 = vsub.f32 %v1374, %v1928
  %1930 = vmatmul.mubr.f32.gmra.mrb[0].mxu0 %v1929
  %v1931 = vpop.f32.mrb[0].mxu0
  %v1932 = vadd.f32 %v1757, %v1931
  %v1933 = vpop.f32.mrb[0].mxu0
  %1934 = vmatprep.mubr.f32.mxu0 0.0
  %v1935 = vand.u32 %v1377, 4294901760
  %v1936 = vsub.f32 %v1377, %v1935
  %1937 = vmatmul.mubr.f32.gmra.mrb[0].mxu0 %v1936
  %v1938 = vpop.f32.mrb[0].mxu0
  %v1939 = vadd.f32 %v1763, %v1938
  %v1940 = vpop.f32.mrb[0].mxu0
  %1941 = vmatprep.mubr.f32.mxu0 0.0
  %v1942 = vand.u32 %v1380, 4294901760
  %v1943 = vsub.f32 %v1380, %v1942
  %1944 = vmatmul.mubr.f32.gmra.mrb[0].mxu0 %v1943
  %v1945 = vpop.f32.mrb[0].mxu0
  %v1946 = vadd.f32 %v1769, %v1945
  %v1947 = vpop.f32.mrb[0].mxu0
  %1948 = vmatprep.mubr.f32.mxu0 0.0
  %v1949 = vand.u32 %v1383, 4294901760
  %v1950 = vsub.f32 %v1383, %v1949
  %1951 = vmatmul.mubr.f32.gmra.mrb[0].mxu0 %v1950
  %v1952 = vpop.f32.mrb[0].mxu0
  %v1953 = vadd.f32 %v1775, %v1952
  %v1954 = vpop.f32.mrb[0].mxu0
  %1955 = vmatprep.mubr.f32.mxu0 0.0
  %v1956 = vand.u32 %v1386, 4294901760
  %v1957 = vsub.f32 %v1386, %v1956
  %1958 = vmatmul.mubr.f32.gmra.mrb[0].mxu0 %v1957
  %v1959 = vpop.f32.mrb[0].mxu0
  %v1960 = vadd.f32 %v1781, %v1959
  %v1961 = vpop.f32.mrb[0].mxu0
  %1962 = vdwg.mxu0
  %1963 = vmatprep.subr.mxu0 0.0
  %v1964 = vand.u32 %v1390, 4294901760
  %1965 = vmatpush1.msra.mxu0 %v1964
  %1966 = vmatprep.subr.mxu0 0.0
  %1967 = vmatpush1.msra.mxu0 0.0
  %1968 = vmatprep.subr.mxu0 0.0
  %1969 = vmatpush1.msra.mxu0 0.0
  %1970 = vmatprep.subr.mxu0 0.0
  %1971 = vmatpush1.msra.mxu0 0.0
  %1972 = vmatprep.subr.mxu0 0.0
  %1973 = vmatpush1.msra.mxu0 0.0
  %1974 = vmatprep.subr.mxu0 0.0
  %1975 = vmatpush1.msra.mxu0 0.0
  %1976 = vmatprep.subr.mxu0 0.0
  %1977 = vmatpush1.msra.mxu0 0.0
  %1978 = vmatprep.subr.mxu0 0.0
  %1979 = vmatpush1.msra.mxu0 0.0
  %1980 = vmatprep.subr.mxu0 0.0
  %1981 = vmatpush1.msra.mxu0 0.0
  %1982 = vmatprep.subr.mxu0 0.0
  %1983 = vmatpush1.msra.mxu0 0.0
  %1984 = vmatprep.subr.mxu0 0.0
  %1985 = vmatpush1.msra.mxu0 0.0
  %1986 = vmatprep.subr.mxu0 0.0
  %1987 = vmatpush1.msra.mxu0 0.0
  %1988 = vmatprep.subr.mxu0 0.0
  %1989 = vmatpush1.msra.mxu0 0.0
  %1990 = vmatprep.subr.mxu0 0.0
  %1991 = vmatpush1.msra.mxu0 0.0
  %1992 = vmatprep.subr.mxu0 0.0
  %1993 = vmatpush1.msra.mxu0 0.0
  %1994 = vmatprep.subr.mxu0 0.0
  %1995 = vmatpush1.msra.mxu0 0.0
  %1996 = vmatprep.subr.mxu0 0.0
  %1997 = vmatpush1.msra.mxu0 0.0
  %1998 = vmatprep.subr.mxu0 0.0
  %1999 = vmatpush1.msra.mxu0 0.0
  %2000 = vmatprep.subr.mxu0 0.0
  %2001 = vmatpush1.msra.mxu0 0.0
  %2002 = vmatprep.subr.mxu0 0.0
  %2003 = vmatpush1.msra.mxu0 0.0
  %2004 = vmatprep.subr.mxu0 0.0
  %2005 = vmatpush1.msra.mxu0 0.0
  %2006 = vmatprep.subr.mxu0 0.0
  %2007 = vmatpush1.msra.mxu0 0.0
  %2008 = vmatprep.subr.mxu0 0.0
  %2009 = vmatpush1.msra.mxu0 0.0
  %2010 = vmatprep.subr.mxu0 0.0
  %2011 = vmatpush1.msra.mxu0 0.0
  %2012 = vmatprep.subr.mxu0 0.0
  %2013 = vmatpush1.msra.mxu0 0.0
  %2014 = vmatprep.subr.mxu0 0.0
  %2015 = vmatpush1.msra.mxu0 0.0
  %2016 = vmatprep.subr.mxu0 0.0
  %2017 = vmatpush1.msra.mxu0 0.0
  %2018 = vmatprep.subr.mxu0 0.0
  %2019 = vmatpush1.msra.mxu0 0.0
  %2020 = vmatprep.subr.mxu0 0.0
  %2021 = vmatpush1.msra.mxu0 0.0
  %2022 = vmatprep.subr.mxu0 0.0
  %2023 = vmatpush1.msra.mxu0 0.0
  %2024 = vmatprep.subr.mxu0 0.0
  %2025 = vmatpush1.msra.mxu0 0.0
  %2026 = vmatprep.subr.mxu0 0.0
  %2027 = vmatpush1.msra.mxu0 0.0
  %2028 = vmatprep.mubr.f32.mxu0 0.0
  %v2029 = vand.u32 %v1341, 4294901760
  %v2030 = vsub.f32 %v1341, %v2029
  %v2031 = vand.u32 %v2030, 4294901760
  %2032 = vmatmul.mubr.f32.gmra.mrb[0].mxu0 %v2031
  %v2033 = vpop.f32.mrb[0].mxu0
  %v2034 = vadd.f32 %v1855, %v2033
  %v2035 = vpop.f32.mrb[0].mxu0
  %2036 = vmatprep.mubr.f32.mxu0 0.0
  %v2037 = vand.u32 %v1344, 4294901760
  %v2038 = vsub.f32 %v1344, %v2037
  %v2039 = vand.u32 %v2038, 4294901760
  %2040 = vmatmul.mubr.f32.gmra.mrb[0].mxu0 %v2039
  %v2041 = vpop.f32.mrb[0].mxu0
  %v2042 = vadd.f32 %v1862, %v2041
  %v2043 = vpop.f32.mrb[0].mxu0
  %2044 = vmatprep.mubr.f32.mxu0 0.0
  %v2045 = vand.u32 %v1347, 4294901760
  %v2046 = vsub.f32 %v1347, %v2045
  %v2047 = vand.u32 %v2046, 4294901760
  %2048 = vmatmul.mubr.f32.gmra.mrb[0].mxu0 %v2047
  %v2049 = vpop.f32.mrb[0].mxu0
  %v2050 = vadd.f32 %v1869, %v2049
  %v2051 = vpop.f32.mrb[0].mxu0
  %2052 = vmatprep.mubr.f32.mxu0 0.0
  %v2053 = vand.u32 %v1350, 4294901760
  %v2054 = vsub.f32 %v1350, %v2053
  %v2055 = vand.u32 %v2054, 4294901760
  %2056 = vmatmul.mubr.f32.gmra.mrb[0].mxu0 %v2055
  %v2057 = vpop.f32.mrb[0].mxu0
  %v2058 = vadd.f32 %v1876, %v2057
  %v2059 = vpop.f32.mrb[0].mxu0
  %2060 = vmatprep.mubr.f32.mxu0 0.0
  %v2061 = vand.u32 %v1353, 4294901760
  %v2062 = vsub.f32 %v1353, %v2061
  %v2063 = vand.u32 %v2062, 4294901760
  %2064 = vmatmul.mubr.f32.gmra.mrb[0].mxu0 %v2063
  %v2065 = vpop.f32.mrb[0].mxu0
  %v2066 = vadd.f32 %v1883, %v2065
  %v2067 = vpop.f32.mrb[0].mxu0
  %2068 = vmatprep.mubr.f32.mxu0 0.0
  %v2069 = vand.u32 %v1356, 4294901760
  %v2070 = vsub.f32 %v1356, %v2069
  %v2071 = vand.u32 %v2070, 4294901760
  %2072 = vmatmul.mubr.f32.gmra.mrb[0].mxu0 %v2071
  %v2073 = vpop.f32.mrb[0].mxu0
  %v2074 = vadd.f32 %v1890, %v2073
  %v2075 = vpop.f32.mrb[0].mxu0
  %2076 = vmatprep.mubr.f32.mxu0 0.0
  %v2077 = vand.u32 %v1359, 4294901760
  %v2078 = vsub.f32 %v1359, %v2077
  %v2079 = vand.u32 %v2078, 4294901760
  %2080 = vmatmul.mubr.f32.gmra.mrb[0].mxu0 %v2079
  %v2081 = vpop.f32.mrb[0].mxu0
  %v2082 = vadd.f32 %v1897, %v2081
  %v2083 = vpop.f32.mrb[0].mxu0
  %2084 = vmatprep.mubr.f32.mxu0 0.0
  %v2085 = vand.u32 %v1362, 4294901760
  %v2086 = vsub.f32 %v1362, %v2085
  %v2087 = vand.u32 %v2086, 4294901760
  %2088 = vmatmul.mubr.f32.gmra.mrb[0].mxu0 %v2087
  %v2089 = vpop.f32.mrb[0].mxu0
  %v2090 = vadd.f32 %v1904, %v2089
  %v2091 = vpop.f32.mrb[0].mxu0
  %2092 = vmatprep.mubr.f32.mxu0 0.0
  %v2093 = vand.u32 %v1365, 4294901760
  %v2094 = vsub.f32 %v1365, %v2093
  %v2095 = vand.u32 %v2094, 4294901760
  %2096 = vmatmul.mubr.f32.gmra.mrb[0].mxu0 %v2095
  %v2097 = vpop.f32.mrb[0].mxu0
  %v2098 = vadd.f32 %v1911, %v2097
  %v2099 = vpop.f32.mrb[0].mxu0
  %2100 = vmatprep.mubr.f32.mxu0 0.0
  %v2101 = vand.u32 %v1368, 4294901760
  %v2102 = vsub.f32 %v1368, %v2101
  %v2103 = vand.u32 %v2102, 4294901760
  %2104 = vmatmul.mubr.f32.gmra.mrb[0].mxu0 %v2103
  %v2105 = vpop.f32.mrb[0].mxu0
  %v2106 = vadd.f32 %v1918, %v2105
  %v2107 = vpop.f32.mrb[0].mxu0
  %2108 = vmatprep.mubr.f32.mxu0 0.0
  %v2109 = vand.u32 %v1371, 4294901760
  %v2110 = vsub.f32 %v1371, %v2109
  %v2111 = vand.u32 %v2110, 4294901760
  %2112 = vmatmul.mubr.f32.gmra.mrb[0].mxu0 %v2111
  %v2113 = vpop.f32.mrb[0].mxu0
  %v2114 = vadd.f32 %v1925, %v2113
  %v2115 = vpop.f32.mrb[0].mxu0
  %2116 = vmatprep.mubr.f32.mxu0 0.0
  %v2117 = vand.u32 %v1374, 4294901760
  %v2118 = vsub.f32 %v1374, %v2117
  %v2119 = vand.u32 %v2118, 4294901760
  %2120 = vmatmul.mubr.f32.gmra.mrb[0].mxu0 %v2119
  %v2121 = vpop.f32.mrb[0].mxu0
  %v2122 = vadd.f32 %v1932, %v2121
  %v2123 = vpop.f32.mrb[0].mxu0
  %2124 = vmatprep.mubr.f32.mxu0 0.0
  %v2125 = vand.u32 %v1377, 4294901760
  %v2126 = vsub.f32 %v1377, %v2125
  %v2127 = vand.u32 %v2126, 4294901760
  %2128 = vmatmul.mubr.f32.gmra.mrb[0].mxu0 %v2127
  %v2129 = vpop.f32.mrb[0].mxu0
  %v2130 = vadd.f32 %v1939, %v2129
  %v2131 = vpop.f32.mrb[0].mxu0
  %2132 = vmatprep.mubr.f32.mxu0 0.0
  %v2133 = vand.u32 %v1380, 4294901760
  %v2134 = vsub.f32 %v1380, %v2133
  %v2135 = vand.u32 %v2134, 4294901760
  %2136 = vmatmul.mubr.f32.gmra.mrb[0].mxu0 %v2135
  %v2137 = vpop.f32.mrb[0].mxu0
  %v2138 = vadd.f32 %v1946, %v2137
  %v2139 = vpop.f32.mrb[0].mxu0
  %2140 = vmatprep.mubr.f32.mxu0 0.0
  %v2141 = vand.u32 %v1383, 4294901760
  %v2142 = vsub.f32 %v1383, %v2141
  %v2143 = vand.u32 %v2142, 4294901760
  %2144 = vmatmul.mubr.f32.gmra.mrb[0].mxu0 %v2143
  %v2145 = vpop.f32.mrb[0].mxu0
  %v2146 = vadd.f32 %v1953, %v2145
  %v2147 = vpop.f32.mrb[0].mxu0
  %2148 = vmatprep.mubr.f32.mxu0 0.0
  %v2149 = vand.u32 %v1386, 4294901760
  %v2150 = vsub.f32 %v1386, %v2149
  %v2151 = vand.u32 %v2150, 4294901760
  %2152 = vmatmul.mubr.f32.gmra.mrb[0].mxu0 %v2151
  %v2153 = vpop.f32.mrb[0].mxu0
  %v2154 = vadd.f32 %v1960, %v2153
  %v2155 = vpop.f32.mrb[0].mxu0
  %2156 = vdwg.mxu0
  %2157 = vmatprep.subr.mxu0 0.0
  %v2158 = vand.u32 %v1390, 4294901760
  %v2159 = vsub.f32 %v1390, %v2158
  %v2160 = vand.u32 %v2159, 4294901760
  %2161 = vmatpush1.msra.mxu0 %v2160
  %2162 = vmatprep.subr.mxu0 0.0
  %2163 = vmatpush1.msra.mxu0 0.0
  %2164 = vmatprep.subr.mxu0 0.0
  %2165 = vmatpush1.msra.mxu0 0.0
  %2166 = vmatprep.subr.mxu0 0.0
  %2167 = vmatpush1.msra.mxu0 0.0
  %2168 = vmatprep.subr.mxu0 0.0
  %2169 = vmatpush1.msra.mxu0 0.0
  %2170 = vmatprep.subr.mxu0 0.0
  %2171 = vmatpush1.msra.mxu0 0.0
  %2172 = vmatprep.subr.mxu0 0.0
  %2173 = vmatpush1.msra.mxu0 0.0
  %2174 = vmatprep.subr.mxu0 0.0
  %2175 = vmatpush1.msra.mxu0 0.0
  %2176 = vmatprep.subr.mxu0 0.0
  %2177 = vmatpush1.msra.mxu0 0.0
  %2178 = vmatprep.subr.mxu0 0.0
  %2179 = vmatpush1.msra.mxu0 0.0
  %2180 = vmatprep.subr.mxu0 0.0
  %2181 = vmatpush1.msra.mxu0 0.0
  %2182 = vmatprep.subr.mxu0 0.0
  %2183 = vmatpush1.msra.mxu0 0.0
  %2184 = vmatprep.subr.mxu0 0.0
  %2185 = vmatpush1.msra.mxu0 0.0
  %2186 = vmatprep.subr.mxu0 0.0
  %2187 = vmatpush1.msra.mxu0 0.0
  %2188 = vmatprep.subr.mxu0 0.0
  %2189 = vmatpush1.msra.mxu0 0.0
  %2190 = vmatprep.subr.mxu0 0.0
  %2191 = vmatpush1.msra.mxu0 0.0
  %2192 = vmatprep.subr.mxu0 0.0
  %2193 = vmatpush1.msra.mxu0 0.0
  %2194 = vmatprep.subr.mxu0 0.0
  %2195 = vmatpush1.msra.mxu0 0.0
  %2196 = vmatprep.subr.mxu0 0.0
  %2197 = vmatpush1.msra.mxu0 0.0
  %2198 = vmatprep.subr.mxu0 0.0
  %2199 = vmatpush1.msra.mxu0 0.0
  %2200 = vmatprep.subr.mxu0 0.0
  %2201 = vmatpush1.msra.mxu0 0.0
  %2202 = vmatprep.subr.mxu0 0.0
  %2203 = vmatpush1.msra.mxu0 0.0
  %2204 = vmatprep.subr.mxu0 0.0
  %2205 = vmatpush1.msra.mxu0 0.0
  %2206 = vmatprep.subr.mxu0 0.0
  %2207 = vmatpush1.msra.mxu0 0.0
  %2208 = vmatprep.subr.mxu0 0.0
  %2209 = vmatpush1.msra.mxu0 0.0
  %2210 = vmatprep.subr.mxu0 0.0
  %2211 = vmatpush1.msra.mxu0 0.0
  %2212 = vmatprep.subr.mxu0 0.0
  %2213 = vmatpush1.msra.mxu0 0.0
  %2214 = vmatprep.subr.mxu0 0.0
  %2215 = vmatpush1.msra.mxu0 0.0
  %2216 = vmatprep.subr.mxu0 0.0
  %2217 = vmatpush1.msra.mxu0 0.0
  %2218 = vmatprep.subr.mxu0 0.0
  %2219 = vmatpush1.msra.mxu0 0.0
  %2220 = vmatprep.subr.mxu0 0.0
  %2221 = vmatpush1.msra.mxu0 0.0
  %2222 = vmatprep.subr.mxu0 0.0
  %2223 = vmatpush1.msra.mxu0 0.0
  %2224 = vmatprep.mubr.f32.mxu0 0.0
  %v2225 = vand.u32 %v1341, 4294901760
  %2226 = vmatmul.mubr.f32.gmra.mrb[0].mxu0 %v2225
  %v2227 = vpop.f32.mrb[0].mxu0
  %v2228 = vadd.f32 %v2034, %v2227
  %v2229 = vpop.f32.mrb[0].mxu0
  %2230 = vmatprep.mubr.f32.mxu0 0.0
  %v2231 = vand.u32 %v1344, 4294901760
  %2232 = vmatmul.mubr.f32.gmra.mrb[0].mxu0 %v2231
  %v2233 = vpop.f32.mrb[0].mxu0
  %v2234 = vadd.f32 %v2042, %v2233
  %v2235 = vpop.f32.mrb[0].mxu0
  %2236 = vmatprep.mubr.f32.mxu0 0.0
  %v2237 = vand.u32 %v1347, 4294901760
  %2238 = vmatmul.mubr.f32.gmra.mrb[0].mxu0 %v2237
  %v2239 = vpop.f32.mrb[0].mxu0
  %v2240 = vadd.f32 %v2050, %v2239
  %v2241 = vpop.f32.mrb[0].mxu0
  %2242 = vmatprep.mubr.f32.mxu0 0.0
  %v2243 = vand.u32 %v1350, 4294901760
  %2244 = vmatmul.mubr.f32.gmra.mrb[0].mxu0 %v2243
  %v2245 = vpop.f32.mrb[0].mxu0
  %v2246 = vadd.f32 %v2058, %v2245
  %v2247 = vpop.f32.mrb[0].mxu0
  %2248 = vmatprep.mubr.f32.mxu0 0.0
  %v2249 = vand.u32 %v1353, 4294901760
  %2250 = vmatmul.mubr.f32.gmra.mrb[0].mxu0 %v2249
  %v2251 = vpop.f32.mrb[0].mxu0
  %v2252 = vadd.f32 %v2066, %v2251
  %v2253 = vpop.f32.mrb[0].mxu0
  %2254 = vmatprep.mubr.f32.mxu0 0.0
  %v2255 = vand.u32 %v1356, 4294901760
  %2256 = vmatmul.mubr.f32.gmra.mrb[0].mxu0 %v2255
  %v2257 = vpop.f32.mrb[0].mxu0
  %v2258 = vadd.f32 %v2074, %v2257
  %v2259 = vpop.f32.mrb[0].mxu0
  %2260 = vmatprep.mubr.f32.mxu0 0.0
  %v2261 = vand.u32 %v1359, 4294901760
  %2262 = vmatmul.mubr.f32.gmra.mrb[0].mxu0 %v2261
  %v2263 = vpop.f32.mrb[0].mxu0
  %v2264 = vadd.f32 %v2082, %v2263
  %v2265 = vpop.f32.mrb[0].mxu0
  %2266 = vmatprep.mubr.f32.mxu0 0.0
  %v2267 = vand.u32 %v1362, 4294901760
  %2268 = vmatmul.mubr.f32.gmra.mrb[0].mxu0 %v2267
  %v2269 = vpop.f32.mrb[0].mxu0
  %v2270 = vadd.f32 %v2090, %v2269
  %v2271 = vpop.f32.mrb[0].mxu0
  %2272 = vmatprep.mubr.f32.mxu0 0.0
  %v2273 = vand.u32 %v1365, 4294901760
  %2274 = vmatmul.mubr.f32.gmra.mrb[0].mxu0 %v2273
  %v2275 = vpop.f32.mrb[0].mxu0
  %v2276 = vadd.f32 %v2098, %v2275
  %v2277 = vpop.f32.mrb[0].mxu0
  %2278 = vmatprep.mubr.f32.mxu0 0.0
  %v2279 = vand.u32 %v1368, 4294901760
  %2280 = vmatmul.mubr.f32.gmra.mrb[0].mxu0 %v2279
  %v2281 = vpop.f32.mrb[0].mxu0
  %v2282 = vadd.f32 %v2106, %v2281
  %v2283 = vpop.f32.mrb[0].mxu0
  %2284 = vmatprep.mubr.f32.mxu0 0.0
  %v2285 = vand.u32 %v1371, 4294901760
  %2286 = vmatmul.mubr.f32.gmra.mrb[0].mxu0 %v2285
  %v2287 = vpop.f32.mrb[0].mxu0
  %v2288 = vadd.f32 %v2114, %v2287
  %v2289 = vpop.f32.mrb[0].mxu0
  %2290 = vmatprep.mubr.f32.mxu0 0.0
  %v2291 = vand.u32 %v1374, 4294901760
  %2292 = vmatmul.mubr.f32.gmra.mrb[0].mxu0 %v2291
  %v2293 = vpop.f32.mrb[0].mxu0
  %v2294 = vadd.f32 %v2122, %v2293
  %v2295 = vpop.f32.mrb[0].mxu0
  %2296 = vmatprep.mubr.f32.mxu0 0.0
  %v2297 = vand.u32 %v1377, 4294901760
  %2298 = vmatmul.mubr.f32.gmra.mrb[0].mxu0 %v2297
  %v2299 = vpop.f32.mrb[0].mxu0
  %v2300 = vadd.f32 %v2130, %v2299
  %v2301 = vpop.f32.mrb[0].mxu0
  %2302 = vmatprep.mubr.f32.mxu0 0.0
  %v2303 = vand.u32 %v1380, 4294901760
  %2304 = vmatmul.mubr.f32.gmra.mrb[0].mxu0 %v2303
  %v2305 = vpop.f32.mrb[0].mxu0
  %v2306 = vadd.f32 %v2138, %v2305
  %v2307 = vpop.f32.mrb[0].mxu0
  %2308 = vmatprep.mubr.f32.mxu0 0.0
  %v2309 = vand.u32 %v1383, 4294901760
  %2310 = vmatmul.mubr.f32.gmra.mrb[0].mxu0 %v2309
  %v2311 = vpop.f32.mrb[0].mxu0
  %v2312 = vadd.f32 %v2146, %v2311
  %v2313 = vpop.f32.mrb[0].mxu0
  %2314 = vmatprep.mubr.f32.mxu0 0.0
  %v2315 = vand.u32 %v1386, 4294901760
  %2316 = vmatmul.mubr.f32.gmra.mrb[0].mxu0 %v2315
  %v2317 = vpop.f32.mrb[0].mxu0
  %v2318 = vadd.f32 %v2154, %v2317
  %v2319 = vpop.f32.mrb[0].mxu0
  %2320 = vdwg.mxu0
  %2321 = vmatprep.subr.mxu0 0.0
  %v2322 = vand.u32 %v1390, 4294901760
  %2323 = vmatpush1.msra.mxu0 %v2322
  %2324 = vmatprep.subr.mxu0 0.0
  %2325 = vmatpush1.msra.mxu0 0.0
  %2326 = vmatprep.subr.mxu0 0.0
  %2327 = vmatpush1.msra.mxu0 0.0
  %2328 = vmatprep.subr.mxu0 0.0
  %2329 = vmatpush1.msra.mxu0 0.0
  %2330 = vmatprep.subr.mxu0 0.0
  %2331 = vmatpush1.msra.mxu0 0.0
  %2332 = vmatprep.subr.mxu0 0.0
  %2333 = vmatpush1.msra.mxu0 0.0
  %2334 = vmatprep.subr.mxu0 0.0
  %2335 = vmatpush1.msra.mxu0 0.0
  %2336 = vmatprep.subr.mxu0 0.0
  %2337 = vmatpush1.msra.mxu0 0.0
  %2338 = vmatprep.subr.mxu0 0.0
  %2339 = vmatpush1.msra.mxu0 0.0
  %2340 = vmatprep.subr.mxu0 0.0
  %2341 = vmatpush1.msra.mxu0 0.0
  %2342 = vmatprep.subr.mxu0 0.0
  %2343 = vmatpush1.msra.mxu0 0.0
  %2344 = vmatprep.subr.mxu0 0.0
  %2345 = vmatpush1.msra.mxu0 0.0
  %2346 = vmatprep.subr.mxu0 0.0
  %2347 = vmatpush1.msra.mxu0 0.0
  %2348 = vmatprep.subr.mxu0 0.0
  %2349 = vmatpush1.msra.mxu0 0.0
  %2350 = vmatprep.subr.mxu0 0.0
  %2351 = vmatpush1.msra.mxu0 0.0
  %2352 = vmatprep.subr.mxu0 0.0
  %2353 = vmatpush1.msra.mxu0 0.0
  %2354 = vmatprep.subr.mxu0 0.0
  %2355 = vmatpush1.msra.mxu0 0.0
  %2356 = vmatprep.subr.mxu0 0.0
  %2357 = vmatpush1.msra.mxu0 0.0
  %2358 = vmatprep.subr.mxu0 0.0
  %2359 = vmatpush1.msra.mxu0 0.0
  %2360 = vmatprep.subr.mxu0 0.0
  %2361 = vmatpush1.msra.mxu0 0.0
  %2362 = vmatprep.subr.mxu0 0.0
  %2363 = vmatpush1.msra.mxu0 0.0
  %2364 = vmatprep.subr.mxu0 0.0
  %2365 = vmatpush1.msra.mxu0 0.0
  %2366 = vmatprep.subr.mxu0 0.0
  %2367 = vmatpush1.msra.mxu0 0.0
  %2368 = vmatprep.subr.mxu0 0.0
  %2369 = vmatpush1.msra.mxu0 0.0
  %2370 = vmatprep.subr.mxu0 0.0
  %2371 = vmatpush1.msra.mxu0 0.0
  %2372 = vmatprep.subr.mxu0 0.0
  %2373 = vmatpush1.msra.mxu0 0.0
  %2374 = vmatprep.subr.mxu0 0.0
  %2375 = vmatpush1.msra.mxu0 0.0
  %2376 = vmatprep.subr.mxu0 0.0
  %2377 = vmatpush1.msra.mxu0 0.0
  %2378 = vmatprep.subr.mxu0 0.0
  %2379 = vmatpush1.msra.mxu0 0.0
  %2380 = vmatprep.subr.mxu0 0.0
  %2381 = vmatpush1.msra.mxu0 0.0
  %2382 = vmatprep.subr.mxu0 0.0
  %2383 = vmatpush1.msra.mxu0 0.0
  %2384 = vmatprep.subr.mxu0 0.0
  %2385 = vmatpush1.msra.mxu0 0.0
  %2386 = vmatprep.mubr.f32.mxu0 0.0
  %v2387 = vand.u32 %v1341, 4294901760
  %2388 = vmatmul.mubr.f32.gmra.mrb[0].mxu0 %v2387
  %v2389 = vpop.f32.mrb[0].mxu0
  %v2390 = vadd.f32 %v2228, %v2389
  %v2391 = vpop.f32.mrb[0].mxu0
  %2392 = vmatprep.mubr.f32.mxu0 0.0
  %v2393 = vand.u32 %v1344, 4294901760
  %2394 = vmatmul.mubr.f32.gmra.mrb[0].mxu0 %v2393
  %v2395 = vpop.f32.mrb[0].mxu0
  %v2396 = vadd.f32 %v2234, %v2395
  %v2397 = vpop.f32.mrb[0].mxu0
  %2398 = vmatprep.mubr.f32.mxu0 0.0
  %v2399 = vand.u32 %v1347, 4294901760
  %2400 = vmatmul.mubr.f32.gmra.mrb[0].mxu0 %v2399
  %v2401 = vpop.f32.mrb[0].mxu0
  %v2402 = vadd.f32 %v2240, %v2401
  %v2403 = vpop.f32.mrb[0].mxu0
  %2404 = vmatprep.mubr.f32.mxu0 0.0
  %v2405 = vand.u32 %v1350, 4294901760
  %2406 = vmatmul.mubr.f32.gmra.mrb[0].mxu0 %v2405
  %v2407 = vpop.f32.mrb[0].mxu0
  %v2408 = vadd.f32 %v2246, %v2407
  %v2409 = vpop.f32.mrb[0].mxu0
  %2410 = vmatprep.mubr.f32.mxu0 0.0
  %v2411 = vand.u32 %v1353, 4294901760
  %2412 = vmatmul.mubr.f32.gmra.mrb[0].mxu0 %v2411
  %v2413 = vpop.f32.mrb[0].mxu0
  %v2414 = vadd.f32 %v2252, %v2413
  %v2415 = vpop.f32.mrb[0].mxu0
  %2416 = vmatprep.mubr.f32.mxu0 0.0
  %v2417 = vand.u32 %v1356, 4294901760
  %2418 = vmatmul.mubr.f32.gmra.mrb[0].mxu0 %v2417
  %v2419 = vpop.f32.mrb[0].mxu0
  %v2420 = vadd.f32 %v2258, %v2419
  %v2421 = vpop.f32.mrb[0].mxu0
  %2422 = vmatprep.mubr.f32.mxu0 0.0
  %v2423 = vand.u32 %v1359, 4294901760
  %2424 = vmatmul.mubr.f32.gmra.mrb[0].mxu0 %v2423
  %v2425 = vpop.f32.mrb[0].mxu0
  %v2426 = vadd.f32 %v2264, %v2425
  %v2427 = vpop.f32.mrb[0].mxu0
  %2428 = vmatprep.mubr.f32.mxu0 0.0
  %v2429 = vand.u32 %v1362, 4294901760
  %2430 = vmatmul.mubr.f32.gmra.mrb[0].mxu0 %v2429
  %v2431 = vpop.f32.mrb[0].mxu0
  %v2432 = vadd.f32 %v2270, %v2431
  %v2433 = vpop.f32.mrb[0].mxu0
  %2434 = vmatprep.mubr.f32.mxu0 0.0
  %v2435 = vand.u32 %v1365, 4294901760
  %2436 = vmatmul.mubr.f32.gmra.mrb[0].mxu0 %v2435
  %v2437 = vpop.f32.mrb[0].mxu0
  %v2438 = vadd.f32 %v2276, %v2437
  %v2439 = vpop.f32.mrb[0].mxu0
  %2440 = vmatprep.mubr.f32.mxu0 0.0
  %v2441 = vand.u32 %v1368, 4294901760
  %2442 = vmatmul.mubr.f32.gmra.mrb[0].mxu0 %v2441
  %v2443 = vpop.f32.mrb[0].mxu0
  %v2444 = vadd.f32 %v2282, %v2443
  %v2445 = vpop.f32.mrb[0].mxu0
  %2446 = vmatprep.mubr.f32.mxu0 0.0
  %v2447 = vand.u32 %v1371, 4294901760
  %2448 = vmatmul.mubr.f32.gmra.mrb[0].mxu0 %v2447
  %v2449 = vpop.f32.mrb[0].mxu0
  %v2450 = vadd.f32 %v2288, %v2449
  %v2451 = vpop.f32.mrb[0].mxu0
  %2452 = vmatprep.mubr.f32.mxu0 0.0
  %v2453 = vand.u32 %v1374, 4294901760
  %2454 = vmatmul.mubr.f32.gmra.mrb[0].mxu0 %v2453
  %v2455 = vpop.f32.mrb[0].mxu0
  %v2456 = vadd.f32 %v2294, %v2455
  %v2457 = vpop.f32.mrb[0].mxu0
  %2458 = vmatprep.mubr.f32.mxu0 0.0
  %v2459 = vand.u32 %v1377, 4294901760
  %2460 = vmatmul.mubr.f32.gmra.mrb[0].mxu0 %v2459
  %v2461 = vpop.f32.mrb[0].mxu0
  %v2462 = vadd.f32 %v2300, %v2461
  %v2463 = vpop.f32.mrb[0].mxu0
  %2464 = vmatprep.mubr.f32.mxu0 0.0
  %v2465 = vand.u32 %v1380, 4294901760
  %2466 = vmatmul.mubr.f32.gmra.mrb[0].mxu0 %v2465
  %v2467 = vpop.f32.mrb[0].mxu0
  %v2468 = vadd.f32 %v2306, %v2467
  %v2469 = vpop.f32.mrb[0].mxu0
  %2470 = vmatprep.mubr.f32.mxu0 0.0
  %v2471 = vand.u32 %v1383, 4294901760
  %2472 = vmatmul.mubr.f32.gmra.mrb[0].mxu0 %v2471
  %v2473 = vpop.f32.mrb[0].mxu0
  %v2474 = vadd.f32 %v2312, %v2473
  %v2475 = vpop.f32.mrb[0].mxu0
  %2476 = vmatprep.mubr.f32.mxu0 0.0
  %v2477 = vand.u32 %v1386, 4294901760
  %2478 = vmatmul.mubr.f32.gmra.mrb[0].mxu0 %v2477
  %v2479 = vpop.f32.mrb[0].mxu0
  %v2480 = vadd.f32 %v2318, %v2479
  %v2481 = vpop.f32.mrb[0].mxu0
  %2482 = vdwg.mxu0
  %v2483 = vsub.f32 %v20, %v2390
  %v2484 = vsub.f32 %v21, %v2396
  %v2485 = vsub.f32 %v22, %v2402
  %v2486 = vsub.f32 %v23, %v2408
  %v2487 = vsub.f32 %v24, %v2414
  %v2488 = vsub.f32 %v25, %v2420
  %v2489 = vsub.f32 %v26, %v2426
  %v2490 = vsub.f32 %v27, %v2432
  %v2491 = vsub.f32 %v28, %v2438
  %v2492 = vsub.f32 %v29, %v2444
  %v2493 = vsub.f32 %v30, %v2450
  %v2494 = vsub.f32 %v31, %v2456
  %v2495 = vsub.f32 %v32, %v2462
  %v2496 = vsub.f32 %v33, %v2468
  %v2497 = vsub.f32 %v34, %v2474
  %v2498 = vsub.f32 %v35, %v2480
  %v2499 = vmul.f32 %v2483, %v2483
  %v2500 = vmul.f32 %v2484, %v2484
  %v2501 = vmul.f32 %v2485, %v2485
  %v2502 = vmul.f32 %v2486, %v2486
  %v2503 = vmul.f32 %v2487, %v2487
  %v2504 = vmul.f32 %v2488, %v2488
  %v2505 = vmul.f32 %v2489, %v2489
  %v2506 = vmul.f32 %v2490, %v2490
  %v2507 = vmul.f32 %v2491, %v2491
  %v2508 = vmul.f32 %v2492, %v2492
  %v2509 = vmul.f32 %v2493, %v2493
  %v2510 = vmul.f32 %v2494, %v2494
  %v2511 = vmul.f32 %v2495, %v2495
  %v2512 = vmul.f32 %v2496, %v2496
  %v2513 = vmul.f32 %v2497, %v2497
  %v2514 = vmul.f32 %v2498, %v2498
  %2515 = vmatprep.subr.mxu0 0.0
  %v2516 = vand.u32 %v36, 4294901760
  %2517 = vmatpush1.msra.mxu0 %v2516
  %2518 = vmatprep.subr.mxu0 0.0
  %v2519 = vand.u32 %v37, 4294901760
  %2520 = vmatpush1.msra.mxu0 %v2519
  %2521 = vmatprep.subr.mxu0 0.0
  %v2522 = vand.u32 %v38, 4294901760
  %2523 = vmatpush1.msra.mxu0 %v2522
  %2524 = vmatprep.subr.mxu0 0.0
  %v2525 = vand.u32 %v39, 4294901760
  %2526 = vmatpush1.msra.mxu0 %v2525
  %2527 = vmatprep.subr.mxu0 0.0
  %v2528 = vand.u32 %v40, 4294901760
  %2529 = vmatpush1.msra.mxu0 %v2528
  %2530 = vmatprep.subr.mxu0 0.0
  %v2531 = vand.u32 %v41, 4294901760
  %2532 = vmatpush1.msra.mxu0 %v2531
  %2533 = vmatprep.subr.mxu0 0.0
  %v2534 = vand.u32 %v42, 4294901760
  %2535 = vmatpush1.msra.mxu0 %v2534
  %2536 = vmatprep.subr.mxu0 0.0
  %v2537 = vand.u32 %v43, 4294901760
  %2538 = vmatpush1.msra.mxu0 %v2537
  %2539 = vmatprep.subr.mxu0 0.0
  %v2540 = vand.u32 %v44, 4294901760
  %2541 = vmatpush1.msra.mxu0 %v2540
  %2542 = vmatprep.subr.mxu0 0.0
  %v2543 = vand.u32 %v45, 4294901760
  %2544 = vmatpush1.msra.mxu0 %v2543
  %2545 = vmatprep.subr.mxu0 0.0
  %v2546 = vand.u32 %v46, 4294901760
  %2547 = vmatpush1.msra.mxu0 %v2546
  %2548 = vmatprep.subr.mxu0 0.0
  %v2549 = vand.u32 %v47, 4294901760
  %2550 = vmatpush1.msra.mxu0 %v2549
  %2551 = vmatprep.subr.mxu0 0.0
  %v2552 = vand.u32 %v48, 4294901760
  %2553 = vmatpush1.msra.mxu0 %v2552
  %2554 = vmatprep.subr.mxu0 0.0
  %v2555 = vand.u32 %v49, 4294901760
  %2556 = vmatpush1.msra.mxu0 %v2555
  %2557 = vmatprep.subr.mxu0 0.0
  %v2558 = vand.u32 %v50, 4294901760
  %2559 = vmatpush1.msra.mxu0 %v2558
  %2560 = vmatprep.subr.mxu0 0.0
  %v2561 = vand.u32 %v51, 4294901760
  %2562 = vmatpush1.msra.mxu0 %v2561
  %2563 = vmatprep.subr.mxu0 0.0
  %2564 = vmatpush1.msra.mxu0 0.0
  %2565 = vmatprep.subr.mxu0 0.0
  %2566 = vmatpush1.msra.mxu0 0.0
  %2567 = vmatprep.subr.mxu0 0.0
  %2568 = vmatpush1.msra.mxu0 0.0
  %2569 = vmatprep.subr.mxu0 0.0
  %2570 = vmatpush1.msra.mxu0 0.0
  %2571 = vmatprep.subr.mxu0 0.0
  %2572 = vmatpush1.msra.mxu0 0.0
  %2573 = vmatprep.subr.mxu0 0.0
  %2574 = vmatpush1.msra.mxu0 0.0
  %2575 = vmatprep.subr.mxu0 0.0
  %2576 = vmatpush1.msra.mxu0 0.0
  %2577 = vmatprep.subr.mxu0 0.0
  %2578 = vmatpush1.msra.mxu0 0.0
  %2579 = vmatprep.subr.mxu0 0.0
  %2580 = vmatpush1.msra.mxu0 0.0
  %2581 = vmatprep.subr.mxu0 0.0
  %2582 = vmatpush1.msra.mxu0 0.0
  %2583 = vmatprep.subr.mxu0 0.0
  %2584 = vmatpush1.msra.mxu0 0.0
  %2585 = vmatprep.subr.mxu0 0.0
  %2586 = vmatpush1.msra.mxu0 0.0
  %2587 = vmatprep.subr.mxu0 0.0
  %2588 = vmatpush1.msra.mxu0 0.0
  %2589 = vmatprep.subr.mxu0 0.0
  %2590 = vmatpush1.msra.mxu0 0.0
  %2591 = vmatprep.subr.mxu0 0.0
  %2592 = vmatpush1.msra.mxu0 0.0
  %2593 = vmatprep.subr.mxu0 0.0
  %2594 = vmatpush1.msra.mxu0 0.0
  %2595 = vmatprep.mubr.f32.mxu0 0.0
  %v2596 = vand.u32 %v2499, 4294901760
  %v2597 = vsub.f32 %v2499, %v2596
  %v2598 = vand.u32 %v2597, 4294901760
  %v2599 = vsub.f32 %v2597, %v2598
  %v2600 = vand.u32 %v2599, 4294901760
  %2601 = vmatmul.mubr.f32.gmra.mrb[0].mxu0 %v2600
  %v2602 = vpop.f32.mrb[0].mxu0
  %v2603 = vadd.f32 1e-05, %v2602
  %v2604 = vpop.f32.mrb[0].mxu0
  %2605 = vmatprep.mubr.f32.mxu0 0.0
  %v2606 = vand.u32 %v2500, 4294901760
  %v2607 = vsub.f32 %v2500, %v2606
  %v2608 = vand.u32 %v2607, 4294901760
  %v2609 = vsub.f32 %v2607, %v2608
  %v2610 = vand.u32 %v2609, 4294901760
  %2611 = vmatmul.mubr.f32.gmra.mrb[0].mxu0 %v2610
  %v2612 = vpop.f32.mrb[0].mxu0
  %v2613 = vadd.f32 1e-05, %v2612
  %v2614 = vpop.f32.mrb[0].mxu0
  %2615 = vmatprep.mubr.f32.mxu0 0.0
  %v2616 = vand.u32 %v2501, 4294901760
  %v2617 = vsub.f32 %v2501, %v2616
  %v2618 = vand.u32 %v2617, 4294901760
  %v2619 = vsub.f32 %v2617, %v2618
  %v2620 = vand.u32 %v2619, 4294901760
  %2621 = vmatmul.mubr.f32.gmra.mrb[0].mxu0 %v2620
  %v2622 = vpop.f32.mrb[0].mxu0
  %v2623 = vadd.f32 1e-05, %v2622
  %v2624 = vpop.f32.mrb[0].mxu0
  %2625 = vmatprep.mubr.f32.mxu0 0.0
  %v2626 = vand.u32 %v2502, 4294901760
  %v2627 = vsub.f32 %v2502, %v2626
  %v2628 = vand.u32 %v2627, 4294901760
  %v2629 = vsub.f32 %v2627, %v2628
  %v2630 = vand.u32 %v2629, 4294901760
  %2631 = vmatmul.mubr.f32.gmra.mrb[0].mxu0 %v2630
  %v2632 = vpop.f32.mrb[0].mxu0
  %v2633 = vadd.f32 1e-05, %v2632
  %v2634 = vpop.f32.mrb[0].mxu0
  %2635 = vmatprep.mubr.f32.mxu0 0.0
  %v2636 = vand.u32 %v2503, 4294901760
  %v2637 = vsub.f32 %v2503, %v2636
  %v2638 = vand.u32 %v2637, 4294901760
  %v2639 = vsub.f32 %v2637, %v2638
  %v2640 = vand.u32 %v2639, 4294901760
  %2641 = vmatmul.mubr.f32.gmra.mrb[0].mxu0 %v2640
  %v2642 = vpop.f32.mrb[0].mxu0
  %v2643 = vadd.f32 1e-05, %v2642
  %v2644 = vpop.f32.mrb[0].mxu0
  %2645 = vmatprep.mubr.f32.mxu0 0.0
  %v2646 = vand.u32 %v2504, 4294901760
  %v2647 = vsub.f32 %v2504, %v2646
  %v2648 = vand.u32 %v2647, 4294901760
  %v2649 = vsub.f32 %v2647, %v2648
  %v2650 = vand.u32 %v2649, 4294901760
  %2651 = vmatmul.mubr.f32.gmra.mrb[0].mxu0 %v2650
  %v2652 = vpop.f32.mrb[0].mxu0
  %v2653 = vadd.f32 1e-05, %v2652
  %v2654 = vpop.f32.mrb[0].mxu0
  %2655 = vmatprep.mubr.f32.mxu0 0.0
  %v2656 = vand.u32 %v2505, 4294901760
  %v2657 = vsub.f32 %v2505, %v2656
  %v2658 = vand.u32 %v2657, 4294901760
  %v2659 = vsub.f32 %v2657, %v2658
  %v2660 = vand.u32 %v2659, 4294901760
  %2661 = vmatmul.mubr.f32.gmra.mrb[0].mxu0 %v2660
  %v2662 = vpop.f32.mrb[0].mxu0
  %v2663 = vadd.f32 1e-05, %v2662
  %v2664 = vpop.f32.mrb[0].mxu0
  %2665 = vmatprep.mubr.f32.mxu0 0.0
  %v2666 = vand.u32 %v2506, 4294901760
  %v2667 = vsub.f32 %v2506, %v2666
  %v2668 = vand.u32 %v2667, 4294901760
  %v2669 = vsub.f32 %v2667, %v2668
  %v2670 = vand.u32 %v2669, 4294901760
  %2671 = vmatmul.mubr.f32.gmra.mrb[0].mxu0 %v2670
  %v2672 = vpop.f32.mrb[0].mxu0
  %v2673 = vadd.f32 1e-05, %v2672
  %v2674 = vpop.f32.mrb[0].mxu0
  %2675 = vmatprep.mubr.f32.mxu0 0.0
  %v2676 = vand.u32 %v2507, 4294901760
  %v2677 = vsub.f32 %v2507, %v2676
  %v2678 = vand.u32 %v2677, 4294901760
  %v2679 = vsub.f32 %v2677, %v2678
  %v2680 = vand.u32 %v2679, 4294901760
  %2681 = vmatmul.mubr.f32.gmra.mrb[0].mxu0 %v2680
  %v2682 = vpop.f32.mrb[0].mxu0
  %v2683 = vadd.f32 1e-05, %v2682
  %v2684 = vpop.f32.mrb[0].mxu0
  %2685 = vmatprep.mubr.f32.mxu0 0.0
  %v2686 = vand.u32 %v2508, 4294901760
  %v2687 = vsub.f32 %v2508, %v2686
  %v2688 = vand.u32 %v2687, 4294901760
  %v2689 = vsub.f32 %v2687, %v2688
  %v2690 = vand.u32 %v2689, 4294901760
  %2691 = vmatmul.mubr.f32.gmra.mrb[0].mxu0 %v2690
  %v2692 = vpop.f32.mrb[0].mxu0
  %v2693 = vadd.f32 1e-05, %v2692
  %v2694 = vpop.f32.mrb[0].mxu0
  %2695 = vmatprep.mubr.f32.mxu0 0.0
  %v2696 = vand.u32 %v2509, 4294901760
  %v2697 = vsub.f32 %v2509, %v2696
  %v2698 = vand.u32 %v2697, 4294901760
  %v2699 = vsub.f32 %v2697, %v2698
  %v2700 = vand.u32 %v2699, 4294901760
  %2701 = vmatmul.mubr.f32.gmra.mrb[0].mxu0 %v2700
  %v2702 = vpop.f32.mrb[0].mxu0
  %v2703 = vadd.f32 1e-05, %v2702
  %v2704 = vpop.f32.mrb[0].mxu0
  %2705 = vmatprep.mubr.f32.mxu0 0.0
  %v2706 = vand.u32 %v2510, 4294901760
  %v2707 = vsub.f32 %v2510, %v2706
  %v2708 = vand.u32 %v2707, 4294901760
  %v2709 = vsub.f32 %v2707, %v2708
  %v2710 = vand.u32 %v2709, 4294901760
  %2711 = vmatmul.mubr.f32.gmra.mrb[0].mxu0 %v2710
  %v2712 = vpop.f32.mrb[0].mxu0
  %v2713 = vadd.f32 1e-05, %v2712
  %v2714 = vpop.f32.mrb[0].mxu0
  %2715 = vmatprep.mubr.f32.mxu0 0.0
  %v2716 = vand.u32 %v2511, 4294901760
  %v2717 = vsub.f32 %v2511, %v2716
  %v2718 = vand.u32 %v2717, 4294901760
  %v2719 = vsub.f32 %v2717, %v2718
  %v2720 = vand.u32 %v2719, 4294901760
  %2721 = vmatmul.mubr.f32.gmra.mrb[0].mxu0 %v2720
  %v2722 = vpop.f32.mrb[0].mxu0
  %v2723 = vadd.f32 1e-05, %v2722
  %v2724 = vpop.f32.mrb[0].mxu0
  %2725 = vmatprep.mubr.f32.mxu0 0.0
  %v2726 = vand.u32 %v2512, 4294901760
  %v2727 = vsub.f32 %v2512, %v2726
  %v2728 = vand.u32 %v2727, 4294901760
  %v2729 = vsub.f32 %v2727, %v2728
  %v2730 = vand.u32 %v2729, 4294901760
  %2731 = vmatmul.mubr.f32.gmra.mrb[0].mxu0 %v2730
  %v2732 = vpop.f32.mrb[0].mxu0
  %v2733 = vadd.f32 1e-05, %v2732
  %v2734 = vpop.f32.mrb[0].mxu0
  %2735 = vmatprep.mubr.f32.mxu0 0.0
  %v2736 = vand.u32 %v2513, 4294901760
  %v2737 = vsub.f32 %v2513, %v2736
  %v2738 = vand.u32 %v2737, 4294901760
  %v2739 = vsub.f32 %v2737, %v2738
  %v2740 = vand.u32 %v2739, 4294901760
  %2741 = vmatmul.mubr.f32.gmra.mrb[0].mxu0 %v2740
  %v2742 = vpop.f32.mrb[0].mxu0
  %v2743 = vadd.f32 1e-05, %v2742
  %v2744 = vpop.f32.mrb[0].mxu0
  %2745 = vmatprep.mubr.f32.mxu0 0.0
  %v2746 = vand.u32 %v2514, 4294901760
  %v2747 = vsub.f32 %v2514, %v2746
  %v2748 = vand.u32 %v2747, 4294901760
  %v2749 = vsub.f32 %v2747, %v2748
  %v2750 = vand.u32 %v2749, 4294901760
  %2751 = vmatmul.mubr.f32.gmra.mrb[0].mxu0 %v2750
  %v2752 = vpop.f32.mrb[0].mxu0
  %v2753 = vadd.f32 1e-05, %v2752
  %v2754 = vpop.f32.mrb[0].mxu0
  %2755 = vdwg.mxu0
  %2756 = vmatprep.subr.mxu0 0.0
  %v2757 = vand.u32 %v36, 4294901760
  %v2758 = vsub.f32 %v36, %v2757
  %v2759 = vand.u32 %v2758, 4294901760
  %v2760 = vsub.f32 %v2758, %v2759
  %v2761 = vand.u32 %v2760, 4294901760
  %2762 = vmatpush1.msra.mxu0 %v2761
  %2763 = vmatprep.subr.mxu0 0.0
  %v2764 = vand.u32 %v37, 4294901760
  %v2765 = vsub.f32 %v37, %v2764
  %v2766 = vand.u32 %v2765, 4294901760
  %v2767 = vsub.f32 %v2765, %v2766
  %v2768 = vand.u32 %v2767, 4294901760
  %2769 = vmatpush1.msra.mxu0 %v2768
  %2770 = vmatprep.subr.mxu0 0.0
  %v2771 = vand.u32 %v38, 4294901760
  %v2772 = vsub.f32 %v38, %v2771
  %v2773 = vand.u32 %v2772, 4294901760
  %v2774 = vsub.f32 %v2772, %v2773
  %v2775 = vand.u32 %v2774, 4294901760
  %2776 = vmatpush1.msra.mxu0 %v2775
  %2777 = vmatprep.subr.mxu0 0.0
  %v2778 = vand.u32 %v39, 4294901760
  %v2779 = vsub.f32 %v39, %v2778
  %v2780 = vand.u32 %v2779, 4294901760
  %v2781 = vsub.f32 %v2779, %v2780
  %v2782 = vand.u32 %v2781, 4294901760
  %2783 = vmatpush1.msra.mxu0 %v2782
  %2784 = vmatprep.subr.mxu0 0.0
  %v2785 = vand.u32 %v40, 4294901760
  %v2786 = vsub.f32 %v40, %v2785
  %v2787 = vand.u32 %v2786, 4294901760
  %v2788 = vsub.f32 %v2786, %v2787
  %v2789 = vand.u32 %v2788, 4294901760
  %2790 = vmatpush1.msra.mxu0 %v2789
  %2791 = vmatprep.subr.mxu0 0.0
  %v2792 = vand.u32 %v41, 4294901760
  %v2793 = vsub.f32 %v41, %v2792
  %v2794 = vand.u32 %v2793, 4294901760
  %v2795 = vsub.f32 %v2793, %v2794
  %v2796 = vand.u32 %v2795, 4294901760
  %2797 = vmatpush1.msra.mxu0 %v2796
  %2798 = vmatprep.subr.mxu0 0.0
  %v2799 = vand.u32 %v42, 4294901760
  %v2800 = vsub.f32 %v42, %v2799
  %v2801 = vand.u32 %v2800, 4294901760
  %v2802 = vsub.f32 %v2800, %v2801
  %v2803 = vand.u32 %v2802, 4294901760
  %2804 = vmatpush1.msra.mxu0 %v2803
  %2805 = vmatprep.subr.mxu0 0.0
  %v2806 = vand.u32 %v43, 4294901760
  %v2807 = vsub.f32 %v43, %v2806
  %v2808 = vand.u32 %v2807, 4294901760
  %v2809 = vsub.f32 %v2807, %v2808
  %v2810 = vand.u32 %v2809, 4294901760
  %2811 = vmatpush1.msra.mxu0 %v2810
  %2812 = vmatprep.subr.mxu0 0.0
  %v2813 = vand.u32 %v44, 4294901760
  %v2814 = vsub.f32 %v44, %v2813
  %v2815 = vand.u32 %v2814, 4294901760
  %v2816 = vsub.f32 %v2814, %v2815
  %v2817 = vand.u32 %v2816, 4294901760
  %2818 = vmatpush1.msra.mxu0 %v2817
  %2819 = vmatprep.subr.mxu0 0.0
  %v2820 = vand.u32 %v45, 4294901760
  %v2821 = vsub.f32 %v45, %v2820
  %v2822 = vand.u32 %v2821, 4294901760
  %v2823 = vsub.f32 %v2821, %v2822
  %v2824 = vand.u32 %v2823, 4294901760
  %2825 = vmatpush1.msra.mxu0 %v2824
  %2826 = vmatprep.subr.mxu0 0.0
  %v2827 = vand.u32 %v46, 4294901760
  %v2828 = vsub.f32 %v46, %v2827
  %v2829 = vand.u32 %v2828, 4294901760
  %v2830 = vsub.f32 %v2828, %v2829
  %v2831 = vand.u32 %v2830, 4294901760
  %2832 = vmatpush1.msra.mxu0 %v2831
  %2833 = vmatprep.subr.mxu0 0.0
  %v2834 = vand.u32 %v47, 4294901760
  %v2835 = vsub.f32 %v47, %v2834
  %v2836 = vand.u32 %v2835, 4294901760
  %v2837 = vsub.f32 %v2835, %v2836
  %v2838 = vand.u32 %v2837, 4294901760
  %2839 = vmatpush1.msra.mxu0 %v2838
  %2840 = vmatprep.subr.mxu0 0.0
  %v2841 = vand.u32 %v48, 4294901760
  %v2842 = vsub.f32 %v48, %v2841
  %v2843 = vand.u32 %v2842, 4294901760
  %v2844 = vsub.f32 %v2842, %v2843
  %v2845 = vand.u32 %v2844, 4294901760
  %2846 = vmatpush1.msra.mxu0 %v2845
  %2847 = vmatprep.subr.mxu0 0.0
  %v2848 = vand.u32 %v49, 4294901760
  %v2849 = vsub.f32 %v49, %v2848
  %v2850 = vand.u32 %v2849, 4294901760
  %v2851 = vsub.f32 %v2849, %v2850
  %v2852 = vand.u32 %v2851, 4294901760
  %2853 = vmatpush1.msra.mxu0 %v2852
  %2854 = vmatprep.subr.mxu0 0.0
  %v2855 = vand.u32 %v50, 4294901760
  %v2856 = vsub.f32 %v50, %v2855
  %v2857 = vand.u32 %v2856, 4294901760
  %v2858 = vsub.f32 %v2856, %v2857
  %v2859 = vand.u32 %v2858, 4294901760
  %2860 = vmatpush1.msra.mxu0 %v2859
  %2861 = vmatprep.subr.mxu0 0.0
  %v2862 = vand.u32 %v51, 4294901760
  %v2863 = vsub.f32 %v51, %v2862
  %v2864 = vand.u32 %v2863, 4294901760
  %v2865 = vsub.f32 %v2863, %v2864
  %v2866 = vand.u32 %v2865, 4294901760
  %2867 = vmatpush1.msra.mxu0 %v2866
  %2868 = vmatprep.subr.mxu0 0.0
  %2869 = vmatpush1.msra.mxu0 0.0
  %2870 = vmatprep.subr.mxu0 0.0
  %2871 = vmatpush1.msra.mxu0 0.0
  %2872 = vmatprep.subr.mxu0 0.0
  %2873 = vmatpush1.msra.mxu0 0.0
  %2874 = vmatprep.subr.mxu0 0.0
  %2875 = vmatpush1.msra.mxu0 0.0
  %2876 = vmatprep.subr.mxu0 0.0
  %2877 = vmatpush1.msra.mxu0 0.0
  %2878 = vmatprep.subr.mxu0 0.0
  %2879 = vmatpush1.msra.mxu0 0.0
  %2880 = vmatprep.subr.mxu0 0.0
  %2881 = vmatpush1.msra.mxu0 0.0
  %2882 = vmatprep.subr.mxu0 0.0
  %2883 = vmatpush1.msra.mxu0 0.0
  %2884 = vmatprep.subr.mxu0 0.0
  %2885 = vmatpush1.msra.mxu0 0.0
  %2886 = vmatprep.subr.mxu0 0.0
  %2887 = vmatpush1.msra.mxu0 0.0
  %2888 = vmatprep.subr.mxu0 0.0
  %2889 = vmatpush1.msra.mxu0 0.0
  %2890 = vmatprep.subr.mxu0 0.0
  %2891 = vmatpush1.msra.mxu0 0.0
  %2892 = vmatprep.subr.mxu0 0.0
  %2893 = vmatpush1.msra.mxu0 0.0
  %2894 = vmatprep.subr.mxu0 0.0
  %2895 = vmatpush1.msra.mxu0 0.0
  %2896 = vmatprep.subr.mxu0 0.0
  %2897 = vmatpush1.msra.mxu0 0.0
  %2898 = vmatprep.subr.mxu0 0.0
  %2899 = vmatpush1.msra.mxu0 0.0
  %2900 = vmatprep.mubr.f32.mxu0 0.0
  %v2901 = vand.u32 %v2499, 4294901760
  %2902 = vmatmul.mubr.f32.gmra.mrb[0].mxu0 %v2901
  %v2903 = vpop.f32.mrb[0].mxu0
  %v2904 = vadd.f32 %v2603, %v2903
  %v2905 = vpop.f32.mrb[0].mxu0
  %2906 = vmatprep.mubr.f32.mxu0 0.0
  %v2907 = vand.u32 %v2500, 4294901760
  %2908 = vmatmul.mubr.f32.gmra.mrb[0].mxu0 %v2907
  %v2909 = vpop.f32.mrb[0].mxu0
  %v2910 = vadd.f32 %v2613, %v2909
  %v2911 = vpop.f32.mrb[0].mxu0
  %2912 = vmatprep.mubr.f32.mxu0 0.0
  %v2913 = vand.u32 %v2501, 4294901760
  %2914 = vmatmul.mubr.f32.gmra.mrb[0].mxu0 %v2913
  %v2915 = vpop.f32.mrb[0].mxu0
  %v2916 = vadd.f32 %v2623, %v2915
  %v2917 = vpop.f32.mrb[0].mxu0
  %2918 = vmatprep.mubr.f32.mxu0 0.0
  %v2919 = vand.u32 %v2502, 4294901760
  %2920 = vmatmul.mubr.f32.gmra.mrb[0].mxu0 %v2919
  %v2921 = vpop.f32.mrb[0].mxu0
  %v2922 = vadd.f32 %v2633, %v2921
  %v2923 = vpop.f32.mrb[0].mxu0
  %2924 = vmatprep.mubr.f32.mxu0 0.0
  %v2925 = vand.u32 %v2503, 4294901760
  %2926 = vmatmul.mubr.f32.gmra.mrb[0].mxu0 %v2925
  %v2927 = vpop.f32.mrb[0].mxu0
  %v2928 = vadd.f32 %v2643, %v2927
  %v2929 = vpop.f32.mrb[0].mxu0
  %2930 = vmatprep.mubr.f32.mxu0 0.0
  %v2931 = vand.u32 %v2504, 4294901760
  %2932 = vmatmul.mubr.f32.gmra.mrb[0].mxu0 %v2931
  %v2933 = vpop.f32.mrb[0].mxu0
  %v2934 = vadd.f32 %v2653, %v2933
  %v2935 = vpop.f32.mrb[0].mxu0
  %2936 = vmatprep.mubr.f32.mxu0 0.0
  %v2937 = vand.u32 %v2505, 4294901760
  %2938 = vmatmul.mubr.f32.gmra.mrb[0].mxu0 %v2937
  %v2939 = vpop.f32.mrb[0].mxu0
  %v2940 = vadd.f32 %v2663, %v2939
  %v2941 = vpop.f32.mrb[0].mxu0
  %2942 = vmatprep.mubr.f32.mxu0 0.0
  %v2943 = vand.u32 %v2506, 4294901760
  %2944 = vmatmul.mubr.f32.gmra.mrb[0].mxu0 %v2943
  %v2945 = vpop.f32.mrb[0].mxu0
  %v2946 = vadd.f32 %v2673, %v2945
  %v2947 = vpop.f32.mrb[0].mxu0
  %2948 = vmatprep.mubr.f32.mxu0 0.0
  %v2949 = vand.u32 %v2507, 4294901760
  %2950 = vmatmul.mubr.f32.gmra.mrb[0].mxu0 %v2949
  %v2951 = vpop.f32.mrb[0].mxu0
  %v2952 = vadd.f32 %v2683, %v2951
  %v2953 = vpop.f32.mrb[0].mxu0
  %2954 = vmatprep.mubr.f32.mxu0 0.0
  %v2955 = vand.u32 %v2508, 4294901760
  %2956 = vmatmul.mubr.f32.gmra.mrb[0].mxu0 %v2955
  %v2957 = vpop.f32.mrb[0].mxu0
  %v2958 = vadd.f32 %v2693, %v2957
  %v2959 = vpop.f32.mrb[0].mxu0
  %2960 = vmatprep.mubr.f32.mxu0 0.0
  %v2961 = vand.u32 %v2509, 4294901760
  %2962 = vmatmul.mubr.f32.gmra.mrb[0].mxu0 %v2961
  %v2963 = vpop.f32.mrb[0].mxu0
  %v2964 = vadd.f32 %v2703, %v2963
  %v2965 = vpop.f32.mrb[0].mxu0
  %2966 = vmatprep.mubr.f32.mxu0 0.0
  %v2967 = vand.u32 %v2510, 4294901760
  %2968 = vmatmul.mubr.f32.gmra.mrb[0].mxu0 %v2967
  %v2969 = vpop.f32.mrb[0].mxu0
  %v2970 = vadd.f32 %v2713, %v2969
  %v2971 = vpop.f32.mrb[0].mxu0
  %2972 = vmatprep.mubr.f32.mxu0 0.0
  %v2973 = vand.u32 %v2511, 4294901760
  %2974 = vmatmul.mubr.f32.gmra.mrb[0].mxu0 %v2973
  %v2975 = vpop.f32.mrb[0].mxu0
  %v2976 = vadd.f32 %v2723, %v2975
  %v2977 = vpop.f32.mrb[0].mxu0
  %2978 = vmatprep.mubr.f32.mxu0 0.0
  %v2979 = vand.u32 %v2512, 4294901760
  %2980 = vmatmul.mubr.f32.gmra.mrb[0].mxu0 %v2979
  %v2981 = vpop.f32.mrb[0].mxu0
  %v2982 = vadd.f32 %v2733, %v2981
  %v2983 = vpop.f32.mrb[0].mxu0
  %2984 = vmatprep.mubr.f32.mxu0 0.0
  %v2985 = vand.u32 %v2513, 4294901760
  %2986 = vmatmul.mubr.f32.gmra.mrb[0].mxu0 %v2985
  %v2987 = vpop.f32.mrb[0].mxu0
  %v2988 = vadd.f32 %v2743, %v2987
  %v2989 = vpop.f32.mrb[0].mxu0
  %2990 = vmatprep.mubr.f32.mxu0 0.0
  %v2991 = vand.u32 %v2514, 4294901760
  %2992 = vmatmul.mubr.f32.gmra.mrb[0].mxu0 %v2991
  %v2993 = vpop.f32.mrb[0].mxu0
  %v2994 = vadd.f32 %v2753, %v2993
  %v2995 = vpop.f32.mrb[0].mxu0
  %2996 = vdwg.mxu0
  %2997 = vmatprep.subr.mxu0 0.0
  %v2998 = vand.u32 %v36, 4294901760
  %v2999 = vsub.f32 %v36, %v2998
  %3000 = vmatpush1.msra.mxu0 %v2999
  %3001 = vmatprep.subr.mxu0 0.0
  %v3002 = vand.u32 %v37, 4294901760
  %v3003 = vsub.f32 %v37, %v3002
  %3004 = vmatpush1.msra.mxu0 %v3003
  %3005 = vmatprep.subr.mxu0 0.0
  %v3006 = vand.u32 %v38, 4294901760
  %v3007 = vsub.f32 %v38, %v3006
  %3008 = vmatpush1.msra.mxu0 %v3007
  %3009 = vmatprep.subr.mxu0 0.0
  %v3010 = vand.u32 %v39, 4294901760
  %v3011 = vsub.f32 %v39, %v3010
  %3012 = vmatpush1.msra.mxu0 %v3011
  %3013 = vmatprep.subr.mxu0 0.0
  %v3014 = vand.u32 %v40, 4294901760
  %v3015 = vsub.f32 %v40, %v3014
  %3016 = vmatpush1.msra.mxu0 %v3015
  %3017 = vmatprep.subr.mxu0 0.0
  %v3018 = vand.u32 %v41, 4294901760
  %v3019 = vsub.f32 %v41, %v3018
  %3020 = vmatpush1.msra.mxu0 %v3019
  %3021 = vmatprep.subr.mxu0 0.0
  %v3022 = vand.u32 %v42, 4294901760
  %v3023 = vsub.f32 %v42, %v3022
  %3024 = vmatpush1.msra.mxu0 %v3023
  %3025 = vmatprep.subr.mxu0 0.0
  %v3026 = vand.u32 %v43, 4294901760
  %v3027 = vsub.f32 %v43, %v3026
  %3028 = vmatpush1.msra.mxu0 %v3027
  %3029 = vmatprep.subr.mxu0 0.0
  %v3030 = vand.u32 %v44, 4294901760
  %v3031 = vsub.f32 %v44, %v3030
  %3032 = vmatpush1.msra.mxu0 %v3031
  %3033 = vmatprep.subr.mxu0 0.0
  %v3034 = vand.u32 %v45, 4294901760
  %v3035 = vsub.f32 %v45, %v3034
  %3036 = vmatpush1.msra.mxu0 %v3035
  %3037 = vmatprep.subr.mxu0 0.0
  %v3038 = vand.u32 %v46, 4294901760
  %v3039 = vsub.f32 %v46, %v3038
  %3040 = vmatpush1.msra.mxu0 %v3039
  %3041 = vmatprep.subr.mxu0 0.0
  %v3042 = vand.u32 %v47, 4294901760
  %v3043 = vsub.f32 %v47, %v3042
  %3044 = vmatpush1.msra.mxu0 %v3043
  %3045 = vmatprep.subr.mxu0 0.0
  %v3046 = vand.u32 %v48, 4294901760
  %v3047 = vsub.f32 %v48, %v3046
  %3048 = vmatpush1.msra.mxu0 %v3047
  %3049 = vmatprep.subr.mxu0 0.0
  %v3050 = vand.u32 %v49, 4294901760
  %v3051 = vsub.f32 %v49, %v3050
  %3052 = vmatpush1.msra.mxu0 %v3051
  %3053 = vmatprep.subr.mxu0 0.0
  %v3054 = vand.u32 %v50, 4294901760
  %v3055 = vsub.f32 %v50, %v3054
  %3056 = vmatpush1.msra.mxu0 %v3055
  %3057 = vmatprep.subr.mxu0 0.0
  %v3058 = vand.u32 %v51, 4294901760
  %v3059 = vsub.f32 %v51, %v3058
  %3060 = vmatpush1.msra.mxu0 %v3059
  %3061 = vmatprep.subr.mxu0 0.0
  %3062 = vmatpush1.msra.mxu0 0.0
  %3063 = vmatprep.subr.mxu0 0.0
  %3064 = vmatpush1.msra.mxu0 0.0
  %3065 = vmatprep.subr.mxu0 0.0
  %3066 = vmatpush1.msra.mxu0 0.0
  %3067 = vmatprep.subr.mxu0 0.0
  %3068 = vmatpush1.msra.mxu0 0.0
  %3069 = vmatprep.subr.mxu0 0.0
  %3070 = vmatpush1.msra.mxu0 0.0
  %3071 = vmatprep.subr.mxu0 0.0
  %3072 = vmatpush1.msra.mxu0 0.0
  %3073 = vmatprep.subr.mxu0 0.0
  %3074 = vmatpush1.msra.mxu0 0.0
  %3075 = vmatprep.subr.mxu0 0.0
  %3076 = vmatpush1.msra.mxu0 0.0
  %3077 = vmatprep.subr.mxu0 0.0
  %3078 = vmatpush1.msra.mxu0 0.0
  %3079 = vmatprep.subr.mxu0 0.0
  %3080 = vmatpush1.msra.mxu0 0.0
  %3081 = vmatprep.subr.mxu0 0.0
  %3082 = vmatpush1.msra.mxu0 0.0
  %3083 = vmatprep.subr.mxu0 0.0
  %3084 = vmatpush1.msra.mxu0 0.0
  %3085 = vmatprep.subr.mxu0 0.0
  %3086 = vmatpush1.msra.mxu0 0.0
  %3087 = vmatprep.subr.mxu0 0.0
  %3088 = vmatpush1.msra.mxu0 0.0
  %3089 = vmatprep.subr.mxu0 0.0
  %3090 = vmatpush1.msra.mxu0 0.0
  %3091 = vmatprep.subr.mxu0 0.0
  %3092 = vmatpush1.msra.mxu0 0.0
  %3093 = vmatprep.mubr.f32.mxu0 0.0
  %v3094 = vand.u32 %v2499, 4294901760
  %v3095 = vsub.f32 %v2499, %v3094
  %3096 = vmatmul.mubr.f32.gmra.mrb[0].mxu0 %v3095
  %v3097 = vpop.f32.mrb[0].mxu0
  %v3098 = vadd.f32 %v2904, %v3097
  %v3099 = vpop.f32.mrb[0].mxu0
  %3100 = vmatprep.mubr.f32.mxu0 0.0
  %v3101 = vand.u32 %v2500, 4294901760
  %v3102 = vsub.f32 %v2500, %v3101
  %3103 = vmatmul.mubr.f32.gmra.mrb[0].mxu0 %v3102
  %v3104 = vpop.f32.mrb[0].mxu0
  %v3105 = vadd.f32 %v2910, %v3104
  %v3106 = vpop.f32.mrb[0].mxu0
  %3107 = vmatprep.mubr.f32.mxu0 0.0
  %v3108 = vand.u32 %v2501, 4294901760
  %v3109 = vsub.f32 %v2501, %v3108
  %3110 = vmatmul.mubr.f32.gmra.mrb[0].mxu0 %v3109
  %v3111 = vpop.f32.mrb[0].mxu0
  %v3112 = vadd.f32 %v2916, %v3111
  %v3113 = vpop.f32.mrb[0].mxu0
  %3114 = vmatprep.mubr.f32.mxu0 0.0
  %v3115 = vand.u32 %v2502, 4294901760
  %v3116 = vsub.f32 %v2502, %v3115
  %3117 = vmatmul.mubr.f32.gmra.mrb[0].mxu0 %v3116
  %v3118 = vpop.f32.mrb[0].mxu0
  %v3119 = vadd.f32 %v2922, %v3118
  %v3120 = vpop.f32.mrb[0].mxu0
  %3121 = vmatprep.mubr.f32.mxu0 0.0
  %v3122 = vand.u32 %v2503, 4294901760
  %v3123 = vsub.f32 %v2503, %v3122
  %3124 = vmatmul.mubr.f32.gmra.mrb[0].mxu0 %v3123
  %v3125 = vpop.f32.mrb[0].mxu0
  %v3126 = vadd.f32 %v2928, %v3125
  %v3127 = vpop.f32.mrb[0].mxu0
  %3128 = vmatprep.mubr.f32.mxu0 0.0
  %v3129 = vand.u32 %v2504, 4294901760
  %v3130 = vsub.f32 %v2504, %v3129
  %3131 = vmatmul.mubr.f32.gmra.mrb[0].mxu0 %v3130
  %v3132 = vpop.f32.mrb[0].mxu0
  %v3133 = vadd.f32 %v2934, %v3132
  %v3134 = vpop.f32.mrb[0].mxu0
  %3135 = vmatprep.mubr.f32.mxu0 0.0
  %v3136 = vand.u32 %v2505, 4294901760
  %v3137 = vsub.f32 %v2505, %v3136
  %3138 = vmatmul.mubr.f32.gmra.mrb[0].mxu0 %v3137
  %v3139 = vpop.f32.mrb[0].mxu0
  %v3140 = vadd.f32 %v2940, %v3139
  %v3141 = vpop.f32.mrb[0].mxu0
  %3142 = vmatprep.mubr.f32.mxu0 0.0
  %v3143 = vand.u32 %v2506, 4294901760
  %v3144 = vsub.f32 %v2506, %v3143
  %3145 = vmatmul.mubr.f32.gmra.mrb[0].mxu0 %v3144
  %v3146 = vpop.f32.mrb[0].mxu0
  %v3147 = vadd.f32 %v2946, %v3146
  %v3148 = vpop.f32.mrb[0].mxu0
  %3149 = vmatprep.mubr.f32.mxu0 0.0
  %v3150 = vand.u32 %v2507, 4294901760
  %v3151 = vsub.f32 %v2507, %v3150
  %3152 = vmatmul.mubr.f32.gmra.mrb[0].mxu0 %v3151
  %v3153 = vpop.f32.mrb[0].mxu0
  %v3154 = vadd.f32 %v2952, %v3153
  %v3155 = vpop.f32.mrb[0].mxu0
  %3156 = vmatprep.mubr.f32.mxu0 0.0
  %v3157 = vand.u32 %v2508, 4294901760
  %v3158 = vsub.f32 %v2508, %v3157
  %3159 = vmatmul.mubr.f32.gmra.mrb[0].mxu0 %v3158
  %v3160 = vpop.f32.mrb[0].mxu0
  %v3161 = vadd.f32 %v2958, %v3160
  %v3162 = vpop.f32.mrb[0].mxu0
  %3163 = vmatprep.mubr.f32.mxu0 0.0
  %v3164 = vand.u32 %v2509, 4294901760
  %v3165 = vsub.f32 %v2509, %v3164
  %3166 = vmatmul.mubr.f32.gmra.mrb[0].mxu0 %v3165
  %v3167 = vpop.f32.mrb[0].mxu0
  %v3168 = vadd.f32 %v2964, %v3167
  %v3169 = vpop.f32.mrb[0].mxu0
  %3170 = vmatprep.mubr.f32.mxu0 0.0
  %v3171 = vand.u32 %v2510, 4294901760
  %v3172 = vsub.f32 %v2510, %v3171
  %3173 = vmatmul.mubr.f32.gmra.mrb[0].mxu0 %v3172
  %v3174 = vpop.f32.mrb[0].mxu0
  %v3175 = vadd.f32 %v2970, %v3174
  %v3176 = vpop.f32.mrb[0].mxu0
  %3177 = vmatprep.mubr.f32.mxu0 0.0
  %v3178 = vand.u32 %v2511, 4294901760
  %v3179 = vsub.f32 %v2511, %v3178
  %3180 = vmatmul.mubr.f32.gmra.mrb[0].mxu0 %v3179
  %v3181 = vpop.f32.mrb[0].mxu0
  %v3182 = vadd.f32 %v2976, %v3181
  %v3183 = vpop.f32.mrb[0].mxu0
  %3184 = vmatprep.mubr.f32.mxu0 0.0
  %v3185 = vand.u32 %v2512, 4294901760
  %v3186 = vsub.f32 %v2512, %v3185
  %3187 = vmatmul.mubr.f32.gmra.mrb[0].mxu0 %v3186
  %v3188 = vpop.f32.mrb[0].mxu0
  %v3189 = vadd.f32 %v2982, %v3188
  %v3190 = vpop.f32.mrb[0].mxu0
  %3191 = vmatprep.mubr.f32.mxu0 0.0
  %v3192 = vand.u32 %v2513, 4294901760
  %v3193 = vsub.f32 %v2513, %v3192
  %3194 = vmatmul.mubr.f32.gmra.mrb[0].mxu0 %v3193
  %v3195 = vpop.f32.mrb[0].mxu0
  %v3196 = vadd.f32 %v2988, %v3195
  %v3197 = vpop.f32.mrb[0].mxu0
  %3198 = vmatprep.mubr.f32.mxu0 0.0
  %v3199 = vand.u32 %v2514, 4294901760
  %v3200 = vsub.f32 %v2514, %v3199
  %3201 = vmatmul.mubr.f32.gmra.mrb[0].mxu0 %v3200
  %v3202 = vpop.f32.mrb[0].mxu0
  %v3203 = vadd.f32 %v2994, %v3202
  %v3204 = vpop.f32.mrb[0].mxu0
  %3205 = vdwg.mxu0
  %3206 = vmatprep.subr.mxu0 0.0
  %v3207 = vand.u32 %v36, 4294901760
  %3208 = vmatpush1.msra.mxu0 %v3207
  %3209 = vmatprep.subr.mxu0 0.0
  %v3210 = vand.u32 %v37, 4294901760
  %3211 = vmatpush1.msra.mxu0 %v3210
  %3212 = vmatprep.subr.mxu0 0.0
  %v3213 = vand.u32 %v38, 4294901760
  %3214 = vmatpush1.msra.mxu0 %v3213
  %3215 = vmatprep.subr.mxu0 0.0
  %v3216 = vand.u32 %v39, 4294901760
  %3217 = vmatpush1.msra.mxu0 %v3216
  %3218 = vmatprep.subr.mxu0 0.0
  %v3219 = vand.u32 %v40, 4294901760
  %3220 = vmatpush1.msra.mxu0 %v3219
  %3221 = vmatprep.subr.mxu0 0.0
  %v3222 = vand.u32 %v41, 4294901760
  %3223 = vmatpush1.msra.mxu0 %v3222
  %3224 = vmatprep.subr.mxu0 0.0
  %v3225 = vand.u32 %v42, 4294901760
  %3226 = vmatpush1.msra.mxu0 %v3225
  %3227 = vmatprep.subr.mxu0 0.0
  %v3228 = vand.u32 %v43, 4294901760
  %3229 = vmatpush1.msra.mxu0 %v3228
  %3230 = vmatprep.subr.mxu0 0.0
  %v3231 = vand.u32 %v44, 4294901760
  %3232 = vmatpush1.msra.mxu0 %v3231
  %3233 = vmatprep.subr.mxu0 0.0
  %v3234 = vand.u32 %v45, 4294901760
  %3235 = vmatpush1.msra.mxu0 %v3234
  %3236 = vmatprep.subr.mxu0 0.0
  %v3237 = vand.u32 %v46, 4294901760
  %3238 = vmatpush1.msra.mxu0 %v3237
  %3239 = vmatprep.subr.mxu0 0.0
  %v3240 = vand.u32 %v47, 4294901760
  %3241 = vmatpush1.msra.mxu0 %v3240
  %3242 = vmatprep.subr.mxu0 0.0
  %v3243 = vand.u32 %v48, 4294901760
  %3244 = vmatpush1.msra.mxu0 %v3243
  %3245 = vmatprep.subr.mxu0 0.0
  %v3246 = vand.u32 %v49, 4294901760
  %3247 = vmatpush1.msra.mxu0 %v3246
  %3248 = vmatprep.subr.mxu0 0.0
  %v3249 = vand.u32 %v50, 4294901760
  %3250 = vmatpush1.msra.mxu0 %v3249
  %3251 = vmatprep.subr.mxu0 0.0
  %v3252 = vand.u32 %v51, 4294901760
  %3253 = vmatpush1.msra.mxu0 %v3252
  %3254 = vmatprep.subr.mxu0 0.0
  %3255 = vmatpush1.msra.mxu0 0.0
  %3256 = vmatprep.subr.mxu0 0.0
  %3257 = vmatpush1.msra.mxu0 0.0
  %3258 = vmatprep.subr.mxu0 0.0
  %3259 = vmatpush1.msra.mxu0 0.0
  %3260 = vmatprep.subr.mxu0 0.0
  %3261 = vmatpush1.msra.mxu0 0.0
  %3262 = vmatprep.subr.mxu0 0.0
  %3263 = vmatpush1.msra.mxu0 0.0
  %3264 = vmatprep.subr.mxu0 0.0
  %3265 = vmatpush1.msra.mxu0 0.0
  %3266 = vmatprep.subr.mxu0 0.0
  %3267 = vmatpush1.msra.mxu0 0.0
  %3268 = vmatprep.subr.mxu0 0.0
  %3269 = vmatpush1.msra.mxu0 0.0
  %3270 = vmatprep.subr.mxu0 0.0
  %3271 = vmatpush1.msra.mxu0 0.0
  %3272 = vmatprep.subr.mxu0 0.0
  %3273 = vmatpush1.msra.mxu0 0.0
  %3274 = vmatprep.subr.mxu0 0.0
  %3275 = vmatpush1.msra.mxu0 0.0
  %3276 = vmatprep.subr.mxu0 0.0
  %3277 = vmatpush1.msra.mxu0 0.0
  %3278 = vmatprep.subr.mxu0 0.0
  %3279 = vmatpush1.msra.mxu0 0.0
  %3280 = vmatprep.subr.mxu0 0.0
  %3281 = vmatpush1.msra.mxu0 0.0
  %3282 = vmatprep.subr.mxu0 0.0
  %3283 = vmatpush1.msra.mxu0 0.0
  %3284 = vmatprep.subr.mxu0 0.0
  %3285 = vmatpush1.msra.mxu0 0.0
  %3286 = vmatprep.mubr.f32.mxu0 0.0
  %v3287 = vand.u32 %v2499, 4294901760
  %v3288 = vsub.f32 %v2499, %v3287
  %v3289 = vand.u32 %v3288, 4294901760
  %3290 = vmatmul.mubr.f32.gmra.mrb[0].mxu0 %v3289
  %v3291 = vpop.f32.mrb[0].mxu0
  %v3292 = vadd.f32 %v3098, %v3291
  %v3293 = vpop.f32.mrb[0].mxu0
  %3294 = vmatprep.mubr.f32.mxu0 0.0
  %v3295 = vand.u32 %v2500, 4294901760
  %v3296 = vsub.f32 %v2500, %v3295
  %v3297 = vand.u32 %v3296, 4294901760
  %3298 = vmatmul.mubr.f32.gmra.mrb[0].mxu0 %v3297
  %v3299 = vpop.f32.mrb[0].mxu0
  %v3300 = vadd.f32 %v3105, %v3299
  %v3301 = vpop.f32.mrb[0].mxu0
  %3302 = vmatprep.mubr.f32.mxu0 0.0
  %v3303 = vand.u32 %v2501, 4294901760
  %v3304 = vsub.f32 %v2501, %v3303
  %v3305 = vand.u32 %v3304, 4294901760
  %3306 = vmatmul.mubr.f32.gmra.mrb[0].mxu0 %v3305
  %v3307 = vpop.f32.mrb[0].mxu0
  %v3308 = vadd.f32 %v3112, %v3307
  %v3309 = vpop.f32.mrb[0].mxu0
  %3310 = vmatprep.mubr.f32.mxu0 0.0
  %v3311 = vand.u32 %v2502, 4294901760
  %v3312 = vsub.f32 %v2502, %v3311
  %v3313 = vand.u32 %v3312, 4294901760
  %3314 = vmatmul.mubr.f32.gmra.mrb[0].mxu0 %v3313
  %v3315 = vpop.f32.mrb[0].mxu0
  %v3316 = vadd.f32 %v3119, %v3315
  %v3317 = vpop.f32.mrb[0].mxu0
  %3318 = vmatprep.mubr.f32.mxu0 0.0
  %v3319 = vand.u32 %v2503, 4294901760
  %v3320 = vsub.f32 %v2503, %v3319
  %v3321 = vand.u32 %v3320, 4294901760
  %3322 = vmatmul.mubr.f32.gmra.mrb[0].mxu0 %v3321
  %v3323 = vpop.f32.mrb[0].mxu0
  %v3324 = vadd.f32 %v3126, %v3323
  %v3325 = vpop.f32.mrb[0].mxu0
  %3326 = vmatprep.mubr.f32.mxu0 0.0
  %v3327 = vand.u32 %v2504, 4294901760
  %v3328 = vsub.f32 %v2504, %v3327
  %v3329 = vand.u32 %v3328, 4294901760
  %3330 = vmatmul.mubr.f32.gmra.mrb[0].mxu0 %v3329
  %v3331 = vpop.f32.mrb[0].mxu0
  %v3332 = vadd.f32 %v3133, %v3331
  %v3333 = vpop.f32.mrb[0].mxu0
  %3334 = vmatprep.mubr.f32.mxu0 0.0
  %v3335 = vand.u32 %v2505, 4294901760
  %v3336 = vsub.f32 %v2505, %v3335
  %v3337 = vand.u32 %v3336, 4294901760
  %3338 = vmatmul.mubr.f32.gmra.mrb[0].mxu0 %v3337
  %v3339 = vpop.f32.mrb[0].mxu0
  %v3340 = vadd.f32 %v3140, %v3339
  %v3341 = vpop.f32.mrb[0].mxu0
  %3342 = vmatprep.mubr.f32.mxu0 0.0
  %v3343 = vand.u32 %v2506, 4294901760
  %v3344 = vsub.f32 %v2506, %v3343
  %v3345 = vand.u32 %v3344, 4294901760
  %3346 = vmatmul.mubr.f32.gmra.mrb[0].mxu0 %v3345
  %v3347 = vpop.f32.mrb[0].mxu0
  %v3348 = vadd.f32 %v3147, %v3347
  %v3349 = vpop.f32.mrb[0].mxu0
  %3350 = vmatprep.mubr.f32.mxu0 0.0
  %v3351 = vand.u32 %v2507, 4294901760
  %v3352 = vsub.f32 %v2507, %v3351
  %v3353 = vand.u32 %v3352, 4294901760
  %3354 = vmatmul.mubr.f32.gmra.mrb[0].mxu0 %v3353
  %v3355 = vpop.f32.mrb[0].mxu0
  %v3356 = vadd.f32 %v3154, %v3355
  %v3357 = vpop.f32.mrb[0].mxu0
  %3358 = vmatprep.mubr.f32.mxu0 0.0
  %v3359 = vand.u32 %v2508, 4294901760
  %v3360 = vsub.f32 %v2508, %v3359
  %v3361 = vand.u32 %v3360, 4294901760
  %3362 = vmatmul.mubr.f32.gmra.mrb[0].mxu0 %v3361
  %v3363 = vpop.f32.mrb[0].mxu0
  %v3364 = vadd.f32 %v3161, %v3363
  %v3365 = vpop.f32.mrb[0].mxu0
  %3366 = vmatprep.mubr.f32.mxu0 0.0
  %v3367 = vand.u32 %v2509, 4294901760
  %v3368 = vsub.f32 %v2509, %v3367
  %v3369 = vand.u32 %v3368, 4294901760
  %3370 = vmatmul.mubr.f32.gmra.mrb[0].mxu0 %v3369
  %v3371 = vpop.f32.mrb[0].mxu0
  %v3372 = vadd.f32 %v3168, %v3371
  %v3373 = vpop.f32.mrb[0].mxu0
  %3374 = vmatprep.mubr.f32.mxu0 0.0
  %v3375 = vand.u32 %v2510, 4294901760
  %v3376 = vsub.f32 %v2510, %v3375
  %v3377 = vand.u32 %v3376, 4294901760
  %3378 = vmatmul.mubr.f32.gmra.mrb[0].mxu0 %v3377
  %v3379 = vpop.f32.mrb[0].mxu0
  %v3380 = vadd.f32 %v3175, %v3379
  %v3381 = vpop.f32.mrb[0].mxu0
  %3382 = vmatprep.mubr.f32.mxu0 0.0
  %v3383 = vand.u32 %v2511, 4294901760
  %v3384 = vsub.f32 %v2511, %v3383
  %v3385 = vand.u32 %v3384, 4294901760
  %3386 = vmatmul.mubr.f32.gmra.mrb[0].mxu0 %v3385
  %v3387 = vpop.f32.mrb[0].mxu0
  %v3388 = vadd.f32 %v3182, %v3387
  %v3389 = vpop.f32.mrb[0].mxu0
  %3390 = vmatprep.mubr.f32.mxu0 0.0
  %v3391 = vand.u32 %v2512, 4294901760
  %v3392 = vsub.f32 %v2512, %v3391
  %v3393 = vand.u32 %v3392, 4294901760
  %3394 = vmatmul.mubr.f32.gmra.mrb[0].mxu0 %v3393
  %v3395 = vpop.f32.mrb[0].mxu0
  %v3396 = vadd.f32 %v3189, %v3395
  %v3397 = vpop.f32.mrb[0].mxu0
  %3398 = vmatprep.mubr.f32.mxu0 0.0
  %v3399 = vand.u32 %v2513, 4294901760
  %v3400 = vsub.f32 %v2513, %v3399
  %v3401 = vand.u32 %v3400, 4294901760
  %3402 = vmatmul.mubr.f32.gmra.mrb[0].mxu0 %v3401
  %v3403 = vpop.f32.mrb[0].mxu0
  %v3404 = vadd.f32 %v3196, %v3403
  %v3405 = vpop.f32.mrb[0].mxu0
  %3406 = vmatprep.mubr.f32.mxu0 0.0
  %v3407 = vand.u32 %v2514, 4294901760
  %v3408 = vsub.f32 %v2514, %v3407
  %v3409 = vand.u32 %v3408, 4294901760
  %3410 = vmatmul.mubr.f32.gmra.mrb[0].mxu0 %v3409
  %v3411 = vpop.f32.mrb[0].mxu0
  %v3412 = vadd.f32 %v3203, %v3411
  %v3413 = vpop.f32.mrb[0].mxu0
  %3414 = vdwg.mxu0
  %3415 = vmatprep.subr.mxu0 0.0
  %v3416 = vand.u32 %v36, 4294901760
  %v3417 = vsub.f32 %v36, %v3416
  %v3418 = vand.u32 %v3417, 4294901760
  %3419 = vmatpush1.msra.mxu0 %v3418
  %3420 = vmatprep.subr.mxu0 0.0
  %v3421 = vand.u32 %v37, 4294901760
  %v3422 = vsub.f32 %v37, %v3421
  %v3423 = vand.u32 %v3422, 4294901760
  %3424 = vmatpush1.msra.mxu0 %v3423
  %3425 = vmatprep.subr.mxu0 0.0
  %v3426 = vand.u32 %v38, 4294901760
  %v3427 = vsub.f32 %v38, %v3426
  %v3428 = vand.u32 %v3427, 4294901760
  %3429 = vmatpush1.msra.mxu0 %v3428
  %3430 = vmatprep.subr.mxu0 0.0
  %v3431 = vand.u32 %v39, 4294901760
  %v3432 = vsub.f32 %v39, %v3431
  %v3433 = vand.u32 %v3432, 4294901760
  %3434 = vmatpush1.msra.mxu0 %v3433
  %3435 = vmatprep.subr.mxu0 0.0
  %v3436 = vand.u32 %v40, 4294901760
  %v3437 = vsub.f32 %v40, %v3436
  %v3438 = vand.u32 %v3437, 4294901760
  %3439 = vmatpush1.msra.mxu0 %v3438
  %3440 = vmatprep.subr.mxu0 0.0
  %v3441 = vand.u32 %v41, 4294901760
  %v3442 = vsub.f32 %v41, %v3441
  %v3443 = vand.u32 %v3442, 4294901760
  %3444 = vmatpush1.msra.mxu0 %v3443
  %3445 = vmatprep.subr.mxu0 0.0
  %v3446 = vand.u32 %v42, 4294901760
  %v3447 = vsub.f32 %v42, %v3446
  %v3448 = vand.u32 %v3447, 4294901760
  %3449 = vmatpush1.msra.mxu0 %v3448
  %3450 = vmatprep.subr.mxu0 0.0
  %v3451 = vand.u32 %v43, 4294901760
  %v3452 = vsub.f32 %v43, %v3451
  %v3453 = vand.u32 %v3452, 4294901760
  %3454 = vmatpush1.msra.mxu0 %v3453
  %3455 = vmatprep.subr.mxu0 0.0
  %v3456 = vand.u32 %v44, 4294901760
  %v3457 = vsub.f32 %v44, %v3456
  %v3458 = vand.u32 %v3457, 4294901760
  %3459 = vmatpush1.msra.mxu0 %v3458
  %3460 = vmatprep.subr.mxu0 0.0
  %v3461 = vand.u32 %v45, 4294901760
  %v3462 = vsub.f32 %v45, %v3461
  %v3463 = vand.u32 %v3462, 4294901760
  %3464 = vmatpush1.msra.mxu0 %v3463
  %3465 = vmatprep.subr.mxu0 0.0
  %v3466 = vand.u32 %v46, 4294901760
  %v3467 = vsub.f32 %v46, %v3466
  %v3468 = vand.u32 %v3467, 4294901760
  %3469 = vmatpush1.msra.mxu0 %v3468
  %3470 = vmatprep.subr.mxu0 0.0
  %v3471 = vand.u32 %v47, 4294901760
  %v3472 = vsub.f32 %v47, %v3471
  %v3473 = vand.u32 %v3472, 4294901760
  %3474 = vmatpush1.msra.mxu0 %v3473
  %3475 = vmatprep.subr.mxu0 0.0
  %v3476 = vand.u32 %v48, 4294901760
  %v3477 = vsub.f32 %v48, %v3476
  %v3478 = vand.u32 %v3477, 4294901760
  %3479 = vmatpush1.msra.mxu0 %v3478
  %3480 = vmatprep.subr.mxu0 0.0
  %v3481 = vand.u32 %v49, 4294901760
  %v3482 = vsub.f32 %v49, %v3481
  %v3483 = vand.u32 %v3482, 4294901760
  %3484 = vmatpush1.msra.mxu0 %v3483
  %3485 = vmatprep.subr.mxu0 0.0
  %v3486 = vand.u32 %v50, 4294901760
  %v3487 = vsub.f32 %v50, %v3486
  %v3488 = vand.u32 %v3487, 4294901760
  %3489 = vmatpush1.msra.mxu0 %v3488
  %3490 = vmatprep.subr.mxu0 0.0
  %v3491 = vand.u32 %v51, 4294901760
  %v3492 = vsub.f32 %v51, %v3491
  %v3493 = vand.u32 %v3492, 4294901760
  %3494 = vmatpush1.msra.mxu0 %v3493
  %3495 = vmatprep.subr.mxu0 0.0
  %3496 = vmatpush1.msra.mxu0 0.0
  %3497 = vmatprep.subr.mxu0 0.0
  %3498 = vmatpush1.msra.mxu0 0.0
  %3499 = vmatprep.subr.mxu0 0.0
  %3500 = vmatpush1.msra.mxu0 0.0
  %3501 = vmatprep.subr.mxu0 0.0
  %3502 = vmatpush1.msra.mxu0 0.0
  %3503 = vmatprep.subr.mxu0 0.0
  %3504 = vmatpush1.msra.mxu0 0.0
  %3505 = vmatprep.subr.mxu0 0.0
  %3506 = vmatpush1.msra.mxu0 0.0
  %3507 = vmatprep.subr.mxu0 0.0
  %3508 = vmatpush1.msra.mxu0 0.0
  %3509 = vmatprep.subr.mxu0 0.0
  %3510 = vmatpush1.msra.mxu0 0.0
  %3511 = vmatprep.subr.mxu0 0.0
  %3512 = vmatpush1.msra.mxu0 0.0
  %3513 = vmatprep.subr.mxu0 0.0
  %3514 = vmatpush1.msra.mxu0 0.0
  %3515 = vmatprep.subr.mxu0 0.0
  %3516 = vmatpush1.msra.mxu0 0.0
  %3517 = vmatprep.subr.mxu0 0.0
  %3518 = vmatpush1.msra.mxu0 0.0
  %3519 = vmatprep.subr.mxu0 0.0
  %3520 = vmatpush1.msra.mxu0 0.0
  %3521 = vmatprep.subr.mxu0 0.0
  %3522 = vmatpush1.msra.mxu0 0.0
  %3523 = vmatprep.subr.mxu0 0.0
  %3524 = vmatpush1.msra.mxu0 0.0
  %3525 = vmatprep.subr.mxu0 0.0
  %3526 = vmatpush1.msra.mxu0 0.0
  %3527 = vmatprep.mubr.f32.mxu0 0.0
  %v3528 = vand.u32 %v2499, 4294901760
  %3529 = vmatmul.mubr.f32.gmra.mrb[0].mxu0 %v3528
  %v3530 = vpop.f32.mrb[0].mxu0
  %v3531 = vadd.f32 %v3292, %v3530
  %v3532 = vpop.f32.mrb[0].mxu0
  %3533 = vmatprep.mubr.f32.mxu0 0.0
  %v3534 = vand.u32 %v2500, 4294901760
  %3535 = vmatmul.mubr.f32.gmra.mrb[0].mxu0 %v3534
  %v3536 = vpop.f32.mrb[0].mxu0
  %v3537 = vadd.f32 %v3300, %v3536
  %v3538 = vpop.f32.mrb[0].mxu0
  %3539 = vmatprep.mubr.f32.mxu0 0.0
  %v3540 = vand.u32 %v2501, 4294901760
  %3541 = vmatmul.mubr.f32.gmra.mrb[0].mxu0 %v3540
  %v3542 = vpop.f32.mrb[0].mxu0
  %v3543 = vadd.f32 %v3308, %v3542
  %v3544 = vpop.f32.mrb[0].mxu0
  %3545 = vmatprep.mubr.f32.mxu0 0.0
  %v3546 = vand.u32 %v2502, 4294901760
  %3547 = vmatmul.mubr.f32.gmra.mrb[0].mxu0 %v3546
  %v3548 = vpop.f32.mrb[0].mxu0
  %v3549 = vadd.f32 %v3316, %v3548
  %v3550 = vpop.f32.mrb[0].mxu0
  %3551 = vmatprep.mubr.f32.mxu0 0.0
  %v3552 = vand.u32 %v2503, 4294901760
  %3553 = vmatmul.mubr.f32.gmra.mrb[0].mxu0 %v3552
  %v3554 = vpop.f32.mrb[0].mxu0
  %v3555 = vadd.f32 %v3324, %v3554
  %v3556 = vpop.f32.mrb[0].mxu0
  %3557 = vmatprep.mubr.f32.mxu0 0.0
  %v3558 = vand.u32 %v2504, 4294901760
  %3559 = vmatmul.mubr.f32.gmra.mrb[0].mxu0 %v3558
  %v3560 = vpop.f32.mrb[0].mxu0
  %v3561 = vadd.f32 %v3332, %v3560
  %v3562 = vpop.f32.mrb[0].mxu0
  %3563 = vmatprep.mubr.f32.mxu0 0.0
  %v3564 = vand.u32 %v2505, 4294901760
  %3565 = vmatmul.mubr.f32.gmra.mrb[0].mxu0 %v3564
  %v3566 = vpop.f32.mrb[0].mxu0
  %v3567 = vadd.f32 %v3340, %v3566
  %v3568 = vpop.f32.mrb[0].mxu0
  %3569 = vmatprep.mubr.f32.mxu0 0.0
  %v3570 = vand.u32 %v2506, 4294901760
  %3571 = vmatmul.mubr.f32.gmra.mrb[0].mxu0 %v3570
  %v3572 = vpop.f32.mrb[0].mxu0
  %v3573 = vadd.f32 %v3348, %v3572
  %v3574 = vpop.f32.mrb[0].mxu0
  %3575 = vmatprep.mubr.f32.mxu0 0.0
  %v3576 = vand.u32 %v2507, 4294901760
  %3577 = vmatmul.mubr.f32.gmra.mrb[0].mxu0 %v3576
  %v3578 = vpop.f32.mrb[0].mxu0
  %v3579 = vadd.f32 %v3356, %v3578
  %v3580 = vpop.f32.mrb[0].mxu0
  %3581 = vmatprep.mubr.f32.mxu0 0.0
  %v3582 = vand.u32 %v2508, 4294901760
  %3583 = vmatmul.mubr.f32.gmra.mrb[0].mxu0 %v3582
  %v3584 = vpop.f32.mrb[0].mxu0
  %v3585 = vadd.f32 %v3364, %v3584
  %v3586 = vpop.f32.mrb[0].mxu0
  %3587 = vmatprep.mubr.f32.mxu0 0.0
  %v3588 = vand.u32 %v2509, 4294901760
  %3589 = vmatmul.mubr.f32.gmra.mrb[0].mxu0 %v3588
  %v3590 = vpop.f32.mrb[0].mxu0
  %v3591 = vadd.f32 %v3372, %v3590
  %v3592 = vpop.f32.mrb[0].mxu0
  %3593 = vmatprep.mubr.f32.mxu0 0.0
  %v3594 = vand.u32 %v2510, 4294901760
  %3595 = vmatmul.mubr.f32.gmra.mrb[0].mxu0 %v3594
  %v3596 = vpop.f32.mrb[0].mxu0
  %v3597 = vadd.f32 %v3380, %v3596
  %v3598 = vpop.f32.mrb[0].mxu0
  %3599 = vmatprep.mubr.f32.mxu0 0.0
  %v3600 = vand.u32 %v2511, 4294901760
  %3601 = vmatmul.mubr.f32.gmra.mrb[0].mxu0 %v3600
  %v3602 = vpop.f32.mrb[0].mxu0
  %v3603 = vadd.f32 %v3388, %v3602
  %v3604 = vpop.f32.mrb[0].mxu0
  %3605 = vmatprep.mubr.f32.mxu0 0.0
  %v3606 = vand.u32 %v2512, 4294901760
  %3607 = vmatmul.mubr.f32.gmra.mrb[0].mxu0 %v3606
  %v3608 = vpop.f32.mrb[0].mxu0
  %v3609 = vadd.f32 %v3396, %v3608
  %v3610 = vpop.f32.mrb[0].mxu0
  %3611 = vmatprep.mubr.f32.mxu0 0.0
  %v3612 = vand.u32 %v2513, 4294901760
  %3613 = vmatmul.mubr.f32.gmra.mrb[0].mxu0 %v3612
  %v3614 = vpop.f32.mrb[0].mxu0
  %v3615 = vadd.f32 %v3404, %v3614
  %v3616 = vpop.f32.mrb[0].mxu0
  %3617 = vmatprep.mubr.f32.mxu0 0.0
  %v3618 = vand.u32 %v2514, 4294901760
  %3619 = vmatmul.mubr.f32.gmra.mrb[0].mxu0 %v3618
  %v3620 = vpop.f32.mrb[0].mxu0
  %v3621 = vadd.f32 %v3412, %v3620
  %v3622 = vpop.f32.mrb[0].mxu0
  %3623 = vdwg.mxu0
  %3624 = vmatprep.subr.mxu0 0.0
  %v3625 = vand.u32 %v36, 4294901760
  %3626 = vmatpush1.msra.mxu0 %v3625
  %3627 = vmatprep.subr.mxu0 0.0
  %v3628 = vand.u32 %v37, 4294901760
  %3629 = vmatpush1.msra.mxu0 %v3628
  %3630 = vmatprep.subr.mxu0 0.0
  %v3631 = vand.u32 %v38, 4294901760
  %3632 = vmatpush1.msra.mxu0 %v3631
  %3633 = vmatprep.subr.mxu0 0.0
  %v3634 = vand.u32 %v39, 4294901760
  %3635 = vmatpush1.msra.mxu0 %v3634
  %3636 = vmatprep.subr.mxu0 0.0
  %v3637 = vand.u32 %v40, 4294901760
  %3638 = vmatpush1.msra.mxu0 %v3637
  %3639 = vmatprep.subr.mxu0 0.0
  %v3640 = vand.u32 %v41, 4294901760
  %3641 = vmatpush1.msra.mxu0 %v3640
  %3642 = vmatprep.subr.mxu0 0.0
  %v3643 = vand.u32 %v42, 4294901760
  %3644 = vmatpush1.msra.mxu0 %v3643
  %3645 = vmatprep.subr.mxu0 0.0
  %v3646 = vand.u32 %v43, 4294901760
  %3647 = vmatpush1.msra.mxu0 %v3646
  %3648 = vmatprep.subr.mxu0 0.0
  %v3649 = vand.u32 %v44, 4294901760
  %3650 = vmatpush1.msra.mxu0 %v3649
  %3651 = vmatprep.subr.mxu0 0.0
  %v3652 = vand.u32 %v45, 4294901760
  %3653 = vmatpush1.msra.mxu0 %v3652
  %3654 = vmatprep.subr.mxu0 0.0
  %v3655 = vand.u32 %v46, 4294901760
  %3656 = vmatpush1.msra.mxu0 %v3655
  %3657 = vmatprep.subr.mxu0 0.0
  %v3658 = vand.u32 %v47, 4294901760
  %3659 = vmatpush1.msra.mxu0 %v3658
  %3660 = vmatprep.subr.mxu0 0.0
  %v3661 = vand.u32 %v48, 4294901760
  %3662 = vmatpush1.msra.mxu0 %v3661
  %3663 = vmatprep.subr.mxu0 0.0
  %v3664 = vand.u32 %v49, 4294901760
  %3665 = vmatpush1.msra.mxu0 %v3664
  %3666 = vmatprep.subr.mxu0 0.0
  %v3667 = vand.u32 %v50, 4294901760
  %3668 = vmatpush1.msra.mxu0 %v3667
  %3669 = vmatprep.subr.mxu0 0.0
  %v3670 = vand.u32 %v51, 4294901760
  %3671 = vmatpush1.msra.mxu0 %v3670
  %3672 = vmatprep.subr.mxu0 0.0
  %3673 = vmatpush1.msra.mxu0 0.0
  %3674 = vmatprep.subr.mxu0 0.0
  %3675 = vmatpush1.msra.mxu0 0.0
  %3676 = vmatprep.subr.mxu0 0.0
  %3677 = vmatpush1.msra.mxu0 0.0
  %3678 = vmatprep.subr.mxu0 0.0
  %3679 = vmatpush1.msra.mxu0 0.0
  %3680 = vmatprep.subr.mxu0 0.0
  %3681 = vmatpush1.msra.mxu0 0.0
  %3682 = vmatprep.subr.mxu0 0.0
  %3683 = vmatpush1.msra.mxu0 0.0
  %3684 = vmatprep.subr.mxu0 0.0
  %3685 = vmatpush1.msra.mxu0 0.0
  %3686 = vmatprep.subr.mxu0 0.0
  %3687 = vmatpush1.msra.mxu0 0.0
  %3688 = vmatprep.subr.mxu0 0.0
  %3689 = vmatpush1.msra.mxu0 0.0
  %3690 = vmatprep.subr.mxu0 0.0
  %3691 = vmatpush1.msra.mxu0 0.0
  %3692 = vmatprep.subr.mxu0 0.0
  %3693 = vmatpush1.msra.mxu0 0.0
  %3694 = vmatprep.subr.mxu0 0.0
  %3695 = vmatpush1.msra.mxu0 0.0
  %3696 = vmatprep.subr.mxu0 0.0
  %3697 = vmatpush1.msra.mxu0 0.0
  %3698 = vmatprep.subr.mxu0 0.0
  %3699 = vmatpush1.msra.mxu0 0.0
  %3700 = vmatprep.subr.mxu0 0.0
  %3701 = vmatpush1.msra.mxu0 0.0
  %3702 = vmatprep.subr.mxu0 0.0
  %3703 = vmatpush1.msra.mxu0 0.0
  %3704 = vmatprep.mubr.f32.mxu0 0.0
  %v3705 = vand.u32 %v2499, 4294901760
  %3706 = vmatmul.mubr.f32.gmra.mrb[0].mxu0 %v3705
  %v3707 = vpop.f32.mrb[0].mxu0
  %v3708 = vadd.f32 %v3531, %v3707
  %v3709 = vpop.f32.mrb[0].mxu0
  %3710 = vmatprep.mubr.f32.mxu0 0.0
  %v3711 = vand.u32 %v2500, 4294901760
  %3712 = vmatmul.mubr.f32.gmra.mrb[0].mxu0 %v3711
  %v3713 = vpop.f32.mrb[0].mxu0
  %v3714 = vadd.f32 %v3537, %v3713
  %v3715 = vpop.f32.mrb[0].mxu0
  %3716 = vmatprep.mubr.f32.mxu0 0.0
  %v3717 = vand.u32 %v2501, 4294901760
  %3718 = vmatmul.mubr.f32.gmra.mrb[0].mxu0 %v3717
  %v3719 = vpop.f32.mrb[0].mxu0
  %v3720 = vadd.f32 %v3543, %v3719
  %v3721 = vpop.f32.mrb[0].mxu0
  %3722 = vmatprep.mubr.f32.mxu0 0.0
  %v3723 = vand.u32 %v2502, 4294901760
  %3724 = vmatmul.mubr.f32.gmra.mrb[0].mxu0 %v3723
  %v3725 = vpop.f32.mrb[0].mxu0
  %v3726 = vadd.f32 %v3549, %v3725
  %v3727 = vpop.f32.mrb[0].mxu0
  %3728 = vmatprep.mubr.f32.mxu0 0.0
  %v3729 = vand.u32 %v2503, 4294901760
  %3730 = vmatmul.mubr.f32.gmra.mrb[0].mxu0 %v3729
  %v3731 = vpop.f32.mrb[0].mxu0
  %v3732 = vadd.f32 %v3555, %v3731
  %v3733 = vpop.f32.mrb[0].mxu0
  %3734 = vmatprep.mubr.f32.mxu0 0.0
  %v3735 = vand.u32 %v2504, 4294901760
  %3736 = vmatmul.mubr.f32.gmra.mrb[0].mxu0 %v3735
  %v3737 = vpop.f32.mrb[0].mxu0
  %v3738 = vadd.f32 %v3561, %v3737
  %v3739 = vpop.f32.mrb[0].mxu0
  %3740 = vmatprep.mubr.f32.mxu0 0.0
  %v3741 = vand.u32 %v2505, 4294901760
  %3742 = vmatmul.mubr.f32.gmra.mrb[0].mxu0 %v3741
  %v3743 = vpop.f32.mrb[0].mxu0
  %v3744 = vadd.f32 %v3567, %v3743
  %v3745 = vpop.f32.mrb[0].mxu0
  %3746 = vmatprep.mubr.f32.mxu0 0.0
  %v3747 = vand.u32 %v2506, 4294901760
  %3748 = vmatmul.mubr.f32.gmra.mrb[0].mxu0 %v3747
  %v3749 = vpop.f32.mrb[0].mxu0
  %v3750 = vadd.f32 %v3573, %v3749
  %v3751 = vpop.f32.mrb[0].mxu0
  %3752 = vmatprep.mubr.f32.mxu0 0.0
  %v3753 = vand.u32 %v2507, 4294901760
  %3754 = vmatmul.mubr.f32.gmra.mrb[0].mxu0 %v3753
  %v3755 = vpop.f32.mrb[0].mxu0
  %v3756 = vadd.f32 %v3579, %v3755
  %v3757 = vpop.f32.mrb[0].mxu0
  %3758 = vmatprep.mubr.f32.mxu0 0.0
  %v3759 = vand.u32 %v2508, 4294901760
  %3760 = vmatmul.mubr.f32.gmra.mrb[0].mxu0 %v3759
  %v3761 = vpop.f32.mrb[0].mxu0
  %v3762 = vadd.f32 %v3585, %v3761
  %v3763 = vpop.f32.mrb[0].mxu0
  %3764 = vmatprep.mubr.f32.mxu0 0.0
  %v3765 = vand.u32 %v2509, 4294901760
  %3766 = vmatmul.mubr.f32.gmra.mrb[0].mxu0 %v3765
  %v3767 = vpop.f32.mrb[0].mxu0
  %v3768 = vadd.f32 %v3591, %v3767
  %v3769 = vpop.f32.mrb[0].mxu0
  %3770 = vmatprep.mubr.f32.mxu0 0.0
  %v3771 = vand.u32 %v2510, 4294901760
  %3772 = vmatmul.mubr.f32.gmra.mrb[0].mxu0 %v3771
  %v3773 = vpop.f32.mrb[0].mxu0
  %v3774 = vadd.f32 %v3597, %v3773
  %v3775 = vpop.f32.mrb[0].mxu0
  %3776 = vmatprep.mubr.f32.mxu0 0.0
  %v3777 = vand.u32 %v2511, 4294901760
  %3778 = vmatmul.mubr.f32.gmra.mrb[0].mxu0 %v3777
  %v3779 = vpop.f32.mrb[0].mxu0
  %v3780 = vadd.f32 %v3603, %v3779
  %v3781 = vpop.f32.mrb[0].mxu0
  %3782 = vmatprep.mubr.f32.mxu0 0.0
  %v3783 = vand.u32 %v2512, 4294901760
  %3784 = vmatmul.mubr.f32.gmra.mrb[0].mxu0 %v3783
  %v3785 = vpop.f32.mrb[0].mxu0
  %v3786 = vadd.f32 %v3609, %v3785
  %v3787 = vpop.f32.mrb[0].mxu0
  %3788 = vmatprep.mubr.f32.mxu0 0.0
  %v3789 = vand.u32 %v2513, 4294901760
  %3790 = vmatmul.mubr.f32.gmra.mrb[0].mxu0 %v3789
  %v3791 = vpop.f32.mrb[0].mxu0
  %v3792 = vadd.f32 %v3615, %v3791
  %v3793 = vpop.f32.mrb[0].mxu0
  %3794 = vmatprep.mubr.f32.mxu0 0.0
  %v3795 = vand.u32 %v2514, 4294901760
  %3796 = vmatmul.mubr.f32.gmra.mrb[0].mxu0 %v3795
  %v3797 = vpop.f32.mrb[0].mxu0
  %v3798 = vadd.f32 %v3621, %v3797
  %v3799 = vpop.f32.mrb[0].mxu0
  %3800 = vdwg.mxu0
  %v3801 = vrsqrt.pop %v3708
  %v3802 = vrsqrt.pop %v3714
  %v3803 = vrsqrt.pop %v3720
  %v3804 = vrsqrt.pop %v3726
  %v3805 = vrsqrt.pop %v3732
  %v3806 = vrsqrt.pop %v3738
  %v3807 = vrsqrt.pop %v3744
  %v3808 = vrsqrt.pop %v3750
  %v3809 = vrsqrt.pop %v3756
  %v3810 = vrsqrt.pop %v3762
  %v3811 = vrsqrt.pop %v3768
  %v3812 = vrsqrt.pop %v3774
  %v3813 = vrsqrt.pop %v3780
  %v3814 = vrsqrt.pop %v3786
  %v3815 = vrsqrt.pop %v3792
  %v3816 = vrsqrt.pop %v3798
  %v3818 = vsel %vm1339, %v3801, 0
  %v3821 = vsel %vm1339, %v3802, 0
  %v3824 = vsel %vm1339, %v3803, 0
  %v3827 = vsel %vm1339, %v3804, 0
  %v3830 = vsel %vm1339, %v3805, 0
  %v3833 = vsel %vm1339, %v3806, 0
  %v3836 = vsel %vm1339, %v3807, 0
  %v3839 = vsel %vm1339, %v3808, 0
  %v3842 = vsel %vm1339, %v3809, 0
  %v3845 = vsel %vm1339, %v3810, 0
  %v3848 = vsel %vm1339, %v3811, 0
  %v3851 = vsel %vm1339, %v3812, 0
  %v3854 = vsel %vm1339, %v3813, 0
  %v3857 = vsel %vm1339, %v3814, 0
  %v3860 = vsel %vm1339, %v3815, 0
  %v3863 = vsel %vm1339, %v3816, 0
  %3865 = vmatprep.subr.mxu0 0.0
  %v3866 = vand.u32 %v1390, 4294901760
  %3867 = vmatpush1.msra.mxu0 %v3866
  %3868 = vmatprep.subr.mxu0 0.0
  %3869 = vmatpush1.msra.mxu0 0.0
  %3870 = vmatprep.subr.mxu0 0.0
  %3871 = vmatpush1.msra.mxu0 0.0
  %3872 = vmatprep.subr.mxu0 0.0
  %3873 = vmatpush1.msra.mxu0 0.0
  %3874 = vmatprep.subr.mxu0 0.0
  %3875 = vmatpush1.msra.mxu0 0.0
  %3876 = vmatprep.subr.mxu0 0.0
  %3877 = vmatpush1.msra.mxu0 0.0
  %3878 = vmatprep.subr.mxu0 0.0
  %3879 = vmatpush1.msra.mxu0 0.0
  %3880 = vmatprep.subr.mxu0 0.0
  %3881 = vmatpush1.msra.mxu0 0.0
  %3882 = vmatprep.subr.mxu0 0.0
  %3883 = vmatpush1.msra.mxu0 0.0
  %3884 = vmatprep.subr.mxu0 0.0
  %3885 = vmatpush1.msra.mxu0 0.0
  %3886 = vmatprep.subr.mxu0 0.0
  %3887 = vmatpush1.msra.mxu0 0.0
  %3888 = vmatprep.subr.mxu0 0.0
  %3889 = vmatpush1.msra.mxu0 0.0
  %3890 = vmatprep.subr.mxu0 0.0
  %3891 = vmatpush1.msra.mxu0 0.0
  %3892 = vmatprep.subr.mxu0 0.0
  %3893 = vmatpush1.msra.mxu0 0.0
  %3894 = vmatprep.subr.mxu0 0.0
  %3895 = vmatpush1.msra.mxu0 0.0
  %3896 = vmatprep.subr.mxu0 0.0
  %3897 = vmatpush1.msra.mxu0 0.0
  %3898 = vmatprep.subr.mxu0 0.0
  %3899 = vmatpush1.msra.mxu0 0.0
  %3900 = vmatprep.subr.mxu0 0.0
  %3901 = vmatpush1.msra.mxu0 0.0
  %3902 = vmatprep.subr.mxu0 0.0
  %3903 = vmatpush1.msra.mxu0 0.0
  %3904 = vmatprep.subr.mxu0 0.0
  %3905 = vmatpush1.msra.mxu0 0.0
  %3906 = vmatprep.subr.mxu0 0.0
  %3907 = vmatpush1.msra.mxu0 0.0
  %3908 = vmatprep.subr.mxu0 0.0
  %3909 = vmatpush1.msra.mxu0 0.0
  %3910 = vmatprep.subr.mxu0 0.0
  %3911 = vmatpush1.msra.mxu0 0.0
  %3912 = vmatprep.subr.mxu0 0.0
  %3913 = vmatpush1.msra.mxu0 0.0
  %3914 = vmatprep.subr.mxu0 0.0
  %3915 = vmatpush1.msra.mxu0 0.0
  %3916 = vmatprep.subr.mxu0 0.0
  %3917 = vmatpush1.msra.mxu0 0.0
  %3918 = vmatprep.subr.mxu0 0.0
  %3919 = vmatpush1.msra.mxu0 0.0
  %3920 = vmatprep.subr.mxu0 0.0
  %3921 = vmatpush1.msra.mxu0 0.0
  %3922 = vmatprep.subr.mxu0 0.0
  %3923 = vmatpush1.msra.mxu0 0.0
  %3924 = vmatprep.subr.mxu0 0.0
  %3925 = vmatpush1.msra.mxu0 0.0
  %3926 = vmatprep.subr.mxu0 0.0
  %3927 = vmatpush1.msra.mxu0 0.0
  %3928 = vmatprep.subr.mxu0 0.0
  %3929 = vmatpush1.msra.mxu0 0.0
  %3930 = vmatprep.mubr.f32.mxu0 0.0
  %v3931 = vand.u32 %v3818, 4294901760
  %v3932 = vsub.f32 %v3818, %v3931
  %v3933 = vand.u32 %v3932, 4294901760
  %v3934 = vsub.f32 %v3932, %v3933
  %v3935 = vand.u32 %v3934, 4294901760
  %3936 = vmatmul.mubr.f32.gmra.mrb[0].mxu0 %v3935
  %v3937 = vpop.f32.mrb[0].mxu0
  %v3938 = vadd.f32 0.0, %v3937
  %v3939 = vpop.f32.mrb[0].mxu0
  %3940 = vmatprep.mubr.f32.mxu0 0.0
  %v3941 = vand.u32 %v3821, 4294901760
  %v3942 = vsub.f32 %v3821, %v3941
  %v3943 = vand.u32 %v3942, 4294901760
  %v3944 = vsub.f32 %v3942, %v3943
  %v3945 = vand.u32 %v3944, 4294901760
  %3946 = vmatmul.mubr.f32.gmra.mrb[0].mxu0 %v3945
  %v3947 = vpop.f32.mrb[0].mxu0
  %v3948 = vadd.f32 0.0, %v3947
  %v3949 = vpop.f32.mrb[0].mxu0
  %3950 = vmatprep.mubr.f32.mxu0 0.0
  %v3951 = vand.u32 %v3824, 4294901760
  %v3952 = vsub.f32 %v3824, %v3951
  %v3953 = vand.u32 %v3952, 4294901760
  %v3954 = vsub.f32 %v3952, %v3953
  %v3955 = vand.u32 %v3954, 4294901760
  %3956 = vmatmul.mubr.f32.gmra.mrb[0].mxu0 %v3955
  %v3957 = vpop.f32.mrb[0].mxu0
  %v3958 = vadd.f32 0.0, %v3957
  %v3959 = vpop.f32.mrb[0].mxu0
  %3960 = vmatprep.mubr.f32.mxu0 0.0
  %v3961 = vand.u32 %v3827, 4294901760
  %v3962 = vsub.f32 %v3827, %v3961
  %v3963 = vand.u32 %v3962, 4294901760
  %v3964 = vsub.f32 %v3962, %v3963
  %v3965 = vand.u32 %v3964, 4294901760
  %3966 = vmatmul.mubr.f32.gmra.mrb[0].mxu0 %v3965
  %v3967 = vpop.f32.mrb[0].mxu0
  %v3968 = vadd.f32 0.0, %v3967
  %v3969 = vpop.f32.mrb[0].mxu0
  %3970 = vmatprep.mubr.f32.mxu0 0.0
  %v3971 = vand.u32 %v3830, 4294901760
  %v3972 = vsub.f32 %v3830, %v3971
  %v3973 = vand.u32 %v3972, 4294901760
  %v3974 = vsub.f32 %v3972, %v3973
  %v3975 = vand.u32 %v3974, 4294901760
  %3976 = vmatmul.mubr.f32.gmra.mrb[0].mxu0 %v3975
  %v3977 = vpop.f32.mrb[0].mxu0
  %v3978 = vadd.f32 0.0, %v3977
  %v3979 = vpop.f32.mrb[0].mxu0
  %3980 = vmatprep.mubr.f32.mxu0 0.0
  %v3981 = vand.u32 %v3833, 4294901760
  %v3982 = vsub.f32 %v3833, %v3981
  %v3983 = vand.u32 %v3982, 4294901760
  %v3984 = vsub.f32 %v3982, %v3983
  %v3985 = vand.u32 %v3984, 4294901760
  %3986 = vmatmul.mubr.f32.gmra.mrb[0].mxu0 %v3985
  %v3987 = vpop.f32.mrb[0].mxu0
  %v3988 = vadd.f32 0.0, %v3987
  %v3989 = vpop.f32.mrb[0].mxu0
  %3990 = vmatprep.mubr.f32.mxu0 0.0
  %v3991 = vand.u32 %v3836, 4294901760
  %v3992 = vsub.f32 %v3836, %v3991
  %v3993 = vand.u32 %v3992, 4294901760
  %v3994 = vsub.f32 %v3992, %v3993
  %v3995 = vand.u32 %v3994, 4294901760
  %3996 = vmatmul.mubr.f32.gmra.mrb[0].mxu0 %v3995
  %v3997 = vpop.f32.mrb[0].mxu0
  %v3998 = vadd.f32 0.0, %v3997
  %v3999 = vpop.f32.mrb[0].mxu0
  %4000 = vmatprep.mubr.f32.mxu0 0.0
  %v4001 = vand.u32 %v3839, 4294901760
  %v4002 = vsub.f32 %v3839, %v4001
  %v4003 = vand.u32 %v4002, 4294901760
  %v4004 = vsub.f32 %v4002, %v4003
  %v4005 = vand.u32 %v4004, 4294901760
  %4006 = vmatmul.mubr.f32.gmra.mrb[0].mxu0 %v4005
  %v4007 = vpop.f32.mrb[0].mxu0
  %v4008 = vadd.f32 0.0, %v4007
  %v4009 = vpop.f32.mrb[0].mxu0
  %4010 = vmatprep.mubr.f32.mxu0 0.0
  %v4011 = vand.u32 %v3842, 4294901760
  %v4012 = vsub.f32 %v3842, %v4011
  %v4013 = vand.u32 %v4012, 4294901760
  %v4014 = vsub.f32 %v4012, %v4013
  %v4015 = vand.u32 %v4014, 4294901760
  %4016 = vmatmul.mubr.f32.gmra.mrb[0].mxu0 %v4015
  %v4017 = vpop.f32.mrb[0].mxu0
  %v4018 = vadd.f32 0.0, %v4017
  %v4019 = vpop.f32.mrb[0].mxu0
  %4020 = vmatprep.mubr.f32.mxu0 0.0
  %v4021 = vand.u32 %v3845, 4294901760
  %v4022 = vsub.f32 %v3845, %v4021
  %v4023 = vand.u32 %v4022, 4294901760
  %v4024 = vsub.f32 %v4022, %v4023
  %v4025 = vand.u32 %v4024, 4294901760
  %4026 = vmatmul.mubr.f32.gmra.mrb[0].mxu0 %v4025
  %v4027 = vpop.f32.mrb[0].mxu0
  %v4028 = vadd.f32 0.0, %v4027
  %v4029 = vpop.f32.mrb[0].mxu0
  %4030 = vmatprep.mubr.f32.mxu0 0.0
  %v4031 = vand.u32 %v3848, 4294901760
  %v4032 = vsub.f32 %v3848, %v4031
  %v4033 = vand.u32 %v4032, 4294901760
  %v4034 = vsub.f32 %v4032, %v4033
  %v4035 = vand.u32 %v4034, 4294901760
  %4036 = vmatmul.mubr.f32.gmra.mrb[0].mxu0 %v4035
  %v4037 = vpop.f32.mrb[0].mxu0
  %v4038 = vadd.f32 0.0, %v4037
  %v4039 = vpop.f32.mrb[0].mxu0
  %4040 = vmatprep.mubr.f32.mxu0 0.0
  %v4041 = vand.u32 %v3851, 4294901760
  %v4042 = vsub.f32 %v3851, %v4041
  %v4043 = vand.u32 %v4042, 4294901760
  %v4044 = vsub.f32 %v4042, %v4043
  %v4045 = vand.u32 %v4044, 4294901760
  %4046 = vmatmul.mubr.f32.gmra.mrb[0].mxu0 %v4045
  %v4047 = vpop.f32.mrb[0].mxu0
  %v4048 = vadd.f32 0.0, %v4047
  %v4049 = vpop.f32.mrb[0].mxu0
  %4050 = vmatprep.mubr.f32.mxu0 0.0
  %v4051 = vand.u32 %v3854, 4294901760
  %v4052 = vsub.f32 %v3854, %v4051
  %v4053 = vand.u32 %v4052, 4294901760
  %v4054 = vsub.f32 %v4052, %v4053
  %v4055 = vand.u32 %v4054, 4294901760
  %4056 = vmatmul.mubr.f32.gmra.mrb[0].mxu0 %v4055
  %v4057 = vpop.f32.mrb[0].mxu0
  %v4058 = vadd.f32 0.0, %v4057
  %v4059 = vpop.f32.mrb[0].mxu0
  %4060 = vmatprep.mubr.f32.mxu0 0.0
  %v4061 = vand.u32 %v3857, 4294901760
  %v4062 = vsub.f32 %v3857, %v4061
  %v4063 = vand.u32 %v4062, 4294901760
  %v4064 = vsub.f32 %v4062, %v4063
  %v4065 = vand.u32 %v4064, 4294901760
  %4066 = vmatmul.mubr.f32.gmra.mrb[0].mxu0 %v4065
  %v4067 = vpop.f32.mrb[0].mxu0
  %v4068 = vadd.f32 0.0, %v4067
  %v4069 = vpop.f32.mrb[0].mxu0
  %4070 = vmatprep.mubr.f32.mxu0 0.0
  %v4071 = vand.u32 %v3860, 4294901760
  %v4072 = vsub.f32 %v3860, %v4071
  %v4073 = vand.u32 %v4072, 4294901760
  %v4074 = vsub.f32 %v4072, %v4073
  %v4075 = vand.u32 %v4074, 4294901760
  %4076 = vmatmul.mubr.f32.gmra.mrb[0].mxu0 %v4075
  %v4077 = vpop.f32.mrb[0].mxu0
  %v4078 = vadd.f32 0.0, %v4077
  %v4079 = vpop.f32.mrb[0].mxu0
  %4080 = vmatprep.mubr.f32.mxu0 0.0
  %v4081 = vand.u32 %v3863, 4294901760
  %v4082 = vsub.f32 %v3863, %v4081
  %v4083 = vand.u32 %v4082, 4294901760
  %v4084 = vsub.f32 %v4082, %v4083
  %v4085 = vand.u32 %v4084, 4294901760
  %4086 = vmatmul.mubr.f32.gmra.mrb[0].mxu0 %v4085
  %v4087 = vpop.f32.mrb[0].mxu0
  %v4088 = vadd.f32 0.0, %v4087
  %v4089 = vpop.f32.mrb[0].mxu0
  %4090 = vdwg.mxu0
  %4091 = vmatprep.subr.mxu0 0.0
  %v4092 = vand.u32 %v1390, 4294901760
  %v4093 = vsub.f32 %v1390, %v4092
  %v4094 = vand.u32 %v4093, 4294901760
  %v4095 = vsub.f32 %v4093, %v4094
  %v4096 = vand.u32 %v4095, 4294901760
  %4097 = vmatpush1.msra.mxu0 %v4096
  %4098 = vmatprep.subr.mxu0 0.0
  %4099 = vmatpush1.msra.mxu0 0.0
  %4100 = vmatprep.subr.mxu0 0.0
  %4101 = vmatpush1.msra.mxu0 0.0
  %4102 = vmatprep.subr.mxu0 0.0
  %4103 = vmatpush1.msra.mxu0 0.0
  %4104 = vmatprep.subr.mxu0 0.0
  %4105 = vmatpush1.msra.mxu0 0.0
  %4106 = vmatprep.subr.mxu0 0.0
  %4107 = vmatpush1.msra.mxu0 0.0
  %4108 = vmatprep.subr.mxu0 0.0
  %4109 = vmatpush1.msra.mxu0 0.0
  %4110 = vmatprep.subr.mxu0 0.0
  %4111 = vmatpush1.msra.mxu0 0.0
  %4112 = vmatprep.subr.mxu0 0.0
  %4113 = vmatpush1.msra.mxu0 0.0
  %4114 = vmatprep.subr.mxu0 0.0
  %4115 = vmatpush1.msra.mxu0 0.0
  %4116 = vmatprep.subr.mxu0 0.0
  %4117 = vmatpush1.msra.mxu0 0.0
  %4118 = vmatprep.subr.mxu0 0.0
  %4119 = vmatpush1.msra.mxu0 0.0
  %4120 = vmatprep.subr.mxu0 0.0
  %4121 = vmatpush1.msra.mxu0 0.0
  %4122 = vmatprep.subr.mxu0 0.0
  %4123 = vmatpush1.msra.mxu0 0.0
  %4124 = vmatprep.subr.mxu0 0.0
  %4125 = vmatpush1.msra.mxu0 0.0
  %4126 = vmatprep.subr.mxu0 0.0
  %4127 = vmatpush1.msra.mxu0 0.0
  %4128 = vmatprep.subr.mxu0 0.0
  %4129 = vmatpush1.msra.mxu0 0.0
  %4130 = vmatprep.subr.mxu0 0.0
  %4131 = vmatpush1.msra.mxu0 0.0
  %4132 = vmatprep.subr.mxu0 0.0
  %4133 = vmatpush1.msra.mxu0 0.0
  %4134 = vmatprep.subr.mxu0 0.0
  %4135 = vmatpush1.msra.mxu0 0.0
  %4136 = vmatprep.subr.mxu0 0.0
  %4137 = vmatpush1.msra.mxu0 0.0
  %4138 = vmatprep.subr.mxu0 0.0
  %4139 = vmatpush1.msra.mxu0 0.0
  %4140 = vmatprep.subr.mxu0 0.0
  %4141 = vmatpush1.msra.mxu0 0.0
  %4142 = vmatprep.subr.mxu0 0.0
  %4143 = vmatpush1.msra.mxu0 0.0
  %4144 = vmatprep.subr.mxu0 0.0
  %4145 = vmatpush1.msra.mxu0 0.0
  %4146 = vmatprep.subr.mxu0 0.0
  %4147 = vmatpush1.msra.mxu0 0.0
  %4148 = vmatprep.subr.mxu0 0.0
  %4149 = vmatpush1.msra.mxu0 0.0
  %4150 = vmatprep.subr.mxu0 0.0
  %4151 = vmatpush1.msra.mxu0 0.0
  %4152 = vmatprep.subr.mxu0 0.0
  %4153 = vmatpush1.msra.mxu0 0.0
  %4154 = vmatprep.subr.mxu0 0.0
  %4155 = vmatpush1.msra.mxu0 0.0
  %4156 = vmatprep.subr.mxu0 0.0
  %4157 = vmatpush1.msra.mxu0 0.0
  %4158 = vmatprep.subr.mxu0 0.0
  %4159 = vmatpush1.msra.mxu0 0.0
  %4160 = vmatprep.mubr.f32.mxu0 0.0
  %v4161 = vand.u32 %v3818, 4294901760
  %4162 = vmatmul.mubr.f32.gmra.mrb[0].mxu0 %v4161
  %v4163 = vpop.f32.mrb[0].mxu0
  %v4164 = vadd.f32 %v3938, %v4163
  %v4165 = vpop.f32.mrb[0].mxu0
  %4166 = vmatprep.mubr.f32.mxu0 0.0
  %v4167 = vand.u32 %v3821, 4294901760
  %4168 = vmatmul.mubr.f32.gmra.mrb[0].mxu0 %v4167
  %v4169 = vpop.f32.mrb[0].mxu0
  %v4170 = vadd.f32 %v3948, %v4169
  %v4171 = vpop.f32.mrb[0].mxu0
  %4172 = vmatprep.mubr.f32.mxu0 0.0
  %v4173 = vand.u32 %v3824, 4294901760
  %4174 = vmatmul.mubr.f32.gmra.mrb[0].mxu0 %v4173
  %v4175 = vpop.f32.mrb[0].mxu0
  %v4176 = vadd.f32 %v3958, %v4175
  %v4177 = vpop.f32.mrb[0].mxu0
  %4178 = vmatprep.mubr.f32.mxu0 0.0
  %v4179 = vand.u32 %v3827, 4294901760
  %4180 = vmatmul.mubr.f32.gmra.mrb[0].mxu0 %v4179
  %v4181 = vpop.f32.mrb[0].mxu0
  %v4182 = vadd.f32 %v3968, %v4181
  %v4183 = vpop.f32.mrb[0].mxu0
  %4184 = vmatprep.mubr.f32.mxu0 0.0
  %v4185 = vand.u32 %v3830, 4294901760
  %4186 = vmatmul.mubr.f32.gmra.mrb[0].mxu0 %v4185
  %v4187 = vpop.f32.mrb[0].mxu0
  %v4188 = vadd.f32 %v3978, %v4187
  %v4189 = vpop.f32.mrb[0].mxu0
  %4190 = vmatprep.mubr.f32.mxu0 0.0
  %v4191 = vand.u32 %v3833, 4294901760
  %4192 = vmatmul.mubr.f32.gmra.mrb[0].mxu0 %v4191
  %v4193 = vpop.f32.mrb[0].mxu0
  %v4194 = vadd.f32 %v3988, %v4193
  %v4195 = vpop.f32.mrb[0].mxu0
  %4196 = vmatprep.mubr.f32.mxu0 0.0
  %v4197 = vand.u32 %v3836, 4294901760
  %4198 = vmatmul.mubr.f32.gmra.mrb[0].mxu0 %v4197
  %v4199 = vpop.f32.mrb[0].mxu0
  %v4200 = vadd.f32 %v3998, %v4199
  %v4201 = vpop.f32.mrb[0].mxu0
  %4202 = vmatprep.mubr.f32.mxu0 0.0
  %v4203 = vand.u32 %v3839, 4294901760
  %4204 = vmatmul.mubr.f32.gmra.mrb[0].mxu0 %v4203
  %v4205 = vpop.f32.mrb[0].mxu0
  %v4206 = vadd.f32 %v4008, %v4205
  %v4207 = vpop.f32.mrb[0].mxu0
  %4208 = vmatprep.mubr.f32.mxu0 0.0
  %v4209 = vand.u32 %v3842, 4294901760
  %4210 = vmatmul.mubr.f32.gmra.mrb[0].mxu0 %v4209
  %v4211 = vpop.f32.mrb[0].mxu0
  %v4212 = vadd.f32 %v4018, %v4211
  %v4213 = vpop.f32.mrb[0].mxu0
  %4214 = vmatprep.mubr.f32.mxu0 0.0
  %v4215 = vand.u32 %v3845, 4294901760
  %4216 = vmatmul.mubr.f32.gmra.mrb[0].mxu0 %v4215
  %v4217 = vpop.f32.mrb[0].mxu0
  %v4218 = vadd.f32 %v4028, %v4217
  %v4219 = vpop.f32.mrb[0].mxu0
  %4220 = vmatprep.mubr.f32.mxu0 0.0
  %v4221 = vand.u32 %v3848, 4294901760
  %4222 = vmatmul.mubr.f32.gmra.mrb[0].mxu0 %v4221
  %v4223 = vpop.f32.mrb[0].mxu0
  %v4224 = vadd.f32 %v4038, %v4223
  %v4225 = vpop.f32.mrb[0].mxu0
  %4226 = vmatprep.mubr.f32.mxu0 0.0
  %v4227 = vand.u32 %v3851, 4294901760
  %4228 = vmatmul.mubr.f32.gmra.mrb[0].mxu0 %v4227
  %v4229 = vpop.f32.mrb[0].mxu0
  %v4230 = vadd.f32 %v4048, %v4229
  %v4231 = vpop.f32.mrb[0].mxu0
  %4232 = vmatprep.mubr.f32.mxu0 0.0
  %v4233 = vand.u32 %v3854, 4294901760
  %4234 = vmatmul.mubr.f32.gmra.mrb[0].mxu0 %v4233
  %v4235 = vpop.f32.mrb[0].mxu0
  %v4236 = vadd.f32 %v4058, %v4235
  %v4237 = vpop.f32.mrb[0].mxu0
  %4238 = vmatprep.mubr.f32.mxu0 0.0
  %v4239 = vand.u32 %v3857, 4294901760
  %4240 = vmatmul.mubr.f32.gmra.mrb[0].mxu0 %v4239
  %v4241 = vpop.f32.mrb[0].mxu0
  %v4242 = vadd.f32 %v4068, %v4241
  %v4243 = vpop.f32.mrb[0].mxu0
  %4244 = vmatprep.mubr.f32.mxu0 0.0
  %v4245 = vand.u32 %v3860, 4294901760
  %4246 = vmatmul.mubr.f32.gmra.mrb[0].mxu0 %v4245
  %v4247 = vpop.f32.mrb[0].mxu0
  %v4248 = vadd.f32 %v4078, %v4247
  %v4249 = vpop.f32.mrb[0].mxu0
  %4250 = vmatprep.mubr.f32.mxu0 0.0
  %v4251 = vand.u32 %v3863, 4294901760
  %4252 = vmatmul.mubr.f32.gmra.mrb[0].mxu0 %v4251
  %v4253 = vpop.f32.mrb[0].mxu0
  %v4254 = vadd.f32 %v4088, %v4253
  %v4255 = vpop.f32.mrb[0].mxu0
  %4256 = vdwg.mxu0
  %4257 = vmatprep.subr.mxu0 0.0
  %v4258 = vand.u32 %v1390, 4294901760
  %v4259 = vsub.f32 %v1390, %v4258
  %4260 = vmatpush1.msra.mxu0 %v4259
  %4261 = vmatprep.subr.mxu0 0.0
  %4262 = vmatpush1.msra.mxu0 0.0
  %4263 = vmatprep.subr.mxu0 0.0
  %4264 = vmatpush1.msra.mxu0 0.0
  %4265 = vmatprep.subr.mxu0 0.0
  %4266 = vmatpush1.msra.mxu0 0.0
  %4267 = vmatprep.subr.mxu0 0.0
  %4268 = vmatpush1.msra.mxu0 0.0
  %4269 = vmatprep.subr.mxu0 0.0
  %4270 = vmatpush1.msra.mxu0 0.0
  %4271 = vmatprep.subr.mxu0 0.0
  %4272 = vmatpush1.msra.mxu0 0.0
  %4273 = vmatprep.subr.mxu0 0.0
  %4274 = vmatpush1.msra.mxu0 0.0
  %4275 = vmatprep.subr.mxu0 0.0
  %4276 = vmatpush1.msra.mxu0 0.0
  %4277 = vmatprep.subr.mxu0 0.0
  %4278 = vmatpush1.msra.mxu0 0.0
  %4279 = vmatprep.subr.mxu0 0.0
  %4280 = vmatpush1.msra.mxu0 0.0
  %4281 = vmatprep.subr.mxu0 0.0
  %4282 = vmatpush1.msra.mxu0 0.0
  %4283 = vmatprep.subr.mxu0 0.0
  %4284 = vmatpush1.msra.mxu0 0.0
  %4285 = vmatprep.subr.mxu0 0.0
  %4286 = vmatpush1.msra.mxu0 0.0
  %4287 = vmatprep.subr.mxu0 0.0
  %4288 = vmatpush1.msra.mxu0 0.0
  %4289 = vmatprep.subr.mxu0 0.0
  %4290 = vmatpush1.msra.mxu0 0.0
  %4291 = vmatprep.subr.mxu0 0.0
  %4292 = vmatpush1.msra.mxu0 0.0
  %4293 = vmatprep.subr.mxu0 0.0
  %4294 = vmatpush1.msra.mxu0 0.0
  %4295 = vmatprep.subr.mxu0 0.0
  %4296 = vmatpush1.msra.mxu0 0.0
  %4297 = vmatprep.subr.mxu0 0.0
  %4298 = vmatpush1.msra.mxu0 0.0
  %4299 = vmatprep.subr.mxu0 0.0
  %4300 = vmatpush1.msra.mxu0 0.0
  %4301 = vmatprep.subr.mxu0 0.0
  %4302 = vmatpush1.msra.mxu0 0.0
  %4303 = vmatprep.subr.mxu0 0.0
  %4304 = vmatpush1.msra.mxu0 0.0
  %4305 = vmatprep.subr.mxu0 0.0
  %4306 = vmatpush1.msra.mxu0 0.0
  %4307 = vmatprep.subr.mxu0 0.0
  %4308 = vmatpush1.msra.mxu0 0.0
  %4309 = vmatprep.subr.mxu0 0.0
  %4310 = vmatpush1.msra.mxu0 0.0
  %4311 = vmatprep.subr.mxu0 0.0
  %4312 = vmatpush1.msra.mxu0 0.0
  %4313 = vmatprep.subr.mxu0 0.0
  %4314 = vmatpush1.msra.mxu0 0.0
  %4315 = vmatprep.subr.mxu0 0.0
  %4316 = vmatpush1.msra.mxu0 0.0
  %4317 = vmatprep.subr.mxu0 0.0
  %4318 = vmatpush1.msra.mxu0 0.0
  %4319 = vmatprep.subr.mxu0 0.0
  %4320 = vmatpush1.msra.mxu0 0.0
  %4321 = vmatprep.subr.mxu0 0.0
  %4322 = vmatpush1.msra.mxu0 0.0
  %4323 = vmatprep.mubr.f32.mxu0 0.0
  %v4324 = vand.u32 %v3818, 4294901760
  %v4325 = vsub.f32 %v3818, %v4324
  %4326 = vmatmul.mubr.f32.gmra.mrb[0].mxu0 %v4325
  %v4327 = vpop.f32.mrb[0].mxu0
  %v4328 = vadd.f32 %v4164, %v4327
  %v4329 = vpop.f32.mrb[0].mxu0
  %4330 = vmatprep.mubr.f32.mxu0 0.0
  %v4331 = vand.u32 %v3821, 4294901760
  %v4332 = vsub.f32 %v3821, %v4331
  %4333 = vmatmul.mubr.f32.gmra.mrb[0].mxu0 %v4332
  %v4334 = vpop.f32.mrb[0].mxu0
  %v4335 = vadd.f32 %v4170, %v4334
  %v4336 = vpop.f32.mrb[0].mxu0
  %4337 = vmatprep.mubr.f32.mxu0 0.0
  %v4338 = vand.u32 %v3824, 4294901760
  %v4339 = vsub.f32 %v3824, %v4338
  %4340 = vmatmul.mubr.f32.gmra.mrb[0].mxu0 %v4339
  %v4341 = vpop.f32.mrb[0].mxu0
  %v4342 = vadd.f32 %v4176, %v4341
  %v4343 = vpop.f32.mrb[0].mxu0
  %4344 = vmatprep.mubr.f32.mxu0 0.0
  %v4345 = vand.u32 %v3827, 4294901760
  %v4346 = vsub.f32 %v3827, %v4345
  %4347 = vmatmul.mubr.f32.gmra.mrb[0].mxu0 %v4346
  %v4348 = vpop.f32.mrb[0].mxu0
  %v4349 = vadd.f32 %v4182, %v4348
  %v4350 = vpop.f32.mrb[0].mxu0
  %4351 = vmatprep.mubr.f32.mxu0 0.0
  %v4352 = vand.u32 %v3830, 4294901760
  %v4353 = vsub.f32 %v3830, %v4352
  %4354 = vmatmul.mubr.f32.gmra.mrb[0].mxu0 %v4353
  %v4355 = vpop.f32.mrb[0].mxu0
  %v4356 = vadd.f32 %v4188, %v4355
  %v4357 = vpop.f32.mrb[0].mxu0
  %4358 = vmatprep.mubr.f32.mxu0 0.0
  %v4359 = vand.u32 %v3833, 4294901760
  %v4360 = vsub.f32 %v3833, %v4359
  %4361 = vmatmul.mubr.f32.gmra.mrb[0].mxu0 %v4360
  %v4362 = vpop.f32.mrb[0].mxu0
  %v4363 = vadd.f32 %v4194, %v4362
  %v4364 = vpop.f32.mrb[0].mxu0
  %4365 = vmatprep.mubr.f32.mxu0 0.0
  %v4366 = vand.u32 %v3836, 4294901760
  %v4367 = vsub.f32 %v3836, %v4366
  %4368 = vmatmul.mubr.f32.gmra.mrb[0].mxu0 %v4367
  %v4369 = vpop.f32.mrb[0].mxu0
  %v4370 = vadd.f32 %v4200, %v4369
  %v4371 = vpop.f32.mrb[0].mxu0
  %4372 = vmatprep.mubr.f32.mxu0 0.0
  %v4373 = vand.u32 %v3839, 4294901760
  %v4374 = vsub.f32 %v3839, %v4373
  %4375 = vmatmul.mubr.f32.gmra.mrb[0].mxu0 %v4374
  %v4376 = vpop.f32.mrb[0].mxu0
  %v4377 = vadd.f32 %v4206, %v4376
  %v4378 = vpop.f32.mrb[0].mxu0
  %4379 = vmatprep.mubr.f32.mxu0 0.0
  %v4380 = vand.u32 %v3842, 4294901760
  %v4381 = vsub.f32 %v3842, %v4380
  %4382 = vmatmul.mubr.f32.gmra.mrb[0].mxu0 %v4381
  %v4383 = vpop.f32.mrb[0].mxu0
  %v4384 = vadd.f32 %v4212, %v4383
  %v4385 = vpop.f32.mrb[0].mxu0
  %4386 = vmatprep.mubr.f32.mxu0 0.0
  %v4387 = vand.u32 %v3845, 4294901760
  %v4388 = vsub.f32 %v3845, %v4387
  %4389 = vmatmul.mubr.f32.gmra.mrb[0].mxu0 %v4388
  %v4390 = vpop.f32.mrb[0].mxu0
  %v4391 = vadd.f32 %v4218, %v4390
  %v4392 = vpop.f32.mrb[0].mxu0
  %4393 = vmatprep.mubr.f32.mxu0 0.0
  %v4394 = vand.u32 %v3848, 4294901760
  %v4395 = vsub.f32 %v3848, %v4394
  %4396 = vmatmul.mubr.f32.gmra.mrb[0].mxu0 %v4395
  %v4397 = vpop.f32.mrb[0].mxu0
  %v4398 = vadd.f32 %v4224, %v4397
  %v4399 = vpop.f32.mrb[0].mxu0
  %4400 = vmatprep.mubr.f32.mxu0 0.0
  %v4401 = vand.u32 %v3851, 4294901760
  %v4402 = vsub.f32 %v3851, %v4401
  %4403 = vmatmul.mubr.f32.gmra.mrb[0].mxu0 %v4402
  %v4404 = vpop.f32.mrb[0].mxu0
  %v4405 = vadd.f32 %v4230, %v4404
  %v4406 = vpop.f32.mrb[0].mxu0
  %4407 = vmatprep.mubr.f32.mxu0 0.0
  %v4408 = vand.u32 %v3854, 4294901760
  %v4409 = vsub.f32 %v3854, %v4408
  %4410 = vmatmul.mubr.f32.gmra.mrb[0].mxu0 %v4409
  %v4411 = vpop.f32.mrb[0].mxu0
  %v4412 = vadd.f32 %v4236, %v4411
  %v4413 = vpop.f32.mrb[0].mxu0
  %4414 = vmatprep.mubr.f32.mxu0 0.0
  %v4415 = vand.u32 %v3857, 4294901760
  %v4416 = vsub.f32 %v3857, %v4415
  %4417 = vmatmul.mubr.f32.gmra.mrb[0].mxu0 %v4416
  %v4418 = vpop.f32.mrb[0].mxu0
  %v4419 = vadd.f32 %v4242, %v4418
  %v4420 = vpop.f32.mrb[0].mxu0
  %4421 = vmatprep.mubr.f32.mxu0 0.0
  %v4422 = vand.u32 %v3860, 4294901760
  %v4423 = vsub.f32 %v3860, %v4422
  %4424 = vmatmul.mubr.f32.gmra.mrb[0].mxu0 %v4423
  %v4425 = vpop.f32.mrb[0].mxu0
  %v4426 = vadd.f32 %v4248, %v4425
  %v4427 = vpop.f32.mrb[0].mxu0
  %4428 = vmatprep.mubr.f32.mxu0 0.0
  %v4429 = vand.u32 %v3863, 4294901760
  %v4430 = vsub.f32 %v3863, %v4429
  %4431 = vmatmul.mubr.f32.gmra.mrb[0].mxu0 %v4430
  %v4432 = vpop.f32.mrb[0].mxu0
  %v4433 = vadd.f32 %v4254, %v4432
  %v4434 = vpop.f32.mrb[0].mxu0
  %4435 = vdwg.mxu0
  %4436 = vmatprep.subr.mxu0 0.0
  %v4437 = vand.u32 %v1390, 4294901760
  %4438 = vmatpush1.msra.mxu0 %v4437
  %4439 = vmatprep.subr.mxu0 0.0
  %4440 = vmatpush1.msra.mxu0 0.0
  %4441 = vmatprep.subr.mxu0 0.0
  %4442 = vmatpush1.msra.mxu0 0.0
  %4443 = vmatprep.subr.mxu0 0.0
  %4444 = vmatpush1.msra.mxu0 0.0
  %4445 = vmatprep.subr.mxu0 0.0
  %4446 = vmatpush1.msra.mxu0 0.0
  %4447 = vmatprep.subr.mxu0 0.0
  %4448 = vmatpush1.msra.mxu0 0.0
  %4449 = vmatprep.subr.mxu0 0.0
  %4450 = vmatpush1.msra.mxu0 0.0
  %4451 = vmatprep.subr.mxu0 0.0
  %4452 = vmatpush1.msra.mxu0 0.0
  %4453 = vmatprep.subr.mxu0 0.0
  %4454 = vmatpush1.msra.mxu0 0.0
  %4455 = vmatprep.subr.mxu0 0.0
  %4456 = vmatpush1.msra.mxu0 0.0
  %4457 = vmatprep.subr.mxu0 0.0
  %4458 = vmatpush1.msra.mxu0 0.0
  %4459 = vmatprep.subr.mxu0 0.0
  %4460 = vmatpush1.msra.mxu0 0.0
  %4461 = vmatprep.subr.mxu0 0.0
  %4462 = vmatpush1.msra.mxu0 0.0
  %4463 = vmatprep.subr.mxu0 0.0
  %4464 = vmatpush1.msra.mxu0 0.0
  %4465 = vmatprep.subr.mxu0 0.0
  %4466 = vmatpush1.msra.mxu0 0.0
  %4467 = vmatprep.subr.mxu0 0.0
  %4468 = vmatpush1.msra.mxu0 0.0
  %4469 = vmatprep.subr.mxu0 0.0
  %4470 = vmatpush1.msra.mxu0 0.0
  %4471 = vmatprep.subr.mxu0 0.0
  %4472 = vmatpush1.msra.mxu0 0.0
  %4473 = vmatprep.subr.mxu0 0.0
  %4474 = vmatpush1.msra.mxu0 0.0
  %4475 = vmatprep.subr.mxu0 0.0
  %4476 = vmatpush1.msra.mxu0 0.0
  %4477 = vmatprep.subr.mxu0 0.0
  %4478 = vmatpush1.msra.mxu0 0.0
  %4479 = vmatprep.subr.mxu0 0.0
  %4480 = vmatpush1.msra.mxu0 0.0
  %4481 = vmatprep.subr.mxu0 0.0
  %4482 = vmatpush1.msra.mxu0 0.0
  %4483 = vmatprep.subr.mxu0 0.0
  %4484 = vmatpush1.msra.mxu0 0.0
  %4485 = vmatprep.subr.mxu0 0.0
  %4486 = vmatpush1.msra.mxu0 0.0
  %4487 = vmatprep.subr.mxu0 0.0
  %4488 = vmatpush1.msra.mxu0 0.0
  %4489 = vmatprep.subr.mxu0 0.0
  %4490 = vmatpush1.msra.mxu0 0.0
  %4491 = vmatprep.subr.mxu0 0.0
  %4492 = vmatpush1.msra.mxu0 0.0
  %4493 = vmatprep.subr.mxu0 0.0
  %4494 = vmatpush1.msra.mxu0 0.0
  %4495 = vmatprep.subr.mxu0 0.0
  %4496 = vmatpush1.msra.mxu0 0.0
  %4497 = vmatprep.subr.mxu0 0.0
  %4498 = vmatpush1.msra.mxu0 0.0
  %4499 = vmatprep.subr.mxu0 0.0
  %4500 = vmatpush1.msra.mxu0 0.0
  %4501 = vmatprep.mubr.f32.mxu0 0.0
  %v4502 = vand.u32 %v3818, 4294901760
  %v4503 = vsub.f32 %v3818, %v4502
  %v4504 = vand.u32 %v4503, 4294901760
  %4505 = vmatmul.mubr.f32.gmra.mrb[0].mxu0 %v4504
  %v4506 = vpop.f32.mrb[0].mxu0
  %v4507 = vadd.f32 %v4328, %v4506
  %v4508 = vpop.f32.mrb[0].mxu0
  %4509 = vmatprep.mubr.f32.mxu0 0.0
  %v4510 = vand.u32 %v3821, 4294901760
  %v4511 = vsub.f32 %v3821, %v4510
  %v4512 = vand.u32 %v4511, 4294901760
  %4513 = vmatmul.mubr.f32.gmra.mrb[0].mxu0 %v4512
  %v4514 = vpop.f32.mrb[0].mxu0
  %v4515 = vadd.f32 %v4335, %v4514
  %v4516 = vpop.f32.mrb[0].mxu0
  %4517 = vmatprep.mubr.f32.mxu0 0.0
  %v4518 = vand.u32 %v3824, 4294901760
  %v4519 = vsub.f32 %v3824, %v4518
  %v4520 = vand.u32 %v4519, 4294901760
  %4521 = vmatmul.mubr.f32.gmra.mrb[0].mxu0 %v4520
  %v4522 = vpop.f32.mrb[0].mxu0
  %v4523 = vadd.f32 %v4342, %v4522
  %v4524 = vpop.f32.mrb[0].mxu0
  %4525 = vmatprep.mubr.f32.mxu0 0.0
  %v4526 = vand.u32 %v3827, 4294901760
  %v4527 = vsub.f32 %v3827, %v4526
  %v4528 = vand.u32 %v4527, 4294901760
  %4529 = vmatmul.mubr.f32.gmra.mrb[0].mxu0 %v4528
  %v4530 = vpop.f32.mrb[0].mxu0
  %v4531 = vadd.f32 %v4349, %v4530
  %v4532 = vpop.f32.mrb[0].mxu0
  %4533 = vmatprep.mubr.f32.mxu0 0.0
  %v4534 = vand.u32 %v3830, 4294901760
  %v4535 = vsub.f32 %v3830, %v4534
  %v4536 = vand.u32 %v4535, 4294901760
  %4537 = vmatmul.mubr.f32.gmra.mrb[0].mxu0 %v4536
  %v4538 = vpop.f32.mrb[0].mxu0
  %v4539 = vadd.f32 %v4356, %v4538
  %v4540 = vpop.f32.mrb[0].mxu0
  %4541 = vmatprep.mubr.f32.mxu0 0.0
  %v4542 = vand.u32 %v3833, 4294901760
  %v4543 = vsub.f32 %v3833, %v4542
  %v4544 = vand.u32 %v4543, 4294901760
  %4545 = vmatmul.mubr.f32.gmra.mrb[0].mxu0 %v4544
  %v4546 = vpop.f32.mrb[0].mxu0
  %v4547 = vadd.f32 %v4363, %v4546
  %v4548 = vpop.f32.mrb[0].mxu0
  %4549 = vmatprep.mubr.f32.mxu0 0.0
  %v4550 = vand.u32 %v3836, 4294901760
  %v4551 = vsub.f32 %v3836, %v4550
  %v4552 = vand.u32 %v4551, 4294901760
  %4553 = vmatmul.mubr.f32.gmra.mrb[0].mxu0 %v4552
  %v4554 = vpop.f32.mrb[0].mxu0
  %v4555 = vadd.f32 %v4370, %v4554
  %v4556 = vpop.f32.mrb[0].mxu0
  %4557 = vmatprep.mubr.f32.mxu0 0.0
  %v4558 = vand.u32 %v3839, 4294901760
  %v4559 = vsub.f32 %v3839, %v4558
  %v4560 = vand.u32 %v4559, 4294901760
  %4561 = vmatmul.mubr.f32.gmra.mrb[0].mxu0 %v4560
  %v4562 = vpop.f32.mrb[0].mxu0
  %v4563 = vadd.f32 %v4377, %v4562
  %v4564 = vpop.f32.mrb[0].mxu0
  %4565 = vmatprep.mubr.f32.mxu0 0.0
  %v4566 = vand.u32 %v3842, 4294901760
  %v4567 = vsub.f32 %v3842, %v4566
  %v4568 = vand.u32 %v4567, 4294901760
  %4569 = vmatmul.mubr.f32.gmra.mrb[0].mxu0 %v4568
  %v4570 = vpop.f32.mrb[0].mxu0
  %v4571 = vadd.f32 %v4384, %v4570
  %v4572 = vpop.f32.mrb[0].mxu0
  %4573 = vmatprep.mubr.f32.mxu0 0.0
  %v4574 = vand.u32 %v3845, 4294901760
  %v4575 = vsub.f32 %v3845, %v4574
  %v4576 = vand.u32 %v4575, 4294901760
  %4577 = vmatmul.mubr.f32.gmra.mrb[0].mxu0 %v4576
  %v4578 = vpop.f32.mrb[0].mxu0
  %v4579 = vadd.f32 %v4391, %v4578
  %v4580 = vpop.f32.mrb[0].mxu0
  %4581 = vmatprep.mubr.f32.mxu0 0.0
  %v4582 = vand.u32 %v3848, 4294901760
  %v4583 = vsub.f32 %v3848, %v4582
  %v4584 = vand.u32 %v4583, 4294901760
  %4585 = vmatmul.mubr.f32.gmra.mrb[0].mxu0 %v4584
  %v4586 = vpop.f32.mrb[0].mxu0
  %v4587 = vadd.f32 %v4398, %v4586
  %v4588 = vpop.f32.mrb[0].mxu0
  %4589 = vmatprep.mubr.f32.mxu0 0.0
  %v4590 = vand.u32 %v3851, 4294901760
  %v4591 = vsub.f32 %v3851, %v4590
  %v4592 = vand.u32 %v4591, 4294901760
  %4593 = vmatmul.mubr.f32.gmra.mrb[0].mxu0 %v4592
  %v4594 = vpop.f32.mrb[0].mxu0
  %v4595 = vadd.f32 %v4405, %v4594
  %v4596 = vpop.f32.mrb[0].mxu0
  %4597 = vmatprep.mubr.f32.mxu0 0.0
  %v4598 = vand.u32 %v3854, 4294901760
  %v4599 = vsub.f32 %v3854, %v4598
  %v4600 = vand.u32 %v4599, 4294901760
  %4601 = vmatmul.mubr.f32.gmra.mrb[0].mxu0 %v4600
  %v4602 = vpop.f32.mrb[0].mxu0
  %v4603 = vadd.f32 %v4412, %v4602
  %v4604 = vpop.f32.mrb[0].mxu0
  %4605 = vmatprep.mubr.f32.mxu0 0.0
  %v4606 = vand.u32 %v3857, 4294901760
  %v4607 = vsub.f32 %v3857, %v4606
  %v4608 = vand.u32 %v4607, 4294901760
  %4609 = vmatmul.mubr.f32.gmra.mrb[0].mxu0 %v4608
  %v4610 = vpop.f32.mrb[0].mxu0
  %v4611 = vadd.f32 %v4419, %v4610
  %v4612 = vpop.f32.mrb[0].mxu0
  %4613 = vmatprep.mubr.f32.mxu0 0.0
  %v4614 = vand.u32 %v3860, 4294901760
  %v4615 = vsub.f32 %v3860, %v4614
  %v4616 = vand.u32 %v4615, 4294901760
  %4617 = vmatmul.mubr.f32.gmra.mrb[0].mxu0 %v4616
  %v4618 = vpop.f32.mrb[0].mxu0
  %v4619 = vadd.f32 %v4426, %v4618
  %v4620 = vpop.f32.mrb[0].mxu0
  %4621 = vmatprep.mubr.f32.mxu0 0.0
  %v4622 = vand.u32 %v3863, 4294901760
  %v4623 = vsub.f32 %v3863, %v4622
  %v4624 = vand.u32 %v4623, 4294901760
  %4625 = vmatmul.mubr.f32.gmra.mrb[0].mxu0 %v4624
  %v4626 = vpop.f32.mrb[0].mxu0
  %v4627 = vadd.f32 %v4433, %v4626
  %v4628 = vpop.f32.mrb[0].mxu0
  %4629 = vdwg.mxu0
  %4630 = vmatprep.subr.mxu0 0.0
  %v4631 = vand.u32 %v1390, 4294901760
  %v4632 = vsub.f32 %v1390, %v4631
  %v4633 = vand.u32 %v4632, 4294901760
  %4634 = vmatpush1.msra.mxu0 %v4633
  %4635 = vmatprep.subr.mxu0 0.0
  %4636 = vmatpush1.msra.mxu0 0.0
  %4637 = vmatprep.subr.mxu0 0.0
  %4638 = vmatpush1.msra.mxu0 0.0
  %4639 = vmatprep.subr.mxu0 0.0
  %4640 = vmatpush1.msra.mxu0 0.0
  %4641 = vmatprep.subr.mxu0 0.0
  %4642 = vmatpush1.msra.mxu0 0.0
  %4643 = vmatprep.subr.mxu0 0.0
  %4644 = vmatpush1.msra.mxu0 0.0
  %4645 = vmatprep.subr.mxu0 0.0
  %4646 = vmatpush1.msra.mxu0 0.0
  %4647 = vmatprep.subr.mxu0 0.0
  %4648 = vmatpush1.msra.mxu0 0.0
  %4649 = vmatprep.subr.mxu0 0.0
  %4650 = vmatpush1.msra.mxu0 0.0
  %4651 = vmatprep.subr.mxu0 0.0
  %4652 = vmatpush1.msra.mxu0 0.0
  %4653 = vmatprep.subr.mxu0 0.0
  %4654 = vmatpush1.msra.mxu0 0.0
  %4655 = vmatprep.subr.mxu0 0.0
  %4656 = vmatpush1.msra.mxu0 0.0
  %4657 = vmatprep.subr.mxu0 0.0
  %4658 = vmatpush1.msra.mxu0 0.0
  %4659 = vmatprep.subr.mxu0 0.0
  %4660 = vmatpush1.msra.mxu0 0.0
  %4661 = vmatprep.subr.mxu0 0.0
  %4662 = vmatpush1.msra.mxu0 0.0
  %4663 = vmatprep.subr.mxu0 0.0
  %4664 = vmatpush1.msra.mxu0 0.0
  %4665 = vmatprep.subr.mxu0 0.0
  %4666 = vmatpush1.msra.mxu0 0.0
  %4667 = vmatprep.subr.mxu0 0.0
  %4668 = vmatpush1.msra.mxu0 0.0
  %4669 = vmatprep.subr.mxu0 0.0
  %4670 = vmatpush1.msra.mxu0 0.0
  %4671 = vmatprep.subr.mxu0 0.0
  %4672 = vmatpush1.msra.mxu0 0.0
  %4673 = vmatprep.subr.mxu0 0.0
  %4674 = vmatpush1.msra.mxu0 0.0
  %4675 = vmatprep.subr.mxu0 0.0
  %4676 = vmatpush1.msra.mxu0 0.0
  %4677 = vmatprep.subr.mxu0 0.0
  %4678 = vmatpush1.msra.mxu0 0.0
  %4679 = vmatprep.subr.mxu0 0.0
  %4680 = vmatpush1.msra.mxu0 0.0
  %4681 = vmatprep.subr.mxu0 0.0
  %4682 = vmatpush1.msra.mxu0 0.0
  %4683 = vmatprep.subr.mxu0 0.0
  %4684 = vmatpush1.msra.mxu0 0.0
  %4685 = vmatprep.subr.mxu0 0.0
  %4686 = vmatpush1.msra.mxu0 0.0
  %4687 = vmatprep.subr.mxu0 0.0
  %4688 = vmatpush1.msra.mxu0 0.0
  %4689 = vmatprep.subr.mxu0 0.0
  %4690 = vmatpush1.msra.mxu0 0.0
  %4691 = vmatprep.subr.mxu0 0.0
  %4692 = vmatpush1.msra.mxu0 0.0
  %4693 = vmatprep.subr.mxu0 0.0
  %4694 = vmatpush1.msra.mxu0 0.0
  %4695 = vmatprep.subr.mxu0 0.0
  %4696 = vmatpush1.msra.mxu0 0.0
  %4697 = vmatprep.mubr.f32.mxu0 0.0
  %v4698 = vand.u32 %v3818, 4294901760
  %4699 = vmatmul.mubr.f32.gmra.mrb[0].mxu0 %v4698
  %v4700 = vpop.f32.mrb[0].mxu0
  %v4701 = vadd.f32 %v4507, %v4700
  %v4702 = vpop.f32.mrb[0].mxu0
  %4703 = vmatprep.mubr.f32.mxu0 0.0
  %v4704 = vand.u32 %v3821, 4294901760
  %4705 = vmatmul.mubr.f32.gmra.mrb[0].mxu0 %v4704
  %v4706 = vpop.f32.mrb[0].mxu0
  %v4707 = vadd.f32 %v4515, %v4706
  %v4708 = vpop.f32.mrb[0].mxu0
  %4709 = vmatprep.mubr.f32.mxu0 0.0
  %v4710 = vand.u32 %v3824, 4294901760
  %4711 = vmatmul.mubr.f32.gmra.mrb[0].mxu0 %v4710
  %v4712 = vpop.f32.mrb[0].mxu0
  %v4713 = vadd.f32 %v4523, %v4712
  %v4714 = vpop.f32.mrb[0].mxu0
  %4715 = vmatprep.mubr.f32.mxu0 0.0
  %v4716 = vand.u32 %v3827, 4294901760
  %4717 = vmatmul.mubr.f32.gmra.mrb[0].mxu0 %v4716
  %v4718 = vpop.f32.mrb[0].mxu0
  %v4719 = vadd.f32 %v4531, %v4718
  %v4720 = vpop.f32.mrb[0].mxu0
  %4721 = vmatprep.mubr.f32.mxu0 0.0
  %v4722 = vand.u32 %v3830, 4294901760
  %4723 = vmatmul.mubr.f32.gmra.mrb[0].mxu0 %v4722
  %v4724 = vpop.f32.mrb[0].mxu0
  %v4725 = vadd.f32 %v4539, %v4724
  %v4726 = vpop.f32.mrb[0].mxu0
  %4727 = vmatprep.mubr.f32.mxu0 0.0
  %v4728 = vand.u32 %v3833, 4294901760
  %4729 = vmatmul.mubr.f32.gmra.mrb[0].mxu0 %v4728
  %v4730 = vpop.f32.mrb[0].mxu0
  %v4731 = vadd.f32 %v4547, %v4730
  %v4732 = vpop.f32.mrb[0].mxu0
  %4733 = vmatprep.mubr.f32.mxu0 0.0
  %v4734 = vand.u32 %v3836, 4294901760
  %4735 = vmatmul.mubr.f32.gmra.mrb[0].mxu0 %v4734
  %v4736 = vpop.f32.mrb[0].mxu0
  %v4737 = vadd.f32 %v4555, %v4736
  %v4738 = vpop.f32.mrb[0].mxu0
  %4739 = vmatprep.mubr.f32.mxu0 0.0
  %v4740 = vand.u32 %v3839, 4294901760
  %4741 = vmatmul.mubr.f32.gmra.mrb[0].mxu0 %v4740
  %v4742 = vpop.f32.mrb[0].mxu0
  %v4743 = vadd.f32 %v4563, %v4742
  %v4744 = vpop.f32.mrb[0].mxu0
  %4745 = vmatprep.mubr.f32.mxu0 0.0
  %v4746 = vand.u32 %v3842, 4294901760
  %4747 = vmatmul.mubr.f32.gmra.mrb[0].mxu0 %v4746
  %v4748 = vpop.f32.mrb[0].mxu0
  %v4749 = vadd.f32 %v4571, %v4748
  %v4750 = vpop.f32.mrb[0].mxu0
  %4751 = vmatprep.mubr.f32.mxu0 0.0
  %v4752 = vand.u32 %v3845, 4294901760
  %4753 = vmatmul.mubr.f32.gmra.mrb[0].mxu0 %v4752
  %v4754 = vpop.f32.mrb[0].mxu0
  %v4755 = vadd.f32 %v4579, %v4754
  %v4756 = vpop.f32.mrb[0].mxu0
  %4757 = vmatprep.mubr.f32.mxu0 0.0
  %v4758 = vand.u32 %v3848, 4294901760
  %4759 = vmatmul.mubr.f32.gmra.mrb[0].mxu0 %v4758
  %v4760 = vpop.f32.mrb[0].mxu0
  %v4761 = vadd.f32 %v4587, %v4760
  %v4762 = vpop.f32.mrb[0].mxu0
  %4763 = vmatprep.mubr.f32.mxu0 0.0
  %v4764 = vand.u32 %v3851, 4294901760
  %4765 = vmatmul.mubr.f32.gmra.mrb[0].mxu0 %v4764
  %v4766 = vpop.f32.mrb[0].mxu0
  %v4767 = vadd.f32 %v4595, %v4766
  %v4768 = vpop.f32.mrb[0].mxu0
  %4769 = vmatprep.mubr.f32.mxu0 0.0
  %v4770 = vand.u32 %v3854, 4294901760
  %4771 = vmatmul.mubr.f32.gmra.mrb[0].mxu0 %v4770
  %v4772 = vpop.f32.mrb[0].mxu0
  %v4773 = vadd.f32 %v4603, %v4772
  %v4774 = vpop.f32.mrb[0].mxu0
  %4775 = vmatprep.mubr.f32.mxu0 0.0
  %v4776 = vand.u32 %v3857, 4294901760
  %4777 = vmatmul.mubr.f32.gmra.mrb[0].mxu0 %v4776
  %v4778 = vpop.f32.mrb[0].mxu0
  %v4779 = vadd.f32 %v4611, %v4778
  %v4780 = vpop.f32.mrb[0].mxu0
  %4781 = vmatprep.mubr.f32.mxu0 0.0
  %v4782 = vand.u32 %v3860, 4294901760
  %4783 = vmatmul.mubr.f32.gmra.mrb[0].mxu0 %v4782
  %v4784 = vpop.f32.mrb[0].mxu0
  %v4785 = vadd.f32 %v4619, %v4784
  %v4786 = vpop.f32.mrb[0].mxu0
  %4787 = vmatprep.mubr.f32.mxu0 0.0
  %v4788 = vand.u32 %v3863, 4294901760
  %4789 = vmatmul.mubr.f32.gmra.mrb[0].mxu0 %v4788
  %v4790 = vpop.f32.mrb[0].mxu0
  %v4791 = vadd.f32 %v4627, %v4790
  %v4792 = vpop.f32.mrb[0].mxu0
  %4793 = vdwg.mxu0
  %4794 = vmatprep.subr.mxu0 0.0
  %v4795 = vand.u32 %v1390, 4294901760
  %4796 = vmatpush1.msra.mxu0 %v4795
  %4797 = vmatprep.subr.mxu0 0.0
  %4798 = vmatpush1.msra.mxu0 0.0
  %4799 = vmatprep.subr.mxu0 0.0
  %4800 = vmatpush1.msra.mxu0 0.0
  %4801 = vmatprep.subr.mxu0 0.0
  %4802 = vmatpush1.msra.mxu0 0.0
  %4803 = vmatprep.subr.mxu0 0.0
  %4804 = vmatpush1.msra.mxu0 0.0
  %4805 = vmatprep.subr.mxu0 0.0
  %4806 = vmatpush1.msra.mxu0 0.0
  %4807 = vmatprep.subr.mxu0 0.0
  %4808 = vmatpush1.msra.mxu0 0.0
  %4809 = vmatprep.subr.mxu0 0.0
  %4810 = vmatpush1.msra.mxu0 0.0
  %4811 = vmatprep.subr.mxu0 0.0
  %4812 = vmatpush1.msra.mxu0 0.0
  %4813 = vmatprep.subr.mxu0 0.0
  %4814 = vmatpush1.msra.mxu0 0.0
  %4815 = vmatprep.subr.mxu0 0.0
  %4816 = vmatpush1.msra.mxu0 0.0
  %4817 = vmatprep.subr.mxu0 0.0
  %4818 = vmatpush1.msra.mxu0 0.0
  %4819 = vmatprep.subr.mxu0 0.0
  %4820 = vmatpush1.msra.mxu0 0.0
  %4821 = vmatprep.subr.mxu0 0.0
  %4822 = vmatpush1.msra.mxu0 0.0
  %4823 = vmatprep.subr.mxu0 0.0
  %4824 = vmatpush1.msra.mxu0 0.0
  %4825 = vmatprep.subr.mxu0 0.0
  %4826 = vmatpush1.msra.mxu0 0.0
  %4827 = vmatprep.subr.mxu0 0.0
  %4828 = vmatpush1.msra.mxu0 0.0
  %4829 = vmatprep.subr.mxu0 0.0
  %4830 = vmatpush1.msra.mxu0 0.0
  %4831 = vmatprep.subr.mxu0 0.0
  %4832 = vmatpush1.msra.mxu0 0.0
  %4833 = vmatprep.subr.mxu0 0.0
  %4834 = vmatpush1.msra.mxu0 0.0
  %4835 = vmatprep.subr.mxu0 0.0
  %4836 = vmatpush1.msra.mxu0 0.0
  %4837 = vmatprep.subr.mxu0 0.0
  %4838 = vmatpush1.msra.mxu0 0.0
  %4839 = vmatprep.subr.mxu0 0.0
  %4840 = vmatpush1.msra.mxu0 0.0
  %4841 = vmatprep.subr.mxu0 0.0
  %4842 = vmatpush1.msra.mxu0 0.0
  %4843 = vmatprep.subr.mxu0 0.0
  %4844 = vmatpush1.msra.mxu0 0.0
  %4845 = vmatprep.subr.mxu0 0.0
  %4846 = vmatpush1.msra.mxu0 0.0
  %4847 = vmatprep.subr.mxu0 0.0
  %4848 = vmatpush1.msra.mxu0 0.0
  %4849 = vmatprep.subr.mxu0 0.0
  %4850 = vmatpush1.msra.mxu0 0.0
  %4851 = vmatprep.subr.mxu0 0.0
  %4852 = vmatpush1.msra.mxu0 0.0
  %4853 = vmatprep.subr.mxu0 0.0
  %4854 = vmatpush1.msra.mxu0 0.0
  %4855 = vmatprep.subr.mxu0 0.0
  %4856 = vmatpush1.msra.mxu0 0.0
  %4857 = vmatprep.subr.mxu0 0.0
  %4858 = vmatpush1.msra.mxu0 0.0
  %4859 = vmatprep.mubr.f32.mxu0 0.0
  %v4860 = vand.u32 %v3818, 4294901760
  %4861 = vmatmul.mubr.f32.gmra.mrb[0].mxu0 %v4860
  %v4862 = vpop.f32.mrb[0].mxu0
  %v4863 = vadd.f32 %v4701, %v4862
  %v4864 = vpop.f32.mrb[0].mxu0
  %4865 = vmatprep.mubr.f32.mxu0 0.0
  %v4866 = vand.u32 %v3821, 4294901760
  %4867 = vmatmul.mubr.f32.gmra.mrb[0].mxu0 %v4866
  %v4868 = vpop.f32.mrb[0].mxu0
  %v4869 = vadd.f32 %v4707, %v4868
  %v4870 = vpop.f32.mrb[0].mxu0
  %4871 = vmatprep.mubr.f32.mxu0 0.0
  %v4872 = vand.u32 %v3824, 4294901760
  %4873 = vmatmul.mubr.f32.gmra.mrb[0].mxu0 %v4872
  %v4874 = vpop.f32.mrb[0].mxu0
  %v4875 = vadd.f32 %v4713, %v4874
  %v4876 = vpop.f32.mrb[0].mxu0
  %4877 = vmatprep.mubr.f32.mxu0 0.0
  %v4878 = vand.u32 %v3827, 4294901760
  %4879 = vmatmul.mubr.f32.gmra.mrb[0].mxu0 %v4878
  %v4880 = vpop.f32.mrb[0].mxu0
  %v4881 = vadd.f32 %v4719, %v4880
  %v4882 = vpop.f32.mrb[0].mxu0
  %4883 = vmatprep.mubr.f32.mxu0 0.0
  %v4884 = vand.u32 %v3830, 4294901760
  %4885 = vmatmul.mubr.f32.gmra.mrb[0].mxu0 %v4884
  %v4886 = vpop.f32.mrb[0].mxu0
  %v4887 = vadd.f32 %v4725, %v4886
  %v4888 = vpop.f32.mrb[0].mxu0
  %4889 = vmatprep.mubr.f32.mxu0 0.0
  %v4890 = vand.u32 %v3833, 4294901760
  %4891 = vmatmul.mubr.f32.gmra.mrb[0].mxu0 %v4890
  %v4892 = vpop.f32.mrb[0].mxu0
  %v4893 = vadd.f32 %v4731, %v4892
  %v4894 = vpop.f32.mrb[0].mxu0
  %4895 = vmatprep.mubr.f32.mxu0 0.0
  %v4896 = vand.u32 %v3836, 4294901760
  %4897 = vmatmul.mubr.f32.gmra.mrb[0].mxu0 %v4896
  %v4898 = vpop.f32.mrb[0].mxu0
  %v4899 = vadd.f32 %v4737, %v4898
  %v4900 = vpop.f32.mrb[0].mxu0
  %4901 = vmatprep.mubr.f32.mxu0 0.0
  %v4902 = vand.u32 %v3839, 4294901760
  %4903 = vmatmul.mubr.f32.gmra.mrb[0].mxu0 %v4902
  %v4904 = vpop.f32.mrb[0].mxu0
  %v4905 = vadd.f32 %v4743, %v4904
  %v4906 = vpop.f32.mrb[0].mxu0
  %4907 = vmatprep.mubr.f32.mxu0 0.0
  %v4908 = vand.u32 %v3842, 4294901760
  %4909 = vmatmul.mubr.f32.gmra.mrb[0].mxu0 %v4908
  %v4910 = vpop.f32.mrb[0].mxu0
  %v4911 = vadd.f32 %v4749, %v4910
  %v4912 = vpop.f32.mrb[0].mxu0
  %4913 = vmatprep.mubr.f32.mxu0 0.0
  %v4914 = vand.u32 %v3845, 4294901760
  %4915 = vmatmul.mubr.f32.gmra.mrb[0].mxu0 %v4914
  %v4916 = vpop.f32.mrb[0].mxu0
  %v4917 = vadd.f32 %v4755, %v4916
  %v4918 = vpop.f32.mrb[0].mxu0
  %4919 = vmatprep.mubr.f32.mxu0 0.0
  %v4920 = vand.u32 %v3848, 4294901760
  %4921 = vmatmul.mubr.f32.gmra.mrb[0].mxu0 %v4920
  %v4922 = vpop.f32.mrb[0].mxu0
  %v4923 = vadd.f32 %v4761, %v4922
  %v4924 = vpop.f32.mrb[0].mxu0
  %4925 = vmatprep.mubr.f32.mxu0 0.0
  %v4926 = vand.u32 %v3851, 4294901760
  %4927 = vmatmul.mubr.f32.gmra.mrb[0].mxu0 %v4926
  %v4928 = vpop.f32.mrb[0].mxu0
  %v4929 = vadd.f32 %v4767, %v4928
  %v4930 = vpop.f32.mrb[0].mxu0
  %4931 = vmatprep.mubr.f32.mxu0 0.0
  %v4932 = vand.u32 %v3854, 4294901760
  %4933 = vmatmul.mubr.f32.gmra.mrb[0].mxu0 %v4932
  %v4934 = vpop.f32.mrb[0].mxu0
  %v4935 = vadd.f32 %v4773, %v4934
  %v4936 = vpop.f32.mrb[0].mxu0
  %4937 = vmatprep.mubr.f32.mxu0 0.0
  %v4938 = vand.u32 %v3857, 4294901760
  %4939 = vmatmul.mubr.f32.gmra.mrb[0].mxu0 %v4938
  %v4940 = vpop.f32.mrb[0].mxu0
  %v4941 = vadd.f32 %v4779, %v4940
  %v4942 = vpop.f32.mrb[0].mxu0
  %4943 = vmatprep.mubr.f32.mxu0 0.0
  %v4944 = vand.u32 %v3860, 4294901760
  %4945 = vmatmul.mubr.f32.gmra.mrb[0].mxu0 %v4944
  %v4946 = vpop.f32.mrb[0].mxu0
  %v4947 = vadd.f32 %v4785, %v4946
  %v4948 = vpop.f32.mrb[0].mxu0
  %4949 = vmatprep.mubr.f32.mxu0 0.0
  %v4950 = vand.u32 %v3863, 4294901760
  %4951 = vmatmul.mubr.f32.gmra.mrb[0].mxu0 %v4950
  %v4952 = vpop.f32.mrb[0].mxu0
  %v4953 = vadd.f32 %v4791, %v4952
  %v4954 = vpop.f32.mrb[0].mxu0
  %4955 = vdwg.mxu0
  %v4956 = vld [vmem:[%s1] sm:$0x1]
  %v4958 = vlaneseq
  %v4959 = vshrl.u32 %v4958, 7
  %v4960 = vsub.s32 0, %v4959
  %v4961 = vrot.slane %v4956, %v4960
  %v4963 = vmul.f32 %v4863, %v4961
  %v4964 = vmul.f32 %v4869, %v4961
  %v4965 = vmul.f32 %v4875, %v4961
  %v4966 = vmul.f32 %v4881, %v4961
  %v4967 = vmul.f32 %v4887, %v4961
  %v4968 = vmul.f32 %v4893, %v4961
  %v4969 = vmul.f32 %v4899, %v4961
  %v4970 = vmul.f32 %v4905, %v4961
  %v4971 = vmul.f32 %v4911, %v4961
  %v4972 = vmul.f32 %v4917, %v4961
  %v4973 = vmul.f32 %v4923, %v4961
  %v4974 = vmul.f32 %v4929, %v4961
  %v4975 = vmul.f32 %v4935, %v4961
  %v4976 = vmul.f32 %v4941, %v4961
  %v4977 = vmul.f32 %v4947, %v4961
  %v4978 = vmul.f32 %v4953, %v4961
  %v4979 = vmul.f32 %v2483, %v4963
  %v4980 = vmul.f32 %v2484, %v4964
  %v4981 = vmul.f32 %v2485, %v4965
  %v4982 = vmul.f32 %v2486, %v4966
  %v4983 = vmul.f32 %v2487, %v4967
  %v4984 = vmul.f32 %v2488, %v4968
  %v4985 = vmul.f32 %v2489, %v4969
  %v4986 = vmul.f32 %v2490, %v4970
  %v4987 = vmul.f32 %v2491, %v4971
  %v4988 = vmul.f32 %v2492, %v4972
  %v4989 = vmul.f32 %v2493, %v4973
  %v4990 = vmul.f32 %v2494, %v4974
  %v4991 = vmul.f32 %v2495, %v4975
  %v4992 = vmul.f32 %v2496, %v4976
  %v4993 = vmul.f32 %v2497, %v4977
  %v4994 = vmul.f32 %v2498, %v4978
  %v4995 = vld [vmem:[%s2] sm:$0x1]
  %v4997 = vlaneseq
  %v4998 = vshrl.u32 %v4997, 7
  %v4999 = vsub.s32 0, %v4998
  %v5000 = vrot.slane %v4995, %v4999
  %v5002 = vadd.f32 %v4979, %v5000
  %v5003 = vadd.f32 %v4980, %v5000
  %v5004 = vadd.f32 %v4981, %v5000
  %v5005 = vadd.f32 %v4982, %v5000
  %v5006 = vadd.f32 %v4983, %v5000
  %v5007 = vadd.f32 %v4984, %v5000
  %v5008 = vadd.f32 %v4985, %v5000
  %v5009 = vadd.f32 %v4986, %v5000
  %v5010 = vadd.f32 %v4987, %v5000
  %v5011 = vadd.f32 %v4988, %v5000
  %v5012 = vadd.f32 %v4989, %v5000
  %v5013 = vadd.f32 %v4990, %v5000
  %v5014 = vadd.f32 %v4991, %v5000
  %v5015 = vadd.f32 %v4992, %v5000
  %v5016 = vadd.f32 %v4993, %v5000
  %v5017 = vadd.f32 %v4994, %v5000
  %5018 = vst [vmem:[%s5] sm:$0xff] %v5002
  %5019 = vst [vmem:[%s5 + $0x8] sm:$0xff] %v5003
  %5020 = vst [vmem:[%s5 + $0x10] sm:$0xff] %v5004
  %5021 = vst [vmem:[%s5 + $0x18] sm:$0xff] %v5005
  %5022 = vst [vmem:[%s5 + $0x20] sm:$0xff] %v5006
  %5023 = vst [vmem:[%s5 + $0x28] sm:$0xff] %v5007
  %5024 = vst [vmem:[%s5 + $0x30] sm:$0xff] %v5008
  %5025 = vst [vmem:[%s5 + $0x38] sm:$0xff] %v5009
  %5026 = vst [vmem:[%s5 + $0x40] sm:$0xff] %v5010
  %5027 = vst [vmem:[%s5 + $0x48] sm:$0xff] %v5011
  %5028 = vst [vmem:[%s5 + $0x50] sm:$0xff] %v5012
  %5029 = vst [vmem:[%s5 + $0x58] sm:$0xff] %v5013
  %5030 = vst [vmem:[%s5 + $0x60] sm:$0xff] %v5014
  %5031 = vst [vmem:[%s5 + $0x68] sm:$0xff] %v5015
  %5032 = vst [vmem:[%s5 + $0x70] sm:$0xff] %v5016
  %5033 = vst [vmem:[%s5 + $0x78] sm:$0xff] %v5017
  // Predicated region
  $region22: #{with_bias_layernorm.1} parent=0 // pred_check
    _
  $region23: #{with_bias_layernorm.1} parent=0 // pred_check_branch
    %5035 = sbr.rel (0) target = $region25
  $region24: #{with_bias_layernorm.1} parent=0 // pred_region
    _
  $region25: #{with_bias_layernorm.1} parent=0 // pred_fallthru
    _
  // Predicated region
  $region26: #{with_bias_layernorm.1} parent=0 // pred_check
    _
  $region27: #{with_bias_layernorm.1} parent=0 // pred_check_branch
    %5037 = sbr.rel (0) target = $region29
  $region28: #{with_bias_layernorm.1} parent=0 // pred_region
    _
  $region29: #{with_bias_layernorm.1} parent=0 // pred_fallthru
    _

</llo_original>
